<compile_context>
chip_gen: v7x
topology: tpu7x:2x2x1
jax: 0.10.0
libtpu: 0.0.40
codegen_flags: <defaults>
</compile_context>

<pallas_src>
import jax
import jax.numpy as jnp
from jax.experimental import pallas as pl
from jax.experimental.pallas import tpu as pltpu

LANE = 128


def _round_up(x, m):
    return ((x + m - 1) // m) * m


# ----------------------------------------------------------------------------
# Pallas kernels
# ----------------------------------------------------------------------------
def conv_relu_pool_kernel(x0_ref, x1_ref, x2_ref, x3_ref, w_ref, b_ref, o_ref):
    """Fused im2col-conv + bias + ReLU + 2x2/stride-2 max-pool.

    x{0..3}_ref hold the im2col patch rows of the four members of every 2x2
    pooling window.  Since relu(maxpool(conv + b)) == relu(max_i(conv_i) + b)
    (same bias per channel, relu monotone), pooling is a free elementwise max
    on the in-VMEM f32 accumulators.
    """
    w = w_ref[...]
    a0 = jnp.dot(x0_ref[...], w, preferred_element_type=jnp.float32)
    a1 = jnp.dot(x1_ref[...], w, preferred_element_type=jnp.float32)
    a2 = jnp.dot(x2_ref[...], w, preferred_element_type=jnp.float32)
    a3 = jnp.dot(x3_ref[...], w, preferred_element_type=jnp.float32)
    m = jnp.maximum(jnp.maximum(a0, a1), jnp.maximum(a2, a3))
    o_ref[...] = jnp.maximum(m + b_ref[...], 0.0)


def mlp_kernel(x_ref, w1_ref, b1_ref, w2_ref, b2_ref, w3_ref, b3_ref, o_ref):
    """Fused fc1+ReLU -> fc2+ReLU -> fc3. All weights fit in VMEM."""
    h = jnp.dot(x_ref[...], w1_ref[...],
                preferred_element_type=jnp.float32) + b1_ref[...]
    h = jnp.maximum(h, 0.0).astype(w2_ref.dtype)
    h = jnp.dot(h, w2_ref[...],
                preferred_element_type=jnp.float32) + b2_ref[...]
    h = jnp.maximum(h, 0.0).astype(w3_ref.dtype)
    o_ref[...] = jnp.dot(h, w3_ref[...],
                         preferred_element_type=jnp.float32) + b3_ref[...]


# ----------------------------------------------------------------------------
# Wrappers
# ----------------------------------------------------------------------------
def _im2col_pool_member(x_nhwc, kh, kw, dh, dw, po, pw):
    """Patch rows for conv output positions (2*ph+dh, 2*pw+dw).

    Column order (ki, kj, C) matches the (2,3,1,0) weight transpose."""
    B, H, W, C = x_nhwc.shape
    cols = []
    for ki in range(kh):
        for kj in range(kw):
            h0, w0 = dh + ki, dw + kj
            cols.append(x_nhwc[:, h0:h0 + 2 * po:2, w0:w0 + 2 * pw:2, :])
    p = jnp.concatenate(cols, axis=-1)            # [B, po, pw, kh*kw*C]
    return p.reshape(B * po * pw, kh * kw * C)


def conv_relu_pool(x_nhwc, w_mat, b_row, kh, kw, c_out, *, tile_m=512):
    """x_nhwc [B,H,W,C] -> pooled relu(conv) [B,(H-kh+1)//2,(W-kw+1)//2,c_out]."""
    B, H, W, C = x_nhwc.shape
    Kp, Np = w_mat.shape
    K = kh * kw * C
    assert Kp == _round_up(K, LANE) and Np >= c_out
    ho, wo = H - kh + 1, W - kw + 1
    po, pw = ho // 2, wo // 2
    P = B * po * pw

    tm = min(tile_m, _round_up(P, 8))
    Pp = _round_up(P, tm)

    members = []
    for dh in (0, 1):
        for dw in (0, 1):
            m = _im2col_pool_member(x_nhwc, kh, kw, dh, dw, po, pw)
            m = jnp.pad(m, ((0, Pp - P), (0, Kp - K))).astype(jnp.bfloat16)
            members.append(m)

    x_spec = pl.BlockSpec((tm, Kp), lambda i: (i, 0))
    out = pl.pallas_call(
        conv_relu_pool_kernel,
        out_shape=jax.ShapeDtypeStruct((Pp, Np), jnp.float32),
        grid=(Pp // tm,),
        in_specs=[x_spec, x_spec, x_spec, x_spec,
                  pl.BlockSpec((Kp, Np), lambda i: (0, 0)),
                  pl.BlockSpec((1, Np), lambda i: (0, 0))],
        out_specs=pl.BlockSpec((tm, Np), lambda i: (i, 0)),
        compiler_params=pltpu.CompilerParams(
            dimension_semantics=("parallel",)),
    )(*members, w_mat, b_row)
    return out[:P, :c_out].reshape(B, po, pw, c_out)


def mlp_forward(x2d, w1, b1, w2, b2, w3, b3, *, tile_b=256):
    """Fused 3-layer MLP on padded, bf16 weights. Returns padded [Bp, 128]."""
    B, K = x2d.shape
    K1p, N1p = w1.shape
    _, N2p = w2.shape
    _, N3p = w3.shape
    tb = min(tile_b, _round_up(B, 8))
    Bp = _round_up(B, tb)
    x = jnp.pad(x2d, ((0, Bp - B), (0, K1p - K))).astype(jnp.bfloat16)
    return pl.pallas_call(
        mlp_kernel,
        out_shape=jax.ShapeDtypeStruct((Bp, N3p), jnp.float32),
        grid=(Bp // tb,),
        in_specs=[pl.BlockSpec((tb, K1p), lambda i: (i, 0)),
                  pl.BlockSpec((K1p, N1p), lambda i: (0, 0)),
                  pl.BlockSpec((1, N1p), lambda i: (0, 0)),
                  pl.BlockSpec((N1p, N2p), lambda i: (0, 0)),
                  pl.BlockSpec((1, N2p), lambda i: (0, 0)),
                  pl.BlockSpec((N2p, N3p), lambda i: (0, 0)),
                  pl.BlockSpec((1, N3p), lambda i: (0, 0))],
        out_specs=pl.BlockSpec((tb, N3p), lambda i: (i, 0)),
        compiler_params=pltpu.CompilerParams(
            dimension_semantics=("parallel",)),
    )(x, w1, b1, w2, b2, w3, b3)


# ----------------------------------------------------------------------------
# Parameters
# ----------------------------------------------------------------------------
def init_params(key):
    ks = jax.random.split(key, 12)
    s = 0.1
    return {
        "conv1_w": s * jax.random.normal(ks[0], (6, 3, 5, 5), jnp.float32),
        "conv1_b": s * jax.random.normal(ks[1], (6,), jnp.float32),
        "conv2_w": s * jax.random.normal(ks[2], (16, 6, 5, 5), jnp.float32),
        "conv2_b": s * jax.random.normal(ks[3], (16,), jnp.float32),
        "fc1_w": s * jax.random.normal(ks[4], (120, 400), jnp.float32),
        "fc1_b": s * jax.random.normal(ks[5], (120,), jnp.float32),
        "fc2_w": s * jax.random.normal(ks[6], (84, 120), jnp.float32),
        "fc2_b": s * jax.random.normal(ks[7], (84,), jnp.float32),
        "fc3_w": s * jax.random.normal(ks[8], (10, 84), jnp.float32),
        "fc3_b": s * jax.random.normal(ks[9], (10,), jnp.float32),
        "fc3_rot_w": s * jax.random.normal(ks[10], (4, 84), jnp.float32),
        "fc3_rot_b": s * jax.random.normal(ks[11], (4,), jnp.float32),
    }


def prepare_params(p):
    """One-time conversion of PyTorch-layout f32 params into padded bf16
    Pallas operands (no per-step transposes inside the forward pass)."""
    def conv_mat(w, b):
        O, I, kh, kw = w.shape
        K = kh * kw * I
        Kp, Np = _round_up(K, LANE), _round_up(O, LANE)
        wm = jnp.transpose(w, (2, 3, 1, 0)).reshape(K, O)       # (ki,kj,I) x O
        wm = jnp.pad(wm, ((0, Kp - K), (0, Np - O))).astype(jnp.bfloat16)
        bm = jnp.pad(b.astype(jnp.float32).reshape(1, O), ((0, 0), (0, Np - O)))
        return wm, bm

    def fc_mat(w, b, kp):
        N_out, K_in = w.shape
        Np = _round_up(N_out, LANE)
        wm = jnp.pad(w.T, ((0, kp - K_in), (0, Np - N_out))).astype(jnp.bfloat16)
        bm = jnp.pad(b.astype(jnp.float32).reshape(1, N_out),
                     ((0, 0), (0, Np - N_out)))
        return wm, bm

    c1w, c1b = conv_mat(p["conv1_w"], p["conv1_b"])      # [128, 128]
    c2w, c2b = conv_mat(p["conv2_w"], p["conv2_b"])      # [256, 128]
    f1w, f1b = fc_mat(p["fc1_w"], p["fc1_b"], 512)       # 400->512, 120->128
    f2w, f2b = fc_mat(p["fc2_w"], p["fc2_b"], 128)       # 120->128, 84->128
    f3w, f3b = fc_mat(p["fc3_w"], p["fc3_b"], 128)       # 84->128, 10->128
    frw, frb = fc_mat(p["fc3_rot_w"], p["fc3_rot_b"], 128)
    return {"conv1_w": c1w, "conv1_b": c1b, "conv2_w": c2w, "conv2_b": c2b,
            "fc1_w": f1w, "fc1_b": f1b, "fc2_w": f2w, "fc2_b": f2b,
            "fc3_w": f3w, "fc3_b": f3b, "fc3_rot_w": frw, "fc3_rot_b": frb}


# ----------------------------------------------------------------------------
# Forward pass
# ----------------------------------------------------------------------------
def vanilla_net_forward(x_nchw, pp, rot_task=False):
    """x_nchw: [B, 3, 32, 32] -> logits [B, 10] (or [B, 4] if rot_task)."""
    x = jnp.transpose(x_nchw, (0, 2, 3, 1))                     # NCHW -> NHWC
    x = conv_relu_pool(x, pp["conv1_w"], pp["conv1_b"], 5, 5, 6)   # [B,14,14,6]
    x = conv_relu_pool(x, pp["conv2_w"], pp["conv2_b"], 5, 5, 16)  # [B,5,5,16]

    B = x.shape[0]
    # PyTorch flattens NCHW -> (C, H, W) order
    x = jnp.transpose(x, (0, 3, 1, 2)).reshape(B, 16 * 5 * 5)      # [B, 400]

    if rot_task:
        w3, b3, n_out = pp["fc3_rot_w"], pp["fc3_rot_b"], 4
    else:
        w3, b3, n_out = pp["fc3_w"], pp["fc3_b"], 10
    out = mlp_forward(x, pp["fc1_w"], pp["fc1_b"],
                      pp["fc2_w"], pp["fc2_b"], w3, b3)
    return out[:B, :n_out]


# ----------------------------------------------------------------------------
# Pure-JAX reference (mirrors the PyTorch module) for validation
# ----------------------------------------------------------------------------
def ref_forward(x, p, rot_task=False):
    def conv(x, w, b):
        y = jax.lax.conv_general_dilated(
            x, w, (1, 1), "VALID",
            dimension_numbers=("NCHW", "OIHW", "NCHW"))
        return y + b[None, :, None, None]

    def pool(x):
        return jax.lax.reduce_window(
            x, -jnp.inf, jax.lax.max, (1, 1, 2, 2), (1, 1, 2, 2), "VALID")

    relu = jax.nn.relu
    y = pool(relu(conv(x, p["conv1_w"], p["conv1_b"])))
    y = pool(relu(conv(y, p["conv2_w"], p["conv2_b"])))
    y = y.reshape(-1, 16 * 5 * 5)
    y = relu(y @ p["fc1_w"].T + p["fc1_b"])
    y = relu(y @ p["fc2_w"].T + p["fc2_b"])
    if rot_task:
        return y @ p["fc3_rot_w"].T + p["fc3_rot_b"]
    return y @ p["fc3_w"].T + p["fc3_b"]


if __name__ == "__main__":
    key = jax.random.PRNGKey(0)
    k_x, k_p = jax.random.split(key)
    x = jax.random.normal(k_x, (2, 3, 32, 32), jnp.float32)   # NCHW, CIFAR-sized
    params = init_params(k_p)
    pp = prepare_params(params)

    fwd = jax.jit(vanilla_net_forward, static_argnames=("rot_task",))

    out = jax.block_until_ready(fwd(x, pp))
    ref = jax.block_until_ready(ref_forward(x, params))
    assert out.shape == (2, 10), out.shape
    # Tolerance accommodates bf16 operand quantization (accumulation is f32).
    assert jnp.allclose(out, ref, rtol=5e-2, atol=5e-2), (
        f"max abs diff {jnp.max(jnp.abs(out - ref))}")

    out_rot = jax.block_until_ready(fwd(x, pp, rot_task=True))
    ref_rot = ref_forward(x, params, rot_task=True)
    assert out_rot.shape == (2, 4), out_rot.shape
    assert jnp.allclose(out_rot, ref_rot, rtol=5e-2, atol=5e-2), (
        f"max abs diff (rot) {jnp.max(jnp.abs(out_rot - ref_rot))}")

    print("KERNEL_OK")
</pallas_src>

<mosaic_0001>
module attributes {stable_mosaic.version = 11 : i64} {
  func.func @conv_relu_pool_kernel(%arg0: i32, %arg1: memref<392x128xbf16, #tpu.memory_space<vmem>>, %arg2: memref<392x128xbf16, #tpu.memory_space<vmem>>, %arg3: memref<392x128xbf16, #tpu.memory_space<vmem>>, %arg4: memref<392x128xbf16, #tpu.memory_space<vmem>>, %arg5: memref<128x128xbf16, #tpu.memory_space<vmem>>, %arg6: memref<1x128xf32, #tpu.memory_space<vmem>>, %arg7: memref<392x128xf32, #tpu.memory_space<vmem>>) attributes {dimension_semantics = [#tpu.dimension_semantics<parallel>], iteration_bounds = array<i64: 1>, scalar_prefetch = 0 : i64, scratch_operands = 0 : i64, tpu.core_type = #tpu.core_type<tc>, window_params = [{transform_indices = @transform_0, window_bounds = array<i64: 392, 128>}, {transform_indices = @transform_1, window_bounds = array<i64: 392, 128>}, {transform_indices = @transform_2, window_bounds = array<i64: 392, 128>}, {transform_indices = @transform_3, window_bounds = array<i64: 392, 128>}, {pipeline_mode = #tpu.pipeline_mode<synchronous>, transform_indices = @transform_4, window_bounds = array<i64: 128, 128>}, {pipeline_mode = #tpu.pipeline_mode<synchronous>, transform_indices = @transform_5, window_bounds = array<i64: 1, 128>}, {transform_indices = @transform_6, window_bounds = array<i64: 392, 128>}]} {
    %c0 = arith.constant 0 : index
    %c0_0 = arith.constant 0 : index
    %0 = vector.load %arg5[%c0, %c0_0] : memref<128x128xbf16, #tpu.memory_space<vmem>>, vector<128x128xbf16>
    %c0_1 = arith.constant 0 : index
    %c0_2 = arith.constant 0 : index
    %1 = vector.load %arg1[%c0_1, %c0_2] : memref<392x128xbf16, #tpu.memory_space<vmem>>, vector<392x128xbf16>
    %cst = arith.constant dense<0.000000e+00> : vector<392x128xf32>
    %2 = tpu.matmul %1, %0, %cst {dimension_numbers = #tpu.dot_dimension_numbers<[1], [0], [0], [1], [0, 0, 1, 1], [], []>} : vector<392x128xbf16>, vector<128x128xbf16>, vector<392x128xf32> -> vector<392x128xf32>
    %c0_3 = arith.constant 0 : index
    %c0_4 = arith.constant 0 : index
    %3 = vector.load %arg2[%c0_3, %c0_4] : memref<392x128xbf16, #tpu.memory_space<vmem>>, vector<392x128xbf16>
    %cst_5 = arith.constant dense<0.000000e+00> : vector<392x128xf32>
    %4 = tpu.matmul %3, %0, %cst_5 {dimension_numbers = #tpu.dot_dimension_numbers<[1], [0], [0], [1], [0, 0, 1, 1], [], []>} : vector<392x128xbf16>, vector<128x128xbf16>, vector<392x128xf32> -> vector<392x128xf32>
    %c0_6 = arith.constant 0 : index
    %c0_7 = arith.constant 0 : index
    %5 = vector.load %arg3[%c0_6, %c0_7] : memref<392x128xbf16, #tpu.memory_space<vmem>>, vector<392x128xbf16>
    %cst_8 = arith.constant dense<0.000000e+00> : vector<392x128xf32>
    %6 = tpu.matmul %5, %0, %cst_8 {dimension_numbers = #tpu.dot_dimension_numbers<[1], [0], [0], [1], [0, 0, 1, 1], [], []>} : vector<392x128xbf16>, vector<128x128xbf16>, vector<392x128xf32> -> vector<392x128xf32>
    %c0_9 = arith.constant 0 : index
    %c0_10 = arith.constant 0 : index
    %7 = vector.load %arg4[%c0_9, %c0_10] : memref<392x128xbf16, #tpu.memory_space<vmem>>, vector<392x128xbf16>
    %cst_11 = arith.constant dense<0.000000e+00> : vector<392x128xf32>
    %8 = tpu.matmul %7, %0, %cst_11 {dimension_numbers = #tpu.dot_dimension_numbers<[1], [0], [0], [1], [0, 0, 1, 1], [], []>} : vector<392x128xbf16>, vector<128x128xbf16>, vector<392x128xf32> -> vector<392x128xf32>
    %9 = arith.maximumf %2, %4 : vector<392x128xf32>
    %10 = arith.maximumf %6, %8 : vector<392x128xf32>
    %11 = arith.maximumf %9, %10 : vector<392x128xf32>
    %c0_12 = arith.constant 0 : index
    %c0_13 = arith.constant 0 : index
    %12 = vector.load %arg6[%c0_12, %c0_13] : memref<1x128xf32, #tpu.memory_space<vmem>>, vector<1x128xf32>
    %13 = vector.broadcast %12 : vector<1x128xf32> to vector<392x128xf32>
    %14 = arith.addf %11, %13 : vector<392x128xf32>
    %cst_14 = arith.constant 0.000000e+00 : f32
    %15 = vector.broadcast %cst_14 : f32 to vector<392x128xf32>
    %16 = arith.maximumf %14, %15 : vector<392x128xf32>
    %c0_15 = arith.constant 0 : index
    %c0_16 = arith.constant 0 : index
    %17 = vector.load %arg7[%c0_15, %c0_16] : memref<392x128xf32, #tpu.memory_space<vmem>>, vector<392x128xf32>
    tpu.vector_store %arg7[%c0_15, %c0_16], %16 {strides = array<i32>} : memref<392x128xf32, #tpu.memory_space<vmem>>, vector<392x128xf32>,
    return
  }
  func.func @transform_0(%arg0: i32) -> (i32, i32) {
    %c0_i32 = arith.constant 0 : i32
    %c0_i32_0 = arith.constant 0 : i32
    return %arg0, %c0_i32 : i32, i32
  }
  func.func @transform_1(%arg0: i32) -> (i32, i32) {
    %c0_i32 = arith.constant 0 : i32
    %c0_i32_0 = arith.constant 0 : i32
    return %arg0, %c0_i32 : i32, i32
  }
  func.func @transform_2(%arg0: i32) -> (i32, i32) {
    %c0_i32 = arith.constant 0 : i32
    %c0_i32_0 = arith.constant 0 : i32
    return %arg0, %c0_i32 : i32, i32
  }
  func.func @transform_3(%arg0: i32) -> (i32, i32) {
    %c0_i32 = arith.constant 0 : i32
    %c0_i32_0 = arith.constant 0 : i32
    return %arg0, %c0_i32 : i32, i32
  }
  func.func @transform_4(%arg0: i32) -> (i32, i32) {
    %c0_i32 = arith.constant 0 : i32
    %c0_i32_0 = arith.constant 0 : i32
    %c0_i32_1 = arith.constant 0 : i32
    return %c0_i32, %c0_i32_0 : i32, i32
  }
  func.func @transform_5(%arg0: i32) -> (i32, i32) {
    %c0_i32 = arith.constant 0 : i32
    %c0_i32_0 = arith.constant 0 : i32
    %c0_i32_1 = arith.constant 0 : i32
    return %c0_i32, %c0_i32_0 : i32, i32
  }
  func.func @transform_6(%arg0: i32) -> (i32, i32) {
    %c0_i32 = arith.constant 0 : i32
    %c0_i32_0 = arith.constant 0 : i32
    return %arg0, %c0_i32 : i32, i32
  }
}

module attributes {stable_mosaic.version = 11 : i64} {
  func.func @conv_relu_pool_kernel(%arg0: i32, %arg1: memref<56x256xbf16, #tpu.memory_space<vmem>>, %arg2: memref<56x256xbf16, #tpu.memory_space<vmem>>, %arg3: memref<56x256xbf16, #tpu.memory_space<vmem>>, %arg4: memref<56x256xbf16, #tpu.memory_space<vmem>>, %arg5: memref<256x128xbf16, #tpu.memory_space<vmem>>, %arg6: memref<1x128xf32, #tpu.memory_space<vmem>>, %arg7: memref<56x128xf32, #tpu.memory_space<vmem>>) attributes {dimension_semantics = [#tpu.dimension_semantics<parallel>], iteration_bounds = array<i64: 1>, scalar_prefetch = 0 : i64, scratch_operands = 0 : i64, tpu.core_type = #tpu.core_type<tc>, window_params = [{transform_indices = @transform_0, window_bounds = array<i64: 56, 256>}, {transform_indices = @transform_1, window_bounds = array<i64: 56, 256>}, {transform_indices = @transform_2, window_bounds = array<i64: 56, 256>}, {transform_indices = @transform_3, window_bounds = array<i64: 56, 256>}, {pipeline_mode = #tpu.pipeline_mode<synchronous>, transform_indices = @transform_4, window_bounds = array<i64: 256, 128>}, {pipeline_mode = #tpu.pipeline_mode<synchronous>, transform_indices = @transform_5, window_bounds = array<i64: 1, 128>}, {transform_indices = @transform_6, window_bounds = array<i64: 56, 128>}]} {
    %c0 = arith.constant 0 : index
    %c0_0 = arith.constant 0 : index
    %0 = vector.load %arg5[%c0, %c0_0] : memref<256x128xbf16, #tpu.memory_space<vmem>>, vector<256x128xbf16>
    %c0_1 = arith.constant 0 : index
    %c0_2 = arith.constant 0 : index
    %1 = vector.load %arg1[%c0_1, %c0_2] : memref<56x256xbf16, #tpu.memory_space<vmem>>, vector<56x256xbf16>
    %cst = arith.constant dense<0.000000e+00> : vector<56x128xf32>
    %2 = tpu.matmul %1, %0, %cst {dimension_numbers = #tpu.dot_dimension_numbers<[1], [0], [0], [1], [0, 0, 1, 1], [], []>} : vector<56x256xbf16>, vector<256x128xbf16>, vector<56x128xf32> -> vector<56x128xf32>
    %c0_3 = arith.constant 0 : index
    %c0_4 = arith.constant 0 : index
    %3 = vector.load %arg2[%c0_3, %c0_4] : memref<56x256xbf16, #tpu.memory_space<vmem>>, vector<56x256xbf16>
    %cst_5 = arith.constant dense<0.000000e+00> : vector<56x128xf32>
    %4 = tpu.matmul %3, %0, %cst_5 {dimension_numbers = #tpu.dot_dimension_numbers<[1], [0], [0], [1], [0, 0, 1, 1], [], []>} : vector<56x256xbf16>, vector<256x128xbf16>, vector<56x128xf32> -> vector<56x128xf32>
    %c0_6 = arith.constant 0 : index
    %c0_7 = arith.constant 0 : index
    %5 = vector.load %arg3[%c0_6, %c0_7] : memref<56x256xbf16, #tpu.memory_space<vmem>>, vector<56x256xbf16>
    %cst_8 = arith.constant dense<0.000000e+00> : vector<56x128xf32>
    %6 = tpu.matmul %5, %0, %cst_8 {dimension_numbers = #tpu.dot_dimension_numbers<[1], [0], [0], [1], [0, 0, 1, 1], [], []>} : vector<56x256xbf16>, vector<256x128xbf16>, vector<56x128xf32> -> vector<56x128xf32>
    %c0_9 = arith.constant 0 : index
    %c0_10 = arith.constant 0 : index
    %7 = vector.load %arg4[%c0_9, %c0_10] : memref<56x256xbf16, #tpu.memory_space<vmem>>, vector<56x256xbf16>
    %cst_11 = arith.constant dense<0.000000e+00> : vector<56x128xf32>
    %8 = tpu.matmul %7, %0, %cst_11 {dimension_numbers = #tpu.dot_dimension_numbers<[1], [0], [0], [1], [0, 0, 1, 1], [], []>} : vector<56x256xbf16>, vector<256x128xbf16>, vector<56x128xf32> -> vector<56x128xf32>
    %9 = arith.maximumf %2, %4 : vector<56x128xf32>
    %10 = arith.maximumf %6, %8 : vector<56x128xf32>
    %11 = arith.maximumf %9, %10 : vector<56x128xf32>
    %c0_12 = arith.constant 0 : index
    %c0_13 = arith.constant 0 : index
    %12 = vector.load %arg6[%c0_12, %c0_13] : memref<1x128xf32, #tpu.memory_space<vmem>>, vector<1x128xf32>
    %13 = vector.broadcast %12 : vector<1x128xf32> to vector<56x128xf32>
    %14 = arith.addf %11, %13 : vector<56x128xf32>
    %cst_14 = arith.constant 0.000000e+00 : f32
    %15 = vector.broadcast %cst_14 : f32 to vector<56x128xf32>
    %16 = arith.maximumf %14, %15 : vector<56x128xf32>
    %c0_15 = arith.constant 0 : index
    %c0_16 = arith.constant 0 : index
    %17 = vector.load %arg7[%c0_15, %c0_16] : memref<56x128xf32, #tpu.memory_space<vmem>>, vector<56x128xf32>
    tpu.vector_store %arg7[%c0_15, %c0_16], %16 {strides = array<i32>} : memref<56x128xf32, #tpu.memory_space<vmem>>, vector<56x128xf32>,
    return
  }
  func.func @transform_0(%arg0: i32) -> (i32, i32) {
    %c0_i32 = arith.constant 0 : i32
    %c0_i32_0 = arith.constant 0 : i32
    return %arg0, %c0_i32 : i32, i32
  }
  func.func @transform_1(%arg0: i32) -> (i32, i32) {
    %c0_i32 = arith.constant 0 : i32
    %c0_i32_0 = arith.constant 0 : i32
    return %arg0, %c0_i32 : i32, i32
  }
  func.func @transform_2(%arg0: i32) -> (i32, i32) {
    %c0_i32 = arith.constant 0 : i32
    %c0_i32_0 = arith.constant 0 : i32
    return %arg0, %c0_i32 : i32, i32
  }
  func.func @transform_3(%arg0: i32) -> (i32, i32) {
    %c0_i32 = arith.constant 0 : i32
    %c0_i32_0 = arith.constant 0 : i32
    return %arg0, %c0_i32 : i32, i32
  }
  func.func @transform_4(%arg0: i32) -> (i32, i32) {
    %c0_i32 = arith.constant 0 : i32
    %c0_i32_0 = arith.constant 0 : i32
    %c0_i32_1 = arith.constant 0 : i32
    return %c0_i32, %c0_i32_0 : i32, i32
  }
  func.func @transform_5(%arg0: i32) -> (i32, i32) {
    %c0_i32 = arith.constant 0 : i32
    %c0_i32_0 = arith.constant 0 : i32
    %c0_i32_1 = arith.constant 0 : i32
    return %c0_i32, %c0_i32_0 : i32, i32
  }
  func.func @transform_6(%arg0: i32) -> (i32, i32) {
    %c0_i32 = arith.constant 0 : i32
    %c0_i32_0 = arith.constant 0 : i32
    return %arg0, %c0_i32 : i32, i32
  }
}

module attributes {stable_mosaic.version = 11 : i64} {
  func.func @mlp_kernel(%arg0: i32, %arg1: memref<8x512xbf16, #tpu.memory_space<vmem>>, %arg2: memref<512x128xbf16, #tpu.memory_space<vmem>>, %arg3: memref<1x128xf32, #tpu.memory_space<vmem>>, %arg4: memref<128x128xbf16, #tpu.memory_space<vmem>>, %arg5: memref<1x128xf32, #tpu.memory_space<vmem>>, %arg6: memref<128x128xbf16, #tpu.memory_space<vmem>>, %arg7: memref<1x128xf32, #tpu.memory_space<vmem>>, %arg8: memref<8x128xf32, #tpu.memory_space<vmem>>) attributes {dimension_semantics = [#tpu.dimension_semantics<parallel>], iteration_bounds = array<i64: 1>, scalar_prefetch = 0 : i64, scratch_operands = 0 : i64, tpu.core_type = #tpu.core_type<tc>, window_params = [{transform_indices = @transform_0, window_bounds = array<i64: 8, 512>}, {pipeline_mode = #tpu.pipeline_mode<synchronous>, transform_indices = @transform_1, window_bounds = array<i64: 512, 128>}, {pipeline_mode = #tpu.pipeline_mode<synchronous>, transform_indices = @transform_2, window_bounds = array<i64: 1, 128>}, {pipeline_mode = #tpu.pipeline_mode<synchronous>, transform_indices = @transform_3, window_bounds = array<i64: 128, 128>}, {pipeline_mode = #tpu.pipeline_mode<synchronous>, transform_indices = @transform_4, window_bounds = array<i64: 1, 128>}, {pipeline_mode = #tpu.pipeline_mode<synchronous>, transform_indices = @transform_5, window_bounds = array<i64: 128, 128>}, {pipeline_mode = #tpu.pipeline_mode<synchronous>, transform_indices = @transform_6, window_bounds = array<i64: 1, 128>}, {transform_indices = @transform_7, window_bounds = array<i64: 8, 128>}]} {
    %c0 = arith.constant 0 : index
    %c0_0 = arith.constant 0 : index
    %0 = vector.load %arg1[%c0, %c0_0] : memref<8x512xbf16, #tpu.memory_space<vmem>>, vector<8x512xbf16>
    %c0_1 = arith.constant 0 : index
    %c0_2 = arith.constant 0 : index
    %1 = vector.load %arg2[%c0_1, %c0_2] : memref<512x128xbf16, #tpu.memory_space<vmem>>, vector<512x128xbf16>
    %cst = arith.constant dense<0.000000e+00> : vector<8x128xf32>
    %2 = tpu.matmul %0, %1, %cst {dimension_numbers = #tpu.dot_dimension_numbers<[1], [0], [0], [1], [0, 0, 1, 1], [], []>} : vector<8x512xbf16>, vector<512x128xbf16>, vector<8x128xf32> -> vector<8x128xf32>
    %c0_3 = arith.constant 0 : index
    %c0_4 = arith.constant 0 : index
    %3 = vector.load %arg3[%c0_3, %c0_4] : memref<1x128xf32, #tpu.memory_space<vmem>>, vector<1x128xf32>
    %4 = vector.broadcast %3 : vector<1x128xf32> to vector<8x128xf32>
    %5 = arith.addf %2, %4 : vector<8x128xf32>
    %cst_5 = arith.constant 0.000000e+00 : f32
    %6 = vector.broadcast %cst_5 : f32 to vector<8x128xf32>
    %7 = arith.maximumf %5, %6 : vector<8x128xf32>
    %8 = arith.truncf %7 : vector<8x128xf32> to vector<8x128xbf16>
    %c0_6 = arith.constant 0 : index
    %c0_7 = arith.constant 0 : index
    %9 = vector.load %arg4[%c0_6, %c0_7] : memref<128x128xbf16, #tpu.memory_space<vmem>>, vector<128x128xbf16>
    %cst_8 = arith.constant dense<0.000000e+00> : vector<8x128xf32>
    %10 = tpu.matmul %8, %9, %cst_8 {dimension_numbers = #tpu.dot_dimension_numbers<[1], [0], [0], [1], [0, 0, 1, 1], [], []>} : vector<8x128xbf16>, vector<128x128xbf16>, vector<8x128xf32> -> vector<8x128xf32>
    %c0_9 = arith.constant 0 : index
    %c0_10 = arith.constant 0 : index
    %11 = vector.load %arg5[%c0_9, %c0_10] : memref<1x128xf32, #tpu.memory_space<vmem>>, vector<1x128xf32>
    %12 = vector.broadcast %11 : vector<1x128xf32> to vector<8x128xf32>
    %13 = arith.addf %10, %12 : vector<8x128xf32>
    %cst_11 = arith.constant 0.000000e+00 : f32
    %14 = vector.broadcast %cst_11 : f32 to vector<8x128xf32>
    %15 = arith.maximumf %13, %14 : vector<8x128xf32>
    %16 = arith.truncf %15 : vector<8x128xf32> to vector<8x128xbf16>
    %c0_12 = arith.constant 0 : index
    %c0_13 = arith.constant 0 : index
    %17 = vector.load %arg6[%c0_12, %c0_13] : memref<128x128xbf16, #tpu.memory_space<vmem>>, vector<128x128xbf16>
    %cst_14 = arith.constant dense<0.000000e+00> : vector<8x128xf32>
    %18 = tpu.matmul %16, %17, %cst_14 {dimension_numbers = #tpu.dot_dimension_numbers<[1], [0], [0], [1], [0, 0, 1, 1], [], []>} : vector<8x128xbf16>, vector<128x128xbf16>, vector<8x128xf32> -> vector<8x128xf32>
    %c0_15 = arith.constant 0 : index
    %c0_16 = arith.constant 0 : index
    %19 = vector.load %arg7[%c0_15, %c0_16] : memref<1x128xf32, #tpu.memory_space<vmem>>, vector<1x128xf32>
    %20 = vector.broadcast %19 : vector<1x128xf32> to vector<8x128xf32>
    %21 = arith.addf %18, %20 : vector<8x128xf32>
    %c0_17 = arith.constant 0 : index
    %c0_18 = arith.constant 0 : index
    %22 = vector.load %arg8[%c0_17, %c0_18] : memref<8x128xf32, #tpu.memory_space<vmem>>, vector<8x128xf32>
    tpu.vector_store %arg8[%c0_17, %c0_18], %21 {strides = array<i32>} : memref<8x128xf32, #tpu.memory_space<vmem>>, vector<8x128xf32>,
    return
  }
  func.func @transform_0(%arg0: i32) -> (i32, i32) {
    %c0_i32 = arith.constant 0 : i32
    %c0_i32_0 = arith.constant 0 : i32
    return %arg0, %c0_i32 : i32, i32
  }
  func.func @transform_1(%arg0: i32) -> (i32, i32) {
    %c0_i32 = arith.constant 0 : i32
    %c0_i32_0 = arith.constant 0 : i32
    %c0_i32_1 = arith.constant 0 : i32
    return %c0_i32, %c0_i32_0 : i32, i32
  }
  func.func @transform_2(%arg0: i32) -> (i32, i32) {
    %c0_i32 = arith.constant 0 : i32
    %c0_i32_0 = arith.constant 0 : i32
    %c0_i32_1 = arith.constant 0 : i32
    return %c0_i32, %c0_i32_0 : i32, i32
  }
  func.func @transform_3(%arg0: i32) -> (i32, i32) {
    %c0_i32 = arith.constant 0 : i32
    %c0_i32_0 = arith.constant 0 : i32
    %c0_i32_1 = arith.constant 0 : i32
    return %c0_i32, %c0_i32_0 : i32, i32
  }
  func.func @transform_4(%arg0: i32) -> (i32, i32) {
    %c0_i32 = arith.constant 0 : i32
    %c0_i32_0 = arith.constant 0 : i32
    %c0_i32_1 = arith.constant 0 : i32
    return %c0_i32, %c0_i32_0 : i32, i32
  }
  func.func @transform_5(%arg0: i32) -> (i32, i32) {
    %c0_i32 = arith.constant 0 : i32
    %c0_i32_0 = arith.constant 0 : i32
    %c0_i32_1 = arith.constant 0 : i32
    return %c0_i32, %c0_i32_0 : i32, i32
  }
  func.func @transform_6(%arg0: i32) -> (i32, i32) {
    %c0_i32 = arith.constant 0 : i32
    %c0_i32_0 = arith.constant 0 : i32
    %c0_i32_1 = arith.constant 0 : i32
    return %c0_i32, %c0_i32_0 : i32, i32
  }
  func.func @transform_7(%arg0: i32) -> (i32, i32) {
    %c0_i32 = arith.constant 0 : i32
    %c0_i32_0 = arith.constant 0 : i32
    return %arg0, %c0_i32 : i32, i32
  }
}

</mosaic_0001>

<llo_original>
// kernel: vanilla_net_forward.3
$region0: #{vanilla_net_forward.3}
  #allocation0 [shape = 'u32[]', space=smem, size = 0x4, offset = 0x4, fixed_abs, tag = 'smem constant byte address 0x4 - core index']
  #allocation1 [shape = 'u32[144,128]{1,0:T(1,128)}', space=vmem, size = 0x12000, scoped, tag = 'internal scratch']
  %s0 = inlined_call_operand.vmem [shape: bf16[392,128], index: 0, kind: input, shape index: {}]
  %s1 = inlined_call_operand.vmem [shape: bf16[392,128], index: 1, kind: input, shape index: {}]
  %s2 = inlined_call_operand.vmem [shape: bf16[392,128], index: 2, kind: input, shape index: {}]
  %s3 = inlined_call_operand.vmem [shape: bf16[392,128], index: 3, kind: input, shape index: {}]
  %s4 = inlined_call_operand.vmem [shape: bf16[128,128], index: 4, kind: input, shape index: {}]
  %s5 = inlined_call_operand.vmem [shape: f32[1,128], index: 5, kind: input, shape index: {}]
  %s6 = inlined_call_operand.vmem [shape: f32[392,128], index: 6, kind: output, shape index: {}]
  %s7 = sld [smem:[#allocation0]]
  $region34: #{vanilla_net_forward.3} parent=0
    _
  %s9 = ssub.s32 1, %s7
  %s10 = scalar_select 0, %s9, %s7
  // Predicated region
  $region2: #{vanilla_net_forward.3} parent=0 // pred_check
    _
  $region3: #{vanilla_net_forward.3} parent=0 // pred_check_branch
    %12 = sbr.rel (0) target = $region5
  $region4: #{vanilla_net_forward.3} parent=0 // pred_region
    _
  $region5: #{vanilla_net_forward.3} parent=0 // pred_fallthru
    _
  // Predicated region
  $region6: #{vanilla_net_forward.3} parent=0 // pred_check
    _
  $region7: #{vanilla_net_forward.3} parent=0 // pred_check_branch
    %14 = sbr.rel (0) target = $region9
  $region8: #{vanilla_net_forward.3} parent=0 // pred_region
    _
  $region9: #{vanilla_net_forward.3} parent=0 // pred_fallthru
    _
  // Predicated region
  $region10: #{vanilla_net_forward.3} parent=0 // pred_check
    _
  $region11: #{vanilla_net_forward.3} parent=0 // pred_check_branch
    %16 = sbr.rel (0) target = $region13
  $region12: #{vanilla_net_forward.3} parent=0 // pred_region
    _
  $region13: #{vanilla_net_forward.3} parent=0 // pred_fallthru
    _
  // Predicated region
  $region14: #{vanilla_net_forward.3} parent=0 // pred_check
    _
  $region15: #{vanilla_net_forward.3} parent=0 // pred_check_branch
    %18 = sbr.rel (0) target = $region17
  $region16: #{vanilla_net_forward.3} parent=0 // pred_region
    _
  $region17: #{vanilla_net_forward.3} parent=0 // pred_fallthru
    _
  // Predicated region
  $region18: #{vanilla_net_forward.3} parent=0 // pred_check
    _
  $region19: #{vanilla_net_forward.3} parent=0 // pred_check_branch
    %20 = sbr.rel (0) target = $region21
  $region20: #{vanilla_net_forward.3} parent=0 // pred_region
    _
  $region21: #{vanilla_net_forward.3} parent=0 // pred_fallthru
    _
  // Predicated region
  $region22: #{vanilla_net_forward.3} parent=0 // pred_check
    _
  $region23: #{vanilla_net_forward.3} parent=0 // pred_check_branch
    %22 = sbr.rel (0) target = $region25
  $region24: #{vanilla_net_forward.3} parent=0 // pred_region
    _
  $region25: #{vanilla_net_forward.3} parent=0 // pred_fallthru
    _
  %v24 = vld [vmem:[%s4] sm:$0xf]
  %v25 = vld [vmem:[%s4 + $0x4] sm:$0xf]
  %v26 = vld [vmem:[%s4 + $0x8] sm:$0xf]
  %v27 = vld [vmem:[%s4 + $0xc] sm:$0xf]
  %v28 = vld [vmem:[%s4 + $0x10] sm:$0xf]
  %v29 = vld [vmem:[%s4 + $0x14] sm:$0xf]
  %v30 = vld [vmem:[%s4 + $0x18] sm:$0xf]
  %v31 = vld [vmem:[%s4 + $0x1c] sm:$0xf]
  %v32 = vld [vmem:[%s4 + $0x20] sm:$0xf]
  %v33 = vld [vmem:[%s4 + $0x24] sm:$0xf]
  %v34 = vld [vmem:[%s4 + $0x28] sm:$0xf]
  %v35 = vld [vmem:[%s4 + $0x2c] sm:$0xf]
  %v36 = vld [vmem:[%s4 + $0x30] sm:$0xf]
  %v37 = vld [vmem:[%s4 + $0x34] sm:$0xf]
  %v38 = vld [vmem:[%s4 + $0x38] sm:$0xf]
  %v39 = vld [vmem:[%s4 + $0x3c] sm:$0xf]
  %v40 = vld [vmem:[%s0] sm:$0xf]
  %v41 = vld [vmem:[%s0 + $0x4] sm:$0xf]
  %v42 = vld [vmem:[%s0 + $0x8] sm:$0xf]
  %v43 = vld [vmem:[%s0 + $0xc] sm:$0xf]
  %v44 = vld [vmem:[%s0 + $0x10] sm:$0xf]
  %v45 = vld [vmem:[%s0 + $0x14] sm:$0xf]
  %v46 = vld [vmem:[%s0 + $0x18] sm:$0xf]
  %v47 = vld [vmem:[%s0 + $0x1c] sm:$0xf]
  %v48 = vld [vmem:[%s0 + $0x20] sm:$0xf]
  %v49 = vld [vmem:[%s0 + $0x24] sm:$0xf]
  %v50 = vld [vmem:[%s0 + $0x28] sm:$0xf]
  %v51 = vld [vmem:[%s0 + $0x2c] sm:$0xf]
  %v52 = vld [vmem:[%s0 + $0x30] sm:$0xf]
  %v53 = vld [vmem:[%s0 + $0x34] sm:$0xf]
  %v54 = vld [vmem:[%s0 + $0x38] sm:$0xf]
  %v55 = vld [vmem:[%s0 + $0x3c] sm:$0xf]
  %v56 = vld [vmem:[%s0 + $0x40] sm:$0xf]
  %v57 = vld [vmem:[%s0 + $0x44] sm:$0xf]
  %v58 = vld [vmem:[%s0 + $0x48] sm:$0xf]
  %v59 = vld [vmem:[%s0 + $0x4c] sm:$0xf]
  %v60 = vld [vmem:[%s0 + $0x50] sm:$0xf]
  %v61 = vld [vmem:[%s0 + $0x54] sm:$0xf]
  %v62 = vld [vmem:[%s0 + $0x58] sm:$0xf]
  %v63 = vld [vmem:[%s0 + $0x5c] sm:$0xf]
  %v64 = vld [vmem:[%s0 + $0x60] sm:$0xf]
  %v65 = vld [vmem:[%s0 + $0x64] sm:$0xf]
  %v66 = vld [vmem:[%s0 + $0x68] sm:$0xf]
  %v67 = vld [vmem:[%s0 + $0x6c] sm:$0xf]
  %v68 = vld [vmem:[%s0 + $0x70] sm:$0xf]
  %v69 = vld [vmem:[%s0 + $0x74] sm:$0xf]
  %v70 = vld [vmem:[%s0 + $0x78] sm:$0xf]
  %v71 = vld [vmem:[%s0 + $0x7c] sm:$0xf]
  %v72 = vld [vmem:[%s0 + $0x80] sm:$0xf]
  %v73 = vld [vmem:[%s0 + $0x84] sm:$0xf]
  %v74 = vld [vmem:[%s0 + $0x88] sm:$0xf]
  %v75 = vld [vmem:[%s0 + $0x8c] sm:$0xf]
  %v76 = vld [vmem:[%s0 + $0x90] sm:$0xf]
  %v77 = vld [vmem:[%s0 + $0x94] sm:$0xf]
  %v78 = vld [vmem:[%s0 + $0x98] sm:$0xf]
  %v79 = vld [vmem:[%s0 + $0x9c] sm:$0xf]
  %v80 = vld [vmem:[%s0 + $0xa0] sm:$0xf]
  %v81 = vld [vmem:[%s0 + $0xa4] sm:$0xf]
  %v82 = vld [vmem:[%s0 + $0xa8] sm:$0xf]
  %v83 = vld [vmem:[%s0 + $0xac] sm:$0xf]
  %v84 = vld [vmem:[%s0 + $0xb0] sm:$0xf]
  %v85 = vld [vmem:[%s0 + $0xb4] sm:$0xf]
  %v86 = vld [vmem:[%s0 + $0xb8] sm:$0xf]
  %v87 = vld [vmem:[%s0 + $0xbc] sm:$0xf]
  %v88 = vld [vmem:[%s0 + $0xc0] sm:$0xf]
  %v138 = vunpack.c.l.b16 %v40
  %v139 = vunpack.c.l.b16 %v41
  %v140 = vunpack.c.l.b16 %v42
  %v141 = vunpack.c.l.b16 %v43
  %v142 = vunpack.c.l.b16 %v44
  %v143 = vunpack.c.l.b16 %v45
  %v144 = vunpack.c.l.b16 %v46
  %v145 = vunpack.c.l.b16 %v47
  %v146 = vunpack.c.l.b16 %v48
  %v147 = vunpack.c.l.b16 %v49
  %v148 = vunpack.c.l.b16 %v50
  %v149 = vunpack.c.l.b16 %v51
  %v150 = vunpack.c.l.b16 %v52
  %v151 = vunpack.c.l.b16 %v53
  %v152 = vunpack.c.l.b16 %v54
  %v153 = vunpack.c.l.b16 %v55
  %v154 = vunpack.c.l.b16 %v56
  %v155 = vunpack.c.l.b16 %v57
  %v156 = vunpack.c.l.b16 %v58
  %v157 = vunpack.c.l.b16 %v59
  %v158 = vunpack.c.l.b16 %v60
  %v159 = vunpack.c.l.b16 %v61
  %v160 = vunpack.c.l.b16 %v62
  %v161 = vunpack.c.l.b16 %v63
  %v162 = vunpack.c.l.b16 %v64
  %v163 = vunpack.c.l.b16 %v65
  %v164 = vunpack.c.l.b16 %v66
  %v165 = vunpack.c.l.b16 %v67
  %v166 = vunpack.c.l.b16 %v68
  %v167 = vunpack.c.l.b16 %v69
  %v168 = vunpack.c.l.b16 %v70
  %v169 = vunpack.c.l.b16 %v71
  %v170 = vunpack.c.l.b16 %v72
  %v171 = vunpack.c.l.b16 %v73
  %v172 = vunpack.c.l.b16 %v74
  %v173 = vunpack.c.l.b16 %v75
  %v174 = vunpack.c.l.b16 %v76
  %v175 = vunpack.c.l.b16 %v77
  %v176 = vunpack.c.l.b16 %v78
  %v177 = vunpack.c.l.b16 %v79
  %v178 = vunpack.c.l.b16 %v80
  %v179 = vunpack.c.l.b16 %v81
  %v180 = vunpack.c.l.b16 %v82
  %v181 = vunpack.c.l.b16 %v83
  %v182 = vunpack.c.l.b16 %v84
  %v183 = vunpack.c.l.b16 %v85
  %v184 = vunpack.c.l.b16 %v86
  %v185 = vunpack.c.l.b16 %v87
  %v186 = vunpack.c.l.b16 %v88
  %v187 = vpack.c.b16 %v139, %v138
  %v188 = vpack.c.b16 %v141, %v140
  %v189 = vpack.c.b16 %v143, %v142
  %v190 = vpack.c.b16 %v145, %v144
  %v191 = vpack.c.b16 %v147, %v146
  %v192 = vpack.c.b16 %v149, %v148
  %v193 = vpack.c.b16 %v151, %v150
  %v194 = vpack.c.b16 %v153, %v152
  %v195 = vpack.c.b16 %v155, %v154
  %v196 = vpack.c.b16 %v157, %v156
  %v197 = vpack.c.b16 %v159, %v158
  %v198 = vpack.c.b16 %v161, %v160
  %v199 = vpack.c.b16 %v163, %v162
  %v200 = vpack.c.b16 %v165, %v164
  %v201 = vpack.c.b16 %v167, %v166
  %v202 = vpack.c.b16 %v169, %v168
  %v203 = vpack.c.b16 %v171, %v170
  %v204 = vpack.c.b16 %v173, %v172
  %v205 = vpack.c.b16 %v175, %v174
  %v206 = vpack.c.b16 %v177, %v176
  %v207 = vpack.c.b16 %v179, %v178
  %v208 = vpack.c.b16 %v181, %v180
  %v209 = vpack.c.b16 %v183, %v182
  %v210 = vpack.c.b16 %v185, %v184
  %v211 = vpack.c.b16 %v186, %v186
  %v253 = vunpack.c.l.b16 %v24
  %v254 = vunpack.c.l.b16 %v25
  %v255 = vunpack.c.l.b16 %v26
  %v256 = vunpack.c.l.b16 %v27
  %v257 = vunpack.c.l.b16 %v28
  %v258 = vunpack.c.l.b16 %v29
  %v259 = vunpack.c.l.b16 %v30
  %v260 = vunpack.c.l.b16 %v31
  %v261 = vunpack.c.l.b16 %v32
  %v262 = vunpack.c.l.b16 %v33
  %v263 = vunpack.c.l.b16 %v34
  %v264 = vunpack.c.l.b16 %v35
  %v265 = vunpack.c.l.b16 %v36
  %v266 = vunpack.c.l.b16 %v37
  %v267 = vunpack.c.l.b16 %v38
  %v268 = vunpack.c.l.b16 %v39
  %v269 = vpack.c.b16 %v254, %v253
  %v270 = vpack.c.b16 %v256, %v255
  %v271 = vpack.c.b16 %v258, %v257
  %v272 = vpack.c.b16 %v260, %v259
  %v273 = vpack.c.b16 %v262, %v261
  %v274 = vpack.c.b16 %v264, %v263
  %v275 = vpack.c.b16 %v266, %v265
  %v276 = vpack.c.b16 %v268, %v267
  %285 = vmatprep.subr.bf16.mxu0 0
  %286 = vmatpush1.bf16.msra.mxu0 %v269
  %287 = vmatprep.subr.bf16.mxu0 0
  %288 = vmatpush1.bf16.msra.mxu0 %v270
  %289 = vmatprep.subr.bf16.mxu0 0
  %290 = vmatpush1.bf16.msra.mxu0 %v271
  %291 = vmatprep.subr.bf16.mxu0 0
  %292 = vmatpush1.bf16.msra.mxu0 %v272
  %293 = vmatprep.subr.bf16.mxu0 0
  %294 = vmatpush1.bf16.msra.mxu0 %v273
  %295 = vmatprep.subr.bf16.mxu0 0
  %296 = vmatpush1.bf16.msra.mxu0 %v274
  %297 = vmatprep.subr.bf16.mxu0 0
  %298 = vmatpush1.bf16.msra.mxu0 %v275
  %299 = vmatprep.subr.bf16.mxu0 0
  %300 = vmatpush1.bf16.msra.mxu0 %v276
  %301 = vmatprep.subr.bf16.mxu0 0
  %302 = vmatpush1.bf16.msra.mxu0 0
  %303 = vmatprep.subr.bf16.mxu0 0
  %304 = vmatpush1.bf16.msra.mxu0 0
  %305 = vmatprep.subr.bf16.mxu0 0
  %306 = vmatpush1.bf16.msra.mxu0 0
  %307 = vmatprep.subr.bf16.mxu0 0
  %308 = vmatpush1.bf16.msra.mxu0 0
  %309 = vmatprep.subr.bf16.mxu0 0
  %310 = vmatpush1.bf16.msra.mxu0 0
  %311 = vmatprep.subr.bf16.mxu0 0
  %312 = vmatpush1.bf16.msra.mxu0 0
  %313 = vmatprep.subr.bf16.mxu0 0
  %314 = vmatpush1.bf16.msra.mxu0 0
  %315 = vmatprep.subr.bf16.mxu0 0
  %316 = vmatpush1.bf16.msra.mxu0 0
  %317 = vmatprep.mubr.bf16.mxu0 0
  %318 = vmatmul.mubr.bf16.gmra.mrb[0].mxu0 %v187
  %v319 = vpop.f32.mrb[0].mxu0
  %v320 = vadd.f32 0.0, %v319
  %v321 = vpop.f32.mrb[0].mxu0
  %v322 = vpop.f32.mrb[0].mxu0
  %v323 = vadd.f32 0.0, %v322
  %v324 = vpop.f32.mrb[0].mxu0
  %325 = vmatprep.mubr.bf16.mxu0 0
  %326 = vmatmul.mubr.bf16.gmra.mrb[0].mxu0 %v188
  %v327 = vpop.f32.mrb[0].mxu0
  %v328 = vadd.f32 0.0, %v327
  %v329 = vpop.f32.mrb[0].mxu0
  %v330 = vpop.f32.mrb[0].mxu0
  %v331 = vadd.f32 0.0, %v330
  %v332 = vpop.f32.mrb[0].mxu0
  %333 = vmatprep.mubr.bf16.mxu0 0
  %334 = vmatmul.mubr.bf16.gmra.mrb[0].mxu0 %v189
  %v335 = vpop.f32.mrb[0].mxu0
  %v336 = vadd.f32 0.0, %v335
  %v337 = vpop.f32.mrb[0].mxu0
  %v338 = vpop.f32.mrb[0].mxu0
  %v339 = vadd.f32 0.0, %v338
  %v340 = vpop.f32.mrb[0].mxu0
  %341 = vmatprep.mubr.bf16.mxu0 0
  %342 = vmatmul.mubr.bf16.gmra.mrb[0].mxu0 %v190
  %v343 = vpop.f32.mrb[0].mxu0
  %v344 = vadd.f32 0.0, %v343
  %v345 = vpop.f32.mrb[0].mxu0
  %v346 = vpop.f32.mrb[0].mxu0
  %v347 = vadd.f32 0.0, %v346
  %v348 = vpop.f32.mrb[0].mxu0
  %349 = vmatprep.mubr.bf16.mxu0 0
  %350 = vmatmul.mubr.bf16.gmra.mrb[0].mxu0 %v191
  %v351 = vpop.f32.mrb[0].mxu0
  %v352 = vadd.f32 0.0, %v351
  %v353 = vpop.f32.mrb[0].mxu0
  %v354 = vpop.f32.mrb[0].mxu0
  %v355 = vadd.f32 0.0, %v354
  %v356 = vpop.f32.mrb[0].mxu0
  %357 = vmatprep.mubr.bf16.mxu0 0
  %358 = vmatmul.mubr.bf16.gmra.mrb[0].mxu0 %v192
  %v359 = vpop.f32.mrb[0].mxu0
  %v360 = vadd.f32 0.0, %v359
  %v361 = vpop.f32.mrb[0].mxu0
  %v362 = vpop.f32.mrb[0].mxu0
  %v363 = vadd.f32 0.0, %v362
  %v364 = vpop.f32.mrb[0].mxu0
  %365 = vmatprep.mubr.bf16.mxu0 0
  %366 = vmatmul.mubr.bf16.gmra.mrb[0].mxu0 %v193
  %v367 = vpop.f32.mrb[0].mxu0
  %v368 = vadd.f32 0.0, %v367
  %v369 = vpop.f32.mrb[0].mxu0
  %v370 = vpop.f32.mrb[0].mxu0
  %v371 = vadd.f32 0.0, %v370
  %v372 = vpop.f32.mrb[0].mxu0
  %373 = vmatprep.mubr.bf16.mxu0 0
  %374 = vmatmul.mubr.bf16.gmra.mrb[0].mxu0 %v194
  %v375 = vpop.f32.mrb[0].mxu0
  %v376 = vadd.f32 0.0, %v375
  %v377 = vpop.f32.mrb[0].mxu0
  %v378 = vpop.f32.mrb[0].mxu0
  %v379 = vadd.f32 0.0, %v378
  %v380 = vpop.f32.mrb[0].mxu0
  %381 = vmatprep.mubr.bf16.mxu0 0
  %382 = vmatmul.mubr.bf16.gmra.mrb[0].mxu0 %v195
  %v383 = vpop.f32.mrb[0].mxu0
  %v384 = vadd.f32 0.0, %v383
  %v385 = vpop.f32.mrb[0].mxu0
  %v386 = vpop.f32.mrb[0].mxu0
  %v387 = vadd.f32 0.0, %v386
  %v388 = vpop.f32.mrb[0].mxu0
  %389 = vmatprep.mubr.bf16.mxu0 0
  %390 = vmatmul.mubr.bf16.gmra.mrb[0].mxu0 %v196
  %v391 = vpop.f32.mrb[0].mxu0
  %v392 = vadd.f32 0.0, %v391
  %v393 = vpop.f32.mrb[0].mxu0
  %v394 = vpop.f32.mrb[0].mxu0
  %v395 = vadd.f32 0.0, %v394
  %v396 = vpop.f32.mrb[0].mxu0
  %397 = vmatprep.mubr.bf16.mxu0 0
  %398 = vmatmul.mubr.bf16.gmra.mrb[0].mxu0 %v197
  %v399 = vpop.f32.mrb[0].mxu0
  %v400 = vadd.f32 0.0, %v399
  %v401 = vpop.f32.mrb[0].mxu0
  %v402 = vpop.f32.mrb[0].mxu0
  %v403 = vadd.f32 0.0, %v402
  %v404 = vpop.f32.mrb[0].mxu0
  %405 = vmatprep.mubr.bf16.mxu0 0
  %406 = vmatmul.mubr.bf16.gmra.mrb[0].mxu0 %v198
  %v407 = vpop.f32.mrb[0].mxu0
  %v408 = vadd.f32 0.0, %v407
  %v409 = vpop.f32.mrb[0].mxu0
  %v410 = vpop.f32.mrb[0].mxu0
  %v411 = vadd.f32 0.0, %v410
  %v412 = vpop.f32.mrb[0].mxu0
  %413 = vmatprep.mubr.bf16.mxu0 0
  %414 = vmatmul.mubr.bf16.gmra.mrb[0].mxu0 %v199
  %v415 = vpop.f32.mrb[0].mxu0
  %v416 = vadd.f32 0.0, %v415
  %v417 = vpop.f32.mrb[0].mxu0
  %v418 = vpop.f32.mrb[0].mxu0
  %v419 = vadd.f32 0.0, %v418
  %v420 = vpop.f32.mrb[0].mxu0
  %421 = vmatprep.mubr.bf16.mxu0 0
  %422 = vmatmul.mubr.bf16.gmra.mrb[0].mxu0 %v200
  %v423 = vpop.f32.mrb[0].mxu0
  %v424 = vadd.f32 0.0, %v423
  %v425 = vpop.f32.mrb[0].mxu0
  %v426 = vpop.f32.mrb[0].mxu0
  %v427 = vadd.f32 0.0, %v426
  %v428 = vpop.f32.mrb[0].mxu0
  %429 = vmatprep.mubr.bf16.mxu0 0
  %430 = vmatmul.mubr.bf16.gmra.mrb[0].mxu0 %v201
  %v431 = vpop.f32.mrb[0].mxu0
  %v432 = vadd.f32 0.0, %v431
  %v433 = vpop.f32.mrb[0].mxu0
  %v434 = vpop.f32.mrb[0].mxu0
  %v435 = vadd.f32 0.0, %v434
  %v436 = vpop.f32.mrb[0].mxu0
  %437 = vmatprep.mubr.bf16.mxu0 0
  %438 = vmatmul.mubr.bf16.gmra.mrb[0].mxu0 %v202
  %v439 = vpop.f32.mrb[0].mxu0
  %v440 = vadd.f32 0.0, %v439
  %v441 = vpop.f32.mrb[0].mxu0
  %v442 = vpop.f32.mrb[0].mxu0
  %v443 = vadd.f32 0.0, %v442
  %v444 = vpop.f32.mrb[0].mxu0
  %445 = vmatprep.mubr.bf16.mxu0 0
  %446 = vmatmul.mubr.bf16.gmra.mrb[0].mxu0 %v203
  %v447 = vpop.f32.mrb[0].mxu0
  %v448 = vadd.f32 0.0, %v447
  %v449 = vpop.f32.mrb[0].mxu0
  %v450 = vpop.f32.mrb[0].mxu0
  %v451 = vadd.f32 0.0, %v450
  %v452 = vpop.f32.mrb[0].mxu0
  %453 = vmatprep.mubr.bf16.mxu0 0
  %454 = vmatmul.mubr.bf16.gmra.mrb[0].mxu0 %v204
  %v455 = vpop.f32.mrb[0].mxu0
  %v456 = vadd.f32 0.0, %v455
  %v457 = vpop.f32.mrb[0].mxu0
  %v458 = vpop.f32.mrb[0].mxu0
  %v459 = vadd.f32 0.0, %v458
  %v460 = vpop.f32.mrb[0].mxu0
  %461 = vmatprep.mubr.bf16.mxu0 0
  %462 = vmatmul.mubr.bf16.gmra.mrb[0].mxu0 %v205
  %v463 = vpop.f32.mrb[0].mxu0
  %v464 = vadd.f32 0.0, %v463
  %v465 = vpop.f32.mrb[0].mxu0
  %v466 = vpop.f32.mrb[0].mxu0
  %v467 = vadd.f32 0.0, %v466
  %v468 = vpop.f32.mrb[0].mxu0
  %469 = vmatprep.mubr.bf16.mxu0 0
  %470 = vmatmul.mubr.bf16.gmra.mrb[0].mxu0 %v206
  %v471 = vpop.f32.mrb[0].mxu0
  %v472 = vadd.f32 0.0, %v471
  %v473 = vpop.f32.mrb[0].mxu0
  %v474 = vpop.f32.mrb[0].mxu0
  %v475 = vadd.f32 0.0, %v474
  %v476 = vpop.f32.mrb[0].mxu0
  %477 = vmatprep.mubr.bf16.mxu0 0
  %478 = vmatmul.mubr.bf16.gmra.mrb[0].mxu0 %v207
  %v479 = vpop.f32.mrb[0].mxu0
  %v480 = vadd.f32 0.0, %v479
  %v481 = vpop.f32.mrb[0].mxu0
  %v482 = vpop.f32.mrb[0].mxu0
  %v483 = vadd.f32 0.0, %v482
  %v484 = vpop.f32.mrb[0].mxu0
  %485 = vmatprep.mubr.bf16.mxu0 0
  %486 = vmatmul.mubr.bf16.gmra.mrb[0].mxu0 %v208
  %v487 = vpop.f32.mrb[0].mxu0
  %v488 = vadd.f32 0.0, %v487
  %v489 = vpop.f32.mrb[0].mxu0
  %v490 = vpop.f32.mrb[0].mxu0
  %v491 = vadd.f32 0.0, %v490
  %v492 = vpop.f32.mrb[0].mxu0
  %493 = vmatprep.mubr.bf16.mxu0 0
  %494 = vmatmul.mubr.bf16.gmra.mrb[0].mxu0 %v209
  %v495 = vpop.f32.mrb[0].mxu0
  %v496 = vadd.f32 0.0, %v495
  %v497 = vpop.f32.mrb[0].mxu0
  %v498 = vpop.f32.mrb[0].mxu0
  %v499 = vadd.f32 0.0, %v498
  %v500 = vpop.f32.mrb[0].mxu0
  %501 = vmatprep.mubr.bf16.mxu0 0
  %502 = vmatmul.mubr.bf16.gmra.mrb[0].mxu0 %v210
  %v503 = vpop.f32.mrb[0].mxu0
  %v504 = vadd.f32 0.0, %v503
  %v505 = vpop.f32.mrb[0].mxu0
  %v506 = vpop.f32.mrb[0].mxu0
  %v507 = vadd.f32 0.0, %v506
  %v508 = vpop.f32.mrb[0].mxu0
  %509 = vmatprep.mubr.bf16.mxu0 0
  %510 = vmatmul.mubr.bf16.gmra.mrb[0].mxu0 %v211
  %v511 = vpop.f32.mrb[0].mxu0
  %v512 = vadd.f32 0.0, %v511
  %v513 = vpop.f32.mrb[0].mxu0
  %v514 = vpop.f32.mrb[0].mxu0
  %v515 = vpop.f32.mrb[0].mxu0
  %516 = vdwg.mxu0
  %v517 = vld [vmem:[%s1] sm:$0xf]
  %v518 = vld [vmem:[%s1 + $0x4] sm:$0xf]
  %v519 = vld [vmem:[%s1 + $0x8] sm:$0xf]
  %v520 = vld [vmem:[%s1 + $0xc] sm:$0xf]
  %v521 = vld [vmem:[%s1 + $0x10] sm:$0xf]
  %v522 = vld [vmem:[%s1 + $0x14] sm:$0xf]
  %v523 = vld [vmem:[%s1 + $0x18] sm:$0xf]
  %v524 = vld [vmem:[%s1 + $0x1c] sm:$0xf]
  %v525 = vld [vmem:[%s1 + $0x20] sm:$0xf]
  %v526 = vld [vmem:[%s1 + $0x24] sm:$0xf]
  %v527 = vld [vmem:[%s1 + $0x28] sm:$0xf]
  %v528 = vld [vmem:[%s1 + $0x2c] sm:$0xf]
  %v529 = vld [vmem:[%s1 + $0x30] sm:$0xf]
  %v530 = vld [vmem:[%s1 + $0x34] sm:$0xf]
  %v531 = vld [vmem:[%s1 + $0x38] sm:$0xf]
  %v532 = vld [vmem:[%s1 + $0x3c] sm:$0xf]
  %v533 = vld [vmem:[%s1 + $0x40] sm:$0xf]
  %v534 = vld [vmem:[%s1 + $0x44] sm:$0xf]
  %v535 = vld [vmem:[%s1 + $0x48] sm:$0xf]
  %v536 = vld [vmem:[%s1 + $0x4c] sm:$0xf]
  %v537 = vld [vmem:[%s1 + $0x50] sm:$0xf]
  %v538 = vld [vmem:[%s1 + $0x54] sm:$0xf]
  %v539 = vld [vmem:[%s1 + $0x58] sm:$0xf]
  %v540 = vld [vmem:[%s1 + $0x5c] sm:$0xf]
  %v541 = vld [vmem:[%s1 + $0x60] sm:$0xf]
  %v542 = vld [vmem:[%s1 + $0x64] sm:$0xf]
  %v543 = vld [vmem:[%s1 + $0x68] sm:$0xf]
  %v544 = vld [vmem:[%s1 + $0x6c] sm:$0xf]
  %v545 = vld [vmem:[%s1 + $0x70] sm:$0xf]
  %v546 = vld [vmem:[%s1 + $0x74] sm:$0xf]
  %v547 = vld [vmem:[%s1 + $0x78] sm:$0xf]
  %v548 = vld [vmem:[%s1 + $0x7c] sm:$0xf]
  %v549 = vld [vmem:[%s1 + $0x80] sm:$0xf]
  %v550 = vld [vmem:[%s1 + $0x84] sm:$0xf]
  %v551 = vld [vmem:[%s1 + $0x88] sm:$0xf]
  %v552 = vld [vmem:[%s1 + $0x8c] sm:$0xf]
  %v553 = vld [vmem:[%s1 + $0x90] sm:$0xf]
  %v554 = vld [vmem:[%s1 + $0x94] sm:$0xf]
  %v555 = vld [vmem:[%s1 + $0x98] sm:$0xf]
  %v556 = vld [vmem:[%s1 + $0x9c] sm:$0xf]
  %v557 = vld [vmem:[%s1 + $0xa0] sm:$0xf]
  %v558 = vld [vmem:[%s1 + $0xa4] sm:$0xf]
  %v559 = vld [vmem:[%s1 + $0xa8] sm:$0xf]
  %v560 = vld [vmem:[%s1 + $0xac] sm:$0xf]
  %v561 = vld [vmem:[%s1 + $0xb0] sm:$0xf]
  %v562 = vld [vmem:[%s1 + $0xb4] sm:$0xf]
  %v563 = vld [vmem:[%s1 + $0xb8] sm:$0xf]
  %v564 = vld [vmem:[%s1 + $0xbc] sm:$0xf]
  %v565 = vld [vmem:[%s1 + $0xc0] sm:$0xf]
  %v615 = vunpack.c.l.b16 %v517
  %v616 = vunpack.c.l.b16 %v518
  %v617 = vunpack.c.l.b16 %v519
  %v618 = vunpack.c.l.b16 %v520
  %v619 = vunpack.c.l.b16 %v521
  %v620 = vunpack.c.l.b16 %v522
  %v621 = vunpack.c.l.b16 %v523
  %v622 = vunpack.c.l.b16 %v524
  %v623 = vunpack.c.l.b16 %v525
  %v624 = vunpack.c.l.b16 %v526
  %v625 = vunpack.c.l.b16 %v527
  %v626 = vunpack.c.l.b16 %v528
  %v627 = vunpack.c.l.b16 %v529
  %v628 = vunpack.c.l.b16 %v530
  %v629 = vunpack.c.l.b16 %v531
  %v630 = vunpack.c.l.b16 %v532
  %v631 = vunpack.c.l.b16 %v533
  %v632 = vunpack.c.l.b16 %v534
  %v633 = vunpack.c.l.b16 %v535
  %v634 = vunpack.c.l.b16 %v536
  %v635 = vunpack.c.l.b16 %v537
  %v636 = vunpack.c.l.b16 %v538
  %v637 = vunpack.c.l.b16 %v539
  %v638 = vunpack.c.l.b16 %v540
  %v639 = vunpack.c.l.b16 %v541
  %v640 = vunpack.c.l.b16 %v542
  %v641 = vunpack.c.l.b16 %v543
  %v642 = vunpack.c.l.b16 %v544
  %v643 = vunpack.c.l.b16 %v545
  %v644 = vunpack.c.l.b16 %v546
  %v645 = vunpack.c.l.b16 %v547
  %v646 = vunpack.c.l.b16 %v548
  %v647 = vunpack.c.l.b16 %v549
  %v648 = vunpack.c.l.b16 %v550
  %v649 = vunpack.c.l.b16 %v551
  %v650 = vunpack.c.l.b16 %v552
  %v651 = vunpack.c.l.b16 %v553
  %v652 = vunpack.c.l.b16 %v554
  %v653 = vunpack.c.l.b16 %v555
  %v654 = vunpack.c.l.b16 %v556
  %v655 = vunpack.c.l.b16 %v557
  %v656 = vunpack.c.l.b16 %v558
  %v657 = vunpack.c.l.b16 %v559
  %v658 = vunpack.c.l.b16 %v560
  %v659 = vunpack.c.l.b16 %v561
  %v660 = vunpack.c.l.b16 %v562
  %v661 = vunpack.c.l.b16 %v563
  %v662 = vunpack.c.l.b16 %v564
  %v663 = vunpack.c.l.b16 %v565
  %v664 = vpack.c.b16 %v616, %v615
  %v665 = vpack.c.b16 %v618, %v617
  %v666 = vpack.c.b16 %v620, %v619
  %v667 = vpack.c.b16 %v622, %v621
  %v668 = vpack.c.b16 %v624, %v623
  %v669 = vpack.c.b16 %v626, %v625
  %v670 = vpack.c.b16 %v628, %v627
  %v671 = vpack.c.b16 %v630, %v629
  %v672 = vpack.c.b16 %v632, %v631
  %v673 = vpack.c.b16 %v634, %v633
  %v674 = vpack.c.b16 %v636, %v635
  %v675 = vpack.c.b16 %v638, %v637
  %v676 = vpack.c.b16 %v640, %v639
  %v677 = vpack.c.b16 %v642, %v641
  %v678 = vpack.c.b16 %v644, %v643
  %v679 = vpack.c.b16 %v646, %v645
  %v680 = vpack.c.b16 %v648, %v647
  %v681 = vpack.c.b16 %v650, %v649
  %v682 = vpack.c.b16 %v652, %v651
  %v683 = vpack.c.b16 %v654, %v653
  %v684 = vpack.c.b16 %v656, %v655
  %v685 = vpack.c.b16 %v658, %v657
  %v686 = vpack.c.b16 %v660, %v659
  %v687 = vpack.c.b16 %v662, %v661
  %v688 = vpack.c.b16 %v663, %v663
  %714 = vmatprep.subr.bf16.mxu0 0
  %715 = vmatpush1.bf16.msra.mxu0 %v269
  %716 = vmatprep.subr.bf16.mxu0 0
  %717 = vmatpush1.bf16.msra.mxu0 %v270
  %718 = vmatprep.subr.bf16.mxu0 0
  %719 = vmatpush1.bf16.msra.mxu0 %v271
  %720 = vmatprep.subr.bf16.mxu0 0
  %721 = vmatpush1.bf16.msra.mxu0 %v272
  %722 = vmatprep.subr.bf16.mxu0 0
  %723 = vmatpush1.bf16.msra.mxu0 %v273
  %724 = vmatprep.subr.bf16.mxu0 0
  %725 = vmatpush1.bf16.msra.mxu0 %v274
  %726 = vmatprep.subr.bf16.mxu0 0
  %727 = vmatpush1.bf16.msra.mxu0 %v275
  %728 = vmatprep.subr.bf16.mxu0 0
  %729 = vmatpush1.bf16.msra.mxu0 %v276
  %730 = vmatprep.subr.bf16.mxu0 0
  %731 = vmatpush1.bf16.msra.mxu0 0
  %732 = vmatprep.subr.bf16.mxu0 0
  %733 = vmatpush1.bf16.msra.mxu0 0
  %734 = vmatprep.subr.bf16.mxu0 0
  %735 = vmatpush1.bf16.msra.mxu0 0
  %736 = vmatprep.subr.bf16.mxu0 0
  %737 = vmatpush1.bf16.msra.mxu0 0
  %738 = vmatprep.subr.bf16.mxu0 0
  %739 = vmatpush1.bf16.msra.mxu0 0
  %740 = vmatprep.subr.bf16.mxu0 0
  %741 = vmatpush1.bf16.msra.mxu0 0
  %742 = vmatprep.subr.bf16.mxu0 0
  %743 = vmatpush1.bf16.msra.mxu0 0
  %744 = vmatprep.subr.bf16.mxu0 0
  %745 = vmatpush1.bf16.msra.mxu0 0
  %746 = vmatprep.mubr.bf16.mxu0 0
  %747 = vmatmul.mubr.bf16.gmra.mrb[0].mxu0 %v664
  %v748 = vpop.f32.mrb[0].mxu0
  %v749 = vadd.f32 0.0, %v748
  %v750 = vpop.f32.mrb[0].mxu0
  %v751 = vpop.f32.mrb[0].mxu0
  %v752 = vadd.f32 0.0, %v751
  %v753 = vpop.f32.mrb[0].mxu0
  %754 = vmatprep.mubr.bf16.mxu0 0
  %755 = vmatmul.mubr.bf16.gmra.mrb[0].mxu0 %v665
  %v756 = vpop.f32.mrb[0].mxu0
  %v757 = vadd.f32 0.0, %v756
  %v758 = vpop.f32.mrb[0].mxu0
  %v759 = vpop.f32.mrb[0].mxu0
  %v760 = vadd.f32 0.0, %v759
  %v761 = vpop.f32.mrb[0].mxu0
  %762 = vmatprep.mubr.bf16.mxu0 0
  %763 = vmatmul.mubr.bf16.gmra.mrb[0].mxu0 %v666
  %v764 = vpop.f32.mrb[0].mxu0
  %v765 = vadd.f32 0.0, %v764
  %v766 = vpop.f32.mrb[0].mxu0
  %v767 = vpop.f32.mrb[0].mxu0
  %v768 = vadd.f32 0.0, %v767
  %v769 = vpop.f32.mrb[0].mxu0
  %770 = vmatprep.mubr.bf16.mxu0 0
  %771 = vmatmul.mubr.bf16.gmra.mrb[0].mxu0 %v667
  %v772 = vpop.f32.mrb[0].mxu0
  %v773 = vadd.f32 0.0, %v772
  %v774 = vpop.f32.mrb[0].mxu0
  %v775 = vpop.f32.mrb[0].mxu0
  %v776 = vadd.f32 0.0, %v775
  %v777 = vpop.f32.mrb[0].mxu0
  %778 = vmatprep.mubr.bf16.mxu0 0
  %779 = vmatmul.mubr.bf16.gmra.mrb[0].mxu0 %v668
  %v780 = vpop.f32.mrb[0].mxu0
  %v781 = vadd.f32 0.0, %v780
  %v782 = vpop.f32.mrb[0].mxu0
  %v783 = vpop.f32.mrb[0].mxu0
  %v784 = vadd.f32 0.0, %v783
  %v785 = vpop.f32.mrb[0].mxu0
  %786 = vmatprep.mubr.bf16.mxu0 0
  %787 = vmatmul.mubr.bf16.gmra.mrb[0].mxu0 %v669
  %v788 = vpop.f32.mrb[0].mxu0
  %v789 = vadd.f32 0.0, %v788
  %v790 = vpop.f32.mrb[0].mxu0
  %v791 = vpop.f32.mrb[0].mxu0
  %v792 = vadd.f32 0.0, %v791
  %v793 = vpop.f32.mrb[0].mxu0
  %794 = vmatprep.mubr.bf16.mxu0 0
  %795 = vmatmul.mubr.bf16.gmra.mrb[0].mxu0 %v670
  %v796 = vpop.f32.mrb[0].mxu0
  %v797 = vadd.f32 0.0, %v796
  %v798 = vpop.f32.mrb[0].mxu0
  %v799 = vpop.f32.mrb[0].mxu0
  %v800 = vadd.f32 0.0, %v799
  %v801 = vpop.f32.mrb[0].mxu0
  %802 = vmatprep.mubr.bf16.mxu0 0
  %803 = vmatmul.mubr.bf16.gmra.mrb[0].mxu0 %v671
  %v804 = vpop.f32.mrb[0].mxu0
  %v805 = vadd.f32 0.0, %v804
  %v806 = vpop.f32.mrb[0].mxu0
  %v807 = vpop.f32.mrb[0].mxu0
  %v808 = vadd.f32 0.0, %v807
  %v809 = vpop.f32.mrb[0].mxu0
  %810 = vmatprep.mubr.bf16.mxu0 0
  %811 = vmatmul.mubr.bf16.gmra.mrb[0].mxu0 %v672
  %v812 = vpop.f32.mrb[0].mxu0
  %v813 = vadd.f32 0.0, %v812
  %v814 = vpop.f32.mrb[0].mxu0
  %v815 = vpop.f32.mrb[0].mxu0
  %v816 = vadd.f32 0.0, %v815
  %v817 = vpop.f32.mrb[0].mxu0
  %818 = vmatprep.mubr.bf16.mxu0 0
  %819 = vmatmul.mubr.bf16.gmra.mrb[0].mxu0 %v673
  %v820 = vpop.f32.mrb[0].mxu0
  %v821 = vadd.f32 0.0, %v820
  %v822 = vpop.f32.mrb[0].mxu0
  %v823 = vpop.f32.mrb[0].mxu0
  %v824 = vadd.f32 0.0, %v823
  %v825 = vpop.f32.mrb[0].mxu0
  %826 = vmatprep.mubr.bf16.mxu0 0
  %827 = vmatmul.mubr.bf16.gmra.mrb[0].mxu0 %v674
  %v828 = vpop.f32.mrb[0].mxu0
  %v829 = vadd.f32 0.0, %v828
  %v830 = vpop.f32.mrb[0].mxu0
  %v831 = vpop.f32.mrb[0].mxu0
  %v832 = vadd.f32 0.0, %v831
  %v833 = vpop.f32.mrb[0].mxu0
  %834 = vmatprep.mubr.bf16.mxu0 0
  %835 = vmatmul.mubr.bf16.gmra.mrb[0].mxu0 %v675
  %v836 = vpop.f32.mrb[0].mxu0
  %v837 = vadd.f32 0.0, %v836
  %v838 = vpop.f32.mrb[0].mxu0
  %v839 = vpop.f32.mrb[0].mxu0
  %v840 = vadd.f32 0.0, %v839
  %v841 = vpop.f32.mrb[0].mxu0
  %842 = vmatprep.mubr.bf16.mxu0 0
  %843 = vmatmul.mubr.bf16.gmra.mrb[0].mxu0 %v676
  %v844 = vpop.f32.mrb[0].mxu0
  %v845 = vadd.f32 0.0, %v844
  %v846 = vpop.f32.mrb[0].mxu0
  %v847 = vpop.f32.mrb[0].mxu0
  %v848 = vadd.f32 0.0, %v847
  %v849 = vpop.f32.mrb[0].mxu0
  %850 = vmatprep.mubr.bf16.mxu0 0
  %851 = vmatmul.mubr.bf16.gmra.mrb[0].mxu0 %v677
  %v852 = vpop.f32.mrb[0].mxu0
  %v853 = vadd.f32 0.0, %v852
  %v854 = vpop.f32.mrb[0].mxu0
  %v855 = vpop.f32.mrb[0].mxu0
  %v856 = vadd.f32 0.0, %v855
  %v857 = vpop.f32.mrb[0].mxu0
  %858 = vmatprep.mubr.bf16.mxu0 0
  %859 = vmatmul.mubr.bf16.gmra.mrb[0].mxu0 %v678
  %v860 = vpop.f32.mrb[0].mxu0
  %v861 = vadd.f32 0.0, %v860
  %v862 = vpop.f32.mrb[0].mxu0
  %v863 = vpop.f32.mrb[0].mxu0
  %v864 = vadd.f32 0.0, %v863
  %v865 = vpop.f32.mrb[0].mxu0
  %866 = vmatprep.mubr.bf16.mxu0 0
  %867 = vmatmul.mubr.bf16.gmra.mrb[0].mxu0 %v679
  %v868 = vpop.f32.mrb[0].mxu0
  %v869 = vadd.f32 0.0, %v868
  %v870 = vpop.f32.mrb[0].mxu0
  %v871 = vpop.f32.mrb[0].mxu0
  %v872 = vadd.f32 0.0, %v871
  %v873 = vpop.f32.mrb[0].mxu0
  %874 = vmatprep.mubr.bf16.mxu0 0
  %875 = vmatmul.mubr.bf16.gmra.mrb[0].mxu0 %v680
  %v876 = vpop.f32.mrb[0].mxu0
  %v877 = vadd.f32 0.0, %v876
  %v878 = vpop.f32.mrb[0].mxu0
  %v879 = vpop.f32.mrb[0].mxu0
  %v880 = vadd.f32 0.0, %v879
  %v881 = vpop.f32.mrb[0].mxu0
  %882 = vmatprep.mubr.bf16.mxu0 0
  %883 = vmatmul.mubr.bf16.gmra.mrb[0].mxu0 %v681
  %v884 = vpop.f32.mrb[0].mxu0
  %v885 = vadd.f32 0.0, %v884
  %v886 = vpop.f32.mrb[0].mxu0
  %v887 = vpop.f32.mrb[0].mxu0
  %v888 = vadd.f32 0.0, %v887
  %v889 = vpop.f32.mrb[0].mxu0
  %890 = vmatprep.mubr.bf16.mxu0 0
  %891 = vmatmul.mubr.bf16.gmra.mrb[0].mxu0 %v682
  %v892 = vpop.f32.mrb[0].mxu0
  %v893 = vadd.f32 0.0, %v892
  %v894 = vpop.f32.mrb[0].mxu0
  %v895 = vpop.f32.mrb[0].mxu0
  %v896 = vadd.f32 0.0, %v895
  %v897 = vpop.f32.mrb[0].mxu0
  %898 = vmatprep.mubr.bf16.mxu0 0
  %899 = vmatmul.mubr.bf16.gmra.mrb[0].mxu0 %v683
  %v900 = vpop.f32.mrb[0].mxu0
  %v901 = vadd.f32 0.0, %v900
  %v902 = vpop.f32.mrb[0].mxu0
  %v903 = vpop.f32.mrb[0].mxu0
  %v904 = vadd.f32 0.0, %v903
  %v905 = vpop.f32.mrb[0].mxu0
  %906 = vmatprep.mubr.bf16.mxu0 0
  %907 = vmatmul.mubr.bf16.gmra.mrb[0].mxu0 %v684
  %v908 = vpop.f32.mrb[0].mxu0
  %v909 = vadd.f32 0.0, %v908
  %v910 = vpop.f32.mrb[0].mxu0
  %v911 = vpop.f32.mrb[0].mxu0
  %v912 = vadd.f32 0.0, %v911
  %v913 = vpop.f32.mrb[0].mxu0
  %914 = vmatprep.mubr.bf16.mxu0 0
  %915 = vmatmul.mubr.bf16.gmra.mrb[0].mxu0 %v685
  %v916 = vpop.f32.mrb[0].mxu0
  %v917 = vadd.f32 0.0, %v916
  %v918 = vpop.f32.mrb[0].mxu0
  %v919 = vpop.f32.mrb[0].mxu0
  %v920 = vadd.f32 0.0, %v919
  %v921 = vpop.f32.mrb[0].mxu0
  %922 = vmatprep.mubr.bf16.mxu0 0
  %923 = vmatmul.mubr.bf16.gmra.mrb[0].mxu0 %v686
  %v924 = vpop.f32.mrb[0].mxu0
  %v925 = vadd.f32 0.0, %v924
  %v926 = vpop.f32.mrb[0].mxu0
  %v927 = vpop.f32.mrb[0].mxu0
  %v928 = vadd.f32 0.0, %v927
  %v929 = vpop.f32.mrb[0].mxu0
  %930 = vmatprep.mubr.bf16.mxu0 0
  %931 = vmatmul.mubr.bf16.gmra.mrb[0].mxu0 %v687
  %v932 = vpop.f32.mrb[0].mxu0
  %v933 = vadd.f32 0.0, %v932
  %v934 = vpop.f32.mrb[0].mxu0
  %v935 = vpop.f32.mrb[0].mxu0
  %v936 = vadd.f32 0.0, %v935
  %v937 = vpop.f32.mrb[0].mxu0
  %938 = vmatprep.mubr.bf16.mxu0 0
  %939 = vmatmul.mubr.bf16.gmra.mrb[0].mxu0 %v688
  %v940 = vpop.f32.mrb[0].mxu0
  %v941 = vadd.f32 0.0, %v940
  %v942 = vpop.f32.mrb[0].mxu0
  %v943 = vpop.f32.mrb[0].mxu0
  %v944 = vpop.f32.mrb[0].mxu0
  %945 = vdwg.mxu0
  %v946 = vld [vmem:[%s2] sm:$0xf]
  %v947 = vld [vmem:[%s2 + $0x4] sm:$0xf]
  %v948 = vld [vmem:[%s2 + $0x8] sm:$0xf]
  %v949 = vld [vmem:[%s2 + $0xc] sm:$0xf]
  %v950 = vld [vmem:[%s2 + $0x10] sm:$0xf]
  %v951 = vld [vmem:[%s2 + $0x14] sm:$0xf]
  %v952 = vld [vmem:[%s2 + $0x18] sm:$0xf]
  %v953 = vld [vmem:[%s2 + $0x1c] sm:$0xf]
  %v954 = vld [vmem:[%s2 + $0x20] sm:$0xf]
  %v955 = vld [vmem:[%s2 + $0x24] sm:$0xf]
  %v956 = vld [vmem:[%s2 + $0x28] sm:$0xf]
  %v957 = vld [vmem:[%s2 + $0x2c] sm:$0xf]
  %v958 = vld [vmem:[%s2 + $0x30] sm:$0xf]
  %v959 = vld [vmem:[%s2 + $0x34] sm:$0xf]
  %v960 = vld [vmem:[%s2 + $0x38] sm:$0xf]
  %v961 = vld [vmem:[%s2 + $0x3c] sm:$0xf]
  %v962 = vld [vmem:[%s2 + $0x40] sm:$0xf]
  %v963 = vld [vmem:[%s2 + $0x44] sm:$0xf]
  %v964 = vld [vmem:[%s2 + $0x48] sm:$0xf]
  %v965 = vld [vmem:[%s2 + $0x4c] sm:$0xf]
  %v966 = vld [vmem:[%s2 + $0x50] sm:$0xf]
  %v967 = vld [vmem:[%s2 + $0x54] sm:$0xf]
  %v968 = vld [vmem:[%s2 + $0x58] sm:$0xf]
  %v969 = vld [vmem:[%s2 + $0x5c] sm:$0xf]
  %v970 = vld [vmem:[%s2 + $0x60] sm:$0xf]
  %v971 = vld [vmem:[%s2 + $0x64] sm:$0xf]
  %v972 = vld [vmem:[%s2 + $0x68] sm:$0xf]
  %v973 = vld [vmem:[%s2 + $0x6c] sm:$0xf]
  %v974 = vld [vmem:[%s2 + $0x70] sm:$0xf]
  %v975 = vld [vmem:[%s2 + $0x74] sm:$0xf]
  %v976 = vld [vmem:[%s2 + $0x78] sm:$0xf]
  %v977 = vld [vmem:[%s2 + $0x7c] sm:$0xf]
  %v978 = vld [vmem:[%s2 + $0x80] sm:$0xf]
  %v979 = vld [vmem:[%s2 + $0x84] sm:$0xf]
  %v980 = vld [vmem:[%s2 + $0x88] sm:$0xf]
  %v981 = vld [vmem:[%s2 + $0x8c] sm:$0xf]
  %v982 = vld [vmem:[%s2 + $0x90] sm:$0xf]
  %v983 = vld [vmem:[%s2 + $0x94] sm:$0xf]
  %v984 = vld [vmem:[%s2 + $0x98] sm:$0xf]
  %v985 = vld [vmem:[%s2 + $0x9c] sm:$0xf]
  %v986 = vld [vmem:[%s2 + $0xa0] sm:$0xf]
  %v987 = vld [vmem:[%s2 + $0xa4] sm:$0xf]
  %v988 = vld [vmem:[%s2 + $0xa8] sm:$0xf]
  %v989 = vld [vmem:[%s2 + $0xac] sm:$0xf]
  %v990 = vld [vmem:[%s2 + $0xb0] sm:$0xf]
  %v991 = vld [vmem:[%s2 + $0xb4] sm:$0xf]
  %v992 = vld [vmem:[%s2 + $0xb8] sm:$0xf]
  %v993 = vld [vmem:[%s2 + $0xbc] sm:$0xf]
  %v994 = vld [vmem:[%s2 + $0xc0] sm:$0xf]
  %v1044 = vunpack.c.l.b16 %v946
  %v1045 = vunpack.c.l.b16 %v947
  %v1046 = vunpack.c.l.b16 %v948
  %v1047 = vunpack.c.l.b16 %v949
  %v1048 = vunpack.c.l.b16 %v950
  %v1049 = vunpack.c.l.b16 %v951
  %v1050 = vunpack.c.l.b16 %v952
  %v1051 = vunpack.c.l.b16 %v953
  %v1052 = vunpack.c.l.b16 %v954
  %v1053 = vunpack.c.l.b16 %v955
  %v1054 = vunpack.c.l.b16 %v956
  %v1055 = vunpack.c.l.b16 %v957
  %v1056 = vunpack.c.l.b16 %v958
  %v1057 = vunpack.c.l.b16 %v959
  %v1058 = vunpack.c.l.b16 %v960
  %v1059 = vunpack.c.l.b16 %v961
  %v1060 = vunpack.c.l.b16 %v962
  %v1061 = vunpack.c.l.b16 %v963
  %v1062 = vunpack.c.l.b16 %v964
  %v1063 = vunpack.c.l.b16 %v965
  %v1064 = vunpack.c.l.b16 %v966
  %v1065 = vunpack.c.l.b16 %v967
  %v1066 = vunpack.c.l.b16 %v968
  %v1067 = vunpack.c.l.b16 %v969
  %v1068 = vunpack.c.l.b16 %v970
  %v1069 = vunpack.c.l.b16 %v971
  %v1070 = vunpack.c.l.b16 %v972
  %v1071 = vunpack.c.l.b16 %v973
  %v1072 = vunpack.c.l.b16 %v974
  %v1073 = vunpack.c.l.b16 %v975
  %v1074 = vunpack.c.l.b16 %v976
  %v1075 = vunpack.c.l.b16 %v977
  %v1076 = vunpack.c.l.b16 %v978
  %v1077 = vunpack.c.l.b16 %v979
  %v1078 = vunpack.c.l.b16 %v980
  %v1079 = vunpack.c.l.b16 %v981
  %v1080 = vunpack.c.l.b16 %v982
  %v1081 = vunpack.c.l.b16 %v983
  %v1082 = vunpack.c.l.b16 %v984
  %v1083 = vunpack.c.l.b16 %v985
  %v1084 = vunpack.c.l.b16 %v986
  %v1085 = vunpack.c.l.b16 %v987
  %v1086 = vunpack.c.l.b16 %v988
  %v1087 = vunpack.c.l.b16 %v989
  %v1088 = vunpack.c.l.b16 %v990
  %v1089 = vunpack.c.l.b16 %v991
  %v1090 = vunpack.c.l.b16 %v992
  %v1091 = vunpack.c.l.b16 %v993
  %v1092 = vunpack.c.l.b16 %v994
  %v1093 = vpack.c.b16 %v1045, %v1044
  %v1094 = vpack.c.b16 %v1047, %v1046
  %v1095 = vpack.c.b16 %v1049, %v1048
  %v1096 = vpack.c.b16 %v1051, %v1050
  %v1097 = vpack.c.b16 %v1053, %v1052
  %v1098 = vpack.c.b16 %v1055, %v1054
  %v1099 = vpack.c.b16 %v1057, %v1056
  %v1100 = vpack.c.b16 %v1059, %v1058
  %v1101 = vpack.c.b16 %v1061, %v1060
  %v1102 = vpack.c.b16 %v1063, %v1062
  %v1103 = vpack.c.b16 %v1065, %v1064
  %v1104 = vpack.c.b16 %v1067, %v1066
  %v1105 = vpack.c.b16 %v1069, %v1068
  %v1106 = vpack.c.b16 %v1071, %v1070
  %v1107 = vpack.c.b16 %v1073, %v1072
  %v1108 = vpack.c.b16 %v1075, %v1074
  %v1109 = vpack.c.b16 %v1077, %v1076
  %v1110 = vpack.c.b16 %v1079, %v1078
  %v1111 = vpack.c.b16 %v1081, %v1080
  %v1112 = vpack.c.b16 %v1083, %v1082
  %v1113 = vpack.c.b16 %v1085, %v1084
  %v1114 = vpack.c.b16 %v1087, %v1086
  %v1115 = vpack.c.b16 %v1089, %v1088
  %v1116 = vpack.c.b16 %v1091, %v1090
  %v1117 = vpack.c.b16 %v1092, %v1092
  %1143 = vmatprep.subr.bf16.mxu0 0
  %1144 = vmatpush1.bf16.msra.mxu0 %v269
  %1145 = vmatprep.subr.bf16.mxu0 0
  %1146 = vmatpush1.bf16.msra.mxu0 %v270
  %1147 = vmatprep.subr.bf16.mxu0 0
  %1148 = vmatpush1.bf16.msra.mxu0 %v271
  %1149 = vmatprep.subr.bf16.mxu0 0
  %1150 = vmatpush1.bf16.msra.mxu0 %v272
  %1151 = vmatprep.subr.bf16.mxu0 0
  %1152 = vmatpush1.bf16.msra.mxu0 %v273
  %1153 = vmatprep.subr.bf16.mxu0 0
  %1154 = vmatpush1.bf16.msra.mxu0 %v274
  %1155 = vmatprep.subr.bf16.mxu0 0
  %1156 = vmatpush1.bf16.msra.mxu0 %v275
  %1157 = vmatprep.subr.bf16.mxu0 0
  %1158 = vmatpush1.bf16.msra.mxu0 %v276
  %1159 = vmatprep.subr.bf16.mxu0 0
  %1160 = vmatpush1.bf16.msra.mxu0 0
  %1161 = vmatprep.subr.bf16.mxu0 0
  %1162 = vmatpush1.bf16.msra.mxu0 0
  %1163 = vmatprep.subr.bf16.mxu0 0
  %1164 = vmatpush1.bf16.msra.mxu0 0
  %1165 = vmatprep.subr.bf16.mxu0 0
  %1166 = vmatpush1.bf16.msra.mxu0 0
  %1167 = vmatprep.subr.bf16.mxu0 0
  %1168 = vmatpush1.bf16.msra.mxu0 0
  %1169 = vmatprep.subr.bf16.mxu0 0
  %1170 = vmatpush1.bf16.msra.mxu0 0
  %1171 = vmatprep.subr.bf16.mxu0 0
  %1172 = vmatpush1.bf16.msra.mxu0 0
  %1173 = vmatprep.subr.bf16.mxu0 0
  %1174 = vmatpush1.bf16.msra.mxu0 0
  %1175 = vmatprep.mubr.bf16.mxu0 0
  %1176 = vmatmul.mubr.bf16.gmra.mrb[0].mxu0 %v1093
  %v1177 = vpop.f32.mrb[0].mxu0
  %v1178 = vadd.f32 0.0, %v1177
  %v1179 = vpop.f32.mrb[0].mxu0
  %v1180 = vpop.f32.mrb[0].mxu0
  %v1181 = vadd.f32 0.0, %v1180
  %v1182 = vpop.f32.mrb[0].mxu0
  %1183 = vmatprep.mubr.bf16.mxu0 0
  %1184 = vmatmul.mubr.bf16.gmra.mrb[0].mxu0 %v1094
  %v1185 = vpop.f32.mrb[0].mxu0
  %v1186 = vadd.f32 0.0, %v1185
  %v1187 = vpop.f32.mrb[0].mxu0
  %v1188 = vpop.f32.mrb[0].mxu0
  %v1189 = vadd.f32 0.0, %v1188
  %v1190 = vpop.f32.mrb[0].mxu0
  %1191 = vmatprep.mubr.bf16.mxu0 0
  %1192 = vmatmul.mubr.bf16.gmra.mrb[0].mxu0 %v1095
  %v1193 = vpop.f32.mrb[0].mxu0
  %v1194 = vadd.f32 0.0, %v1193
  %v1195 = vpop.f32.mrb[0].mxu0
  %v1196 = vpop.f32.mrb[0].mxu0
  %v1197 = vadd.f32 0.0, %v1196
  %v1198 = vpop.f32.mrb[0].mxu0
  %1199 = vmatprep.mubr.bf16.mxu0 0
  %1200 = vmatmul.mubr.bf16.gmra.mrb[0].mxu0 %v1096
  %v1201 = vpop.f32.mrb[0].mxu0
  %v1202 = vadd.f32 0.0, %v1201
  %v1203 = vpop.f32.mrb[0].mxu0
  %v1204 = vpop.f32.mrb[0].mxu0
  %v1205 = vadd.f32 0.0, %v1204
  %v1206 = vpop.f32.mrb[0].mxu0
  %1207 = vmatprep.mubr.bf16.mxu0 0
  %1208 = vmatmul.mubr.bf16.gmra.mrb[0].mxu0 %v1097
  %v1209 = vpop.f32.mrb[0].mxu0
  %v1210 = vadd.f32 0.0, %v1209
  %v1211 = vpop.f32.mrb[0].mxu0
  %v1212 = vpop.f32.mrb[0].mxu0
  %v1213 = vadd.f32 0.0, %v1212
  %v1214 = vpop.f32.mrb[0].mxu0
  %1215 = vmatprep.mubr.bf16.mxu0 0
  %1216 = vmatmul.mubr.bf16.gmra.mrb[0].mxu0 %v1098
  %v1217 = vpop.f32.mrb[0].mxu0
  %v1218 = vadd.f32 0.0, %v1217
  %v1219 = vpop.f32.mrb[0].mxu0
  %v1220 = vpop.f32.mrb[0].mxu0
  %v1221 = vadd.f32 0.0, %v1220
  %v1222 = vpop.f32.mrb[0].mxu0
  %1223 = vmatprep.mubr.bf16.mxu0 0
  %1224 = vmatmul.mubr.bf16.gmra.mrb[0].mxu0 %v1099
  %v1225 = vpop.f32.mrb[0].mxu0
  %v1226 = vadd.f32 0.0, %v1225
  %v1227 = vpop.f32.mrb[0].mxu0
  %v1228 = vpop.f32.mrb[0].mxu0
  %v1229 = vadd.f32 0.0, %v1228
  %v1230 = vpop.f32.mrb[0].mxu0
  %1231 = vmatprep.mubr.bf16.mxu0 0
  %1232 = vmatmul.mubr.bf16.gmra.mrb[0].mxu0 %v1100
  %v1233 = vpop.f32.mrb[0].mxu0
  %v1234 = vadd.f32 0.0, %v1233
  %v1235 = vpop.f32.mrb[0].mxu0
  %v1236 = vpop.f32.mrb[0].mxu0
  %v1237 = vadd.f32 0.0, %v1236
  %v1238 = vpop.f32.mrb[0].mxu0
  %1239 = vmatprep.mubr.bf16.mxu0 0
  %1240 = vmatmul.mubr.bf16.gmra.mrb[0].mxu0 %v1101
  %v1241 = vpop.f32.mrb[0].mxu0
  %v1242 = vadd.f32 0.0, %v1241
  %v1243 = vpop.f32.mrb[0].mxu0
  %v1244 = vpop.f32.mrb[0].mxu0
  %v1245 = vadd.f32 0.0, %v1244
  %v1246 = vpop.f32.mrb[0].mxu0
  %1247 = vmatprep.mubr.bf16.mxu0 0
  %1248 = vmatmul.mubr.bf16.gmra.mrb[0].mxu0 %v1102
  %v1249 = vpop.f32.mrb[0].mxu0
  %v1250 = vadd.f32 0.0, %v1249
  %v1251 = vpop.f32.mrb[0].mxu0
  %v1252 = vpop.f32.mrb[0].mxu0
  %v1253 = vadd.f32 0.0, %v1252
  %v1254 = vpop.f32.mrb[0].mxu0
  %1255 = vmatprep.mubr.bf16.mxu0 0
  %1256 = vmatmul.mubr.bf16.gmra.mrb[0].mxu0 %v1103
  %v1257 = vpop.f32.mrb[0].mxu0
  %v1258 = vadd.f32 0.0, %v1257
  %v1259 = vpop.f32.mrb[0].mxu0
  %v1260 = vpop.f32.mrb[0].mxu0
  %v1261 = vadd.f32 0.0, %v1260
  %v1262 = vpop.f32.mrb[0].mxu0
  %1263 = vmatprep.mubr.bf16.mxu0 0
  %1264 = vmatmul.mubr.bf16.gmra.mrb[0].mxu0 %v1104
  %v1265 = vpop.f32.mrb[0].mxu0
  %v1266 = vadd.f32 0.0, %v1265
  %v1267 = vpop.f32.mrb[0].mxu0
  %v1268 = vpop.f32.mrb[0].mxu0
  %v1269 = vadd.f32 0.0, %v1268
  %v1270 = vpop.f32.mrb[0].mxu0
  %1271 = vmatprep.mubr.bf16.mxu0 0
  %1272 = vmatmul.mubr.bf16.gmra.mrb[0].mxu0 %v1105
  %v1273 = vpop.f32.mrb[0].mxu0
  %v1274 = vadd.f32 0.0, %v1273
  %v1275 = vpop.f32.mrb[0].mxu0
  %v1276 = vpop.f32.mrb[0].mxu0
  %v1277 = vadd.f32 0.0, %v1276
  %v1278 = vpop.f32.mrb[0].mxu0
  %1279 = vmatprep.mubr.bf16.mxu0 0
  %1280 = vmatmul.mubr.bf16.gmra.mrb[0].mxu0 %v1106
  %v1281 = vpop.f32.mrb[0].mxu0
  %v1282 = vadd.f32 0.0, %v1281
  %v1283 = vpop.f32.mrb[0].mxu0
  %v1284 = vpop.f32.mrb[0].mxu0
  %v1285 = vadd.f32 0.0, %v1284
  %v1286 = vpop.f32.mrb[0].mxu0
  %1287 = vmatprep.mubr.bf16.mxu0 0
  %1288 = vmatmul.mubr.bf16.gmra.mrb[0].mxu0 %v1107
  %v1289 = vpop.f32.mrb[0].mxu0
  %v1290 = vadd.f32 0.0, %v1289
  %v1291 = vpop.f32.mrb[0].mxu0
  %v1292 = vpop.f32.mrb[0].mxu0
  %v1293 = vadd.f32 0.0, %v1292
  %v1294 = vpop.f32.mrb[0].mxu0
  %1295 = vmatprep.mubr.bf16.mxu0 0
  %1296 = vmatmul.mubr.bf16.gmra.mrb[0].mxu0 %v1108
  %v1297 = vpop.f32.mrb[0].mxu0
  %v1298 = vadd.f32 0.0, %v1297
  %v1299 = vpop.f32.mrb[0].mxu0
  %v1300 = vpop.f32.mrb[0].mxu0
  %v1301 = vadd.f32 0.0, %v1300
  %v1302 = vpop.f32.mrb[0].mxu0
  %1303 = vmatprep.mubr.bf16.mxu0 0
  %1304 = vmatmul.mubr.bf16.gmra.mrb[0].mxu0 %v1109
  %v1305 = vpop.f32.mrb[0].mxu0
  %v1306 = vadd.f32 0.0, %v1305
  %v1307 = vpop.f32.mrb[0].mxu0
  %v1308 = vpop.f32.mrb[0].mxu0
  %v1309 = vadd.f32 0.0, %v1308
  %v1310 = vpop.f32.mrb[0].mxu0
  %1311 = vmatprep.mubr.bf16.mxu0 0
  %1312 = vmatmul.mubr.bf16.gmra.mrb[0].mxu0 %v1110
  %v1313 = vpop.f32.mrb[0].mxu0
  %v1314 = vadd.f32 0.0, %v1313
  %v1315 = vpop.f32.mrb[0].mxu0
  %v1316 = vpop.f32.mrb[0].mxu0
  %v1317 = vadd.f32 0.0, %v1316
  %v1318 = vpop.f32.mrb[0].mxu0
  %1319 = vmatprep.mubr.bf16.mxu0 0
  %1320 = vmatmul.mubr.bf16.gmra.mrb[0].mxu0 %v1111
  %v1321 = vpop.f32.mrb[0].mxu0
  %v1322 = vadd.f32 0.0, %v1321
  %v1323 = vpop.f32.mrb[0].mxu0
  %v1324 = vpop.f32.mrb[0].mxu0
  %v1325 = vadd.f32 0.0, %v1324
  %v1326 = vpop.f32.mrb[0].mxu0
  %1327 = vmatprep.mubr.bf16.mxu0 0
  %1328 = vmatmul.mubr.bf16.gmra.mrb[0].mxu0 %v1112
  %v1329 = vpop.f32.mrb[0].mxu0
  %v1330 = vadd.f32 0.0, %v1329
  %v1331 = vpop.f32.mrb[0].mxu0
  %v1332 = vpop.f32.mrb[0].mxu0
  %v1333 = vadd.f32 0.0, %v1332
  %v1334 = vpop.f32.mrb[0].mxu0
  %1335 = vmatprep.mubr.bf16.mxu0 0
  %1336 = vmatmul.mubr.bf16.gmra.mrb[0].mxu0 %v1113
  %v1337 = vpop.f32.mrb[0].mxu0
  %v1338 = vadd.f32 0.0, %v1337
  %v1339 = vpop.f32.mrb[0].mxu0
  %v1340 = vpop.f32.mrb[0].mxu0
  %v1341 = vadd.f32 0.0, %v1340
  %v1342 = vpop.f32.mrb[0].mxu0
  %1343 = vmatprep.mubr.bf16.mxu0 0
  %1344 = vmatmul.mubr.bf16.gmra.mrb[0].mxu0 %v1114
  %v1345 = vpop.f32.mrb[0].mxu0
  %v1346 = vadd.f32 0.0, %v1345
  %v1347 = vpop.f32.mrb[0].mxu0
  %v1348 = vpop.f32.mrb[0].mxu0
  %v1349 = vadd.f32 0.0, %v1348
  %v1350 = vpop.f32.mrb[0].mxu0
  %1351 = vmatprep.mubr.bf16.mxu0 0
  %1352 = vmatmul.mubr.bf16.gmra.mrb[0].mxu0 %v1115
  %v1353 = vpop.f32.mrb[0].mxu0
  %v1354 = vadd.f32 0.0, %v1353
  %v1355 = vpop.f32.mrb[0].mxu0
  %v1356 = vpop.f32.mrb[0].mxu0
  %v1357 = vadd.f32 0.0, %v1356
  %v1358 = vpop.f32.mrb[0].mxu0
  %1359 = vmatprep.mubr.bf16.mxu0 0
  %1360 = vmatmul.mubr.bf16.gmra.mrb[0].mxu0 %v1116
  %v1361 = vpop.f32.mrb[0].mxu0
  %v1362 = vadd.f32 0.0, %v1361
  %v1363 = vpop.f32.mrb[0].mxu0
  %v1364 = vpop.f32.mrb[0].mxu0
  %v1365 = vadd.f32 0.0, %v1364
  %v1366 = vpop.f32.mrb[0].mxu0
  %1367 = vmatprep.mubr.bf16.mxu0 0
  %1368 = vmatmul.mubr.bf16.gmra.mrb[0].mxu0 %v1117
  %v1369 = vpop.f32.mrb[0].mxu0
  %v1370 = vadd.f32 0.0, %v1369
  %v1371 = vpop.f32.mrb[0].mxu0
  %v1372 = vpop.f32.mrb[0].mxu0
  %v1373 = vpop.f32.mrb[0].mxu0
  %1374 = vdwg.mxu0
  %v1375 = vld [vmem:[%s3] sm:$0xf]
  %v1376 = vld [vmem:[%s3 + $0x4] sm:$0xf]
  %v1377 = vld [vmem:[%s3 + $0x8] sm:$0xf]
  %v1378 = vld [vmem:[%s3 + $0xc] sm:$0xf]
  %v1379 = vld [vmem:[%s3 + $0x10] sm:$0xf]
  %v1380 = vld [vmem:[%s3 + $0x14] sm:$0xf]
  %v1381 = vld [vmem:[%s3 + $0x18] sm:$0xf]
  %v1382 = vld [vmem:[%s3 + $0x1c] sm:$0xf]
  %v1383 = vld [vmem:[%s3 + $0x20] sm:$0xf]
  %v1384 = vld [vmem:[%s3 + $0x24] sm:$0xf]
  %v1385 = vld [vmem:[%s3 + $0x28] sm:$0xf]
  %v1386 = vld [vmem:[%s3 + $0x2c] sm:$0xf]
  %v1387 = vld [vmem:[%s3 + $0x30] sm:$0xf]
  %v1388 = vld [vmem:[%s3 + $0x34] sm:$0xf]
  %v1389 = vld [vmem:[%s3 + $0x38] sm:$0xf]
  %v1390 = vld [vmem:[%s3 + $0x3c] sm:$0xf]
  %v1391 = vld [vmem:[%s3 + $0x40] sm:$0xf]
  %v1392 = vld [vmem:[%s3 + $0x44] sm:$0xf]
  %v1393 = vld [vmem:[%s3 + $0x48] sm:$0xf]
  %v1394 = vld [vmem:[%s3 + $0x4c] sm:$0xf]
  %v1395 = vld [vmem:[%s3 + $0x50] sm:$0xf]
  %v1396 = vld [vmem:[%s3 + $0x54] sm:$0xf]
  %v1397 = vld [vmem:[%s3 + $0x58] sm:$0xf]
  %v1398 = vld [vmem:[%s3 + $0x5c] sm:$0xf]
  %v1399 = vld [vmem:[%s3 + $0x60] sm:$0xf]
  %v1400 = vld [vmem:[%s3 + $0x64] sm:$0xf]
  %v1401 = vld [vmem:[%s3 + $0x68] sm:$0xf]
  %v1402 = vld [vmem:[%s3 + $0x6c] sm:$0xf]
  %v1403 = vld [vmem:[%s3 + $0x70] sm:$0xf]
  %v1404 = vld [vmem:[%s3 + $0x74] sm:$0xf]
  %v1405 = vld [vmem:[%s3 + $0x78] sm:$0xf]
  %v1406 = vld [vmem:[%s3 + $0x7c] sm:$0xf]
  %v1407 = vld [vmem:[%s3 + $0x80] sm:$0xf]
  %v1408 = vld [vmem:[%s3 + $0x84] sm:$0xf]
  %v1409 = vld [vmem:[%s3 + $0x88] sm:$0xf]
  %v1410 = vld [vmem:[%s3 + $0x8c] sm:$0xf]
  %v1411 = vld [vmem:[%s3 + $0x90] sm:$0xf]
  %v1412 = vld [vmem:[%s3 + $0x94] sm:$0xf]
  %v1413 = vld [vmem:[%s3 + $0x98] sm:$0xf]
  %v1414 = vld [vmem:[%s3 + $0x9c] sm:$0xf]
  %v1415 = vld [vmem:[%s3 + $0xa0] sm:$0xf]
  %v1416 = vld [vmem:[%s3 + $0xa4] sm:$0xf]
  %v1417 = vld [vmem:[%s3 + $0xa8] sm:$0xf]
  %v1418 = vld [vmem:[%s3 + $0xac] sm:$0xf]
  %v1419 = vld [vmem:[%s3 + $0xb0] sm:$0xf]
  %v1420 = vld [vmem:[%s3 + $0xb4] sm:$0xf]
  %v1421 = vld [vmem:[%s3 + $0xb8] sm:$0xf]
  %v1422 = vld [vmem:[%s3 + $0xbc] sm:$0xf]
  %v1423 = vld [vmem:[%s3 + $0xc0] sm:$0xf]
  %v1473 = vunpack.c.l.b16 %v1375
  %v1474 = vunpack.c.l.b16 %v1376
  %v1475 = vunpack.c.l.b16 %v1377
  %v1476 = vunpack.c.l.b16 %v1378
  %v1477 = vunpack.c.l.b16 %v1379
  %v1478 = vunpack.c.l.b16 %v1380
  %v1479 = vunpack.c.l.b16 %v1381
  %v1480 = vunpack.c.l.b16 %v1382
  %v1481 = vunpack.c.l.b16 %v1383
  %v1482 = vunpack.c.l.b16 %v1384
  %v1483 = vunpack.c.l.b16 %v1385
  %v1484 = vunpack.c.l.b16 %v1386
  %v1485 = vunpack.c.l.b16 %v1387
  %v1486 = vunpack.c.l.b16 %v1388
  %v1487 = vunpack.c.l.b16 %v1389
  %v1488 = vunpack.c.l.b16 %v1390
  %v1489 = vunpack.c.l.b16 %v1391
  %v1490 = vunpack.c.l.b16 %v1392
  %v1491 = vunpack.c.l.b16 %v1393
  %v1492 = vunpack.c.l.b16 %v1394
  %v1493 = vunpack.c.l.b16 %v1395
  %v1494 = vunpack.c.l.b16 %v1396
  %v1495 = vunpack.c.l.b16 %v1397
  %v1496 = vunpack.c.l.b16 %v1398
  %v1497 = vunpack.c.l.b16 %v1399
  %v1498 = vunpack.c.l.b16 %v1400
  %v1499 = vunpack.c.l.b16 %v1401
  %v1500 = vunpack.c.l.b16 %v1402
  %v1501 = vunpack.c.l.b16 %v1403
  %v1502 = vunpack.c.l.b16 %v1404
  %v1503 = vunpack.c.l.b16 %v1405
  %v1504 = vunpack.c.l.b16 %v1406
  %v1505 = vunpack.c.l.b16 %v1407
  %v1506 = vunpack.c.l.b16 %v1408
  %v1507 = vunpack.c.l.b16 %v1409
  %v1508 = vunpack.c.l.b16 %v1410
  %v1509 = vunpack.c.l.b16 %v1411
  %v1510 = vunpack.c.l.b16 %v1412
  %v1511 = vunpack.c.l.b16 %v1413
  %v1512 = vunpack.c.l.b16 %v1414
  %v1513 = vunpack.c.l.b16 %v1415
  %v1514 = vunpack.c.l.b16 %v1416
  %v1515 = vunpack.c.l.b16 %v1417
  %v1516 = vunpack.c.l.b16 %v1418
  %v1517 = vunpack.c.l.b16 %v1419
  %v1518 = vunpack.c.l.b16 %v1420
  %v1519 = vunpack.c.l.b16 %v1421
  %v1520 = vunpack.c.l.b16 %v1422
  %v1521 = vunpack.c.l.b16 %v1423
  %v1522 = vpack.c.b16 %v1474, %v1473
  %v1523 = vpack.c.b16 %v1476, %v1475
  %v1524 = vpack.c.b16 %v1478, %v1477
  %v1525 = vpack.c.b16 %v1480, %v1479
  %v1526 = vpack.c.b16 %v1482, %v1481
  %v1527 = vpack.c.b16 %v1484, %v1483
  %v1528 = vpack.c.b16 %v1486, %v1485
  %v1529 = vpack.c.b16 %v1488, %v1487
  %v1530 = vpack.c.b16 %v1490, %v1489
  %v1531 = vpack.c.b16 %v1492, %v1491
  %v1532 = vpack.c.b16 %v1494, %v1493
  %v1533 = vpack.c.b16 %v1496, %v1495
  %v1534 = vpack.c.b16 %v1498, %v1497
  %v1535 = vpack.c.b16 %v1500, %v1499
  %v1536 = vpack.c.b16 %v1502, %v1501
  %v1537 = vpack.c.b16 %v1504, %v1503
  %v1538 = vpack.c.b16 %v1506, %v1505
  %v1539 = vpack.c.b16 %v1508, %v1507
  %v1540 = vpack.c.b16 %v1510, %v1509
  %v1541 = vpack.c.b16 %v1512, %v1511
  %v1542 = vpack.c.b16 %v1514, %v1513
  %v1543 = vpack.c.b16 %v1516, %v1515
  %v1544 = vpack.c.b16 %v1518, %v1517
  %v1545 = vpack.c.b16 %v1520, %v1519
  %v1546 = vpack.c.b16 %v1521, %v1521
  %1572 = vmatprep.subr.bf16.mxu0 0
  %1573 = vmatpush1.bf16.msra.mxu0 %v269
  %1574 = vmatprep.subr.bf16.mxu0 0
  %1575 = vmatpush1.bf16.msra.mxu0 %v270
  %1576 = vmatprep.subr.bf16.mxu0 0
  %1577 = vmatpush1.bf16.msra.mxu0 %v271
  %1578 = vmatprep.subr.bf16.mxu0 0
  %1579 = vmatpush1.bf16.msra.mxu0 %v272
  %1580 = vmatprep.subr.bf16.mxu0 0
  %1581 = vmatpush1.bf16.msra.mxu0 %v273
  %1582 = vmatprep.subr.bf16.mxu0 0
  %1583 = vmatpush1.bf16.msra.mxu0 %v274
  %1584 = vmatprep.subr.bf16.mxu0 0
  %1585 = vmatpush1.bf16.msra.mxu0 %v275
  %1586 = vmatprep.subr.bf16.mxu0 0
  %1587 = vmatpush1.bf16.msra.mxu0 %v276
  %1588 = vmatprep.subr.bf16.mxu0 0
  %1589 = vmatpush1.bf16.msra.mxu0 0
  %1590 = vmatprep.subr.bf16.mxu0 0
  %1591 = vmatpush1.bf16.msra.mxu0 0
  %1592 = vmatprep.subr.bf16.mxu0 0
  %1593 = vmatpush1.bf16.msra.mxu0 0
  %1594 = vmatprep.subr.bf16.mxu0 0
  %1595 = vmatpush1.bf16.msra.mxu0 0
  %1596 = vmatprep.subr.bf16.mxu0 0
  %1597 = vmatpush1.bf16.msra.mxu0 0
  %1598 = vmatprep.subr.bf16.mxu0 0
  %1599 = vmatpush1.bf16.msra.mxu0 0
  %1600 = vmatprep.subr.bf16.mxu0 0
  %1601 = vmatpush1.bf16.msra.mxu0 0
  %1602 = vmatprep.subr.bf16.mxu0 0
  %1603 = vmatpush1.bf16.msra.mxu0 0
  %1604 = vmatprep.mubr.bf16.mxu0 0
  %1605 = vmatmul.mubr.bf16.gmra.mrb[0].mxu0 %v1522
  %v1606 = vpop.f32.mrb[0].mxu0
  %v1607 = vadd.f32 0.0, %v1606
  %v1608 = vpop.f32.mrb[0].mxu0
  %v1609 = vpop.f32.mrb[0].mxu0
  %v1610 = vadd.f32 0.0, %v1609
  %v1611 = vpop.f32.mrb[0].mxu0
  %1612 = vmatprep.mubr.bf16.mxu0 0
  %1613 = vmatmul.mubr.bf16.gmra.mrb[0].mxu0 %v1523
  %v1614 = vpop.f32.mrb[0].mxu0
  %v1615 = vadd.f32 0.0, %v1614
  %v1616 = vpop.f32.mrb[0].mxu0
  %v1617 = vpop.f32.mrb[0].mxu0
  %v1618 = vadd.f32 0.0, %v1617
  %v1619 = vpop.f32.mrb[0].mxu0
  %1620 = vmatprep.mubr.bf16.mxu0 0
  %1621 = vmatmul.mubr.bf16.gmra.mrb[0].mxu0 %v1524
  %v1622 = vpop.f32.mrb[0].mxu0
  %v1623 = vadd.f32 0.0, %v1622
  %v1624 = vpop.f32.mrb[0].mxu0
  %v1625 = vpop.f32.mrb[0].mxu0
  %v1626 = vadd.f32 0.0, %v1625
  %v1627 = vpop.f32.mrb[0].mxu0
  %1628 = vmatprep.mubr.bf16.mxu0 0
  %1629 = vmatmul.mubr.bf16.gmra.mrb[0].mxu0 %v1525
  %v1630 = vpop.f32.mrb[0].mxu0
  %v1631 = vadd.f32 0.0, %v1630
  %v1632 = vpop.f32.mrb[0].mxu0
  %v1633 = vpop.f32.mrb[0].mxu0
  %v1634 = vadd.f32 0.0, %v1633
  %v1635 = vpop.f32.mrb[0].mxu0
  %1636 = vmatprep.mubr.bf16.mxu0 0
  %1637 = vmatmul.mubr.bf16.gmra.mrb[0].mxu0 %v1526
  %v1638 = vpop.f32.mrb[0].mxu0
  %v1639 = vadd.f32 0.0, %v1638
  %v1640 = vpop.f32.mrb[0].mxu0
  %v1641 = vpop.f32.mrb[0].mxu0
  %v1642 = vadd.f32 0.0, %v1641
  %v1643 = vpop.f32.mrb[0].mxu0
  %1644 = vmatprep.mubr.bf16.mxu0 0
  %1645 = vmatmul.mubr.bf16.gmra.mrb[0].mxu0 %v1527
  %v1646 = vpop.f32.mrb[0].mxu0
  %v1647 = vadd.f32 0.0, %v1646
  %v1648 = vpop.f32.mrb[0].mxu0
  %v1649 = vpop.f32.mrb[0].mxu0
  %v1650 = vadd.f32 0.0, %v1649
  %v1651 = vpop.f32.mrb[0].mxu0
  %1652 = vmatprep.mubr.bf16.mxu0 0
  %1653 = vmatmul.mubr.bf16.gmra.mrb[0].mxu0 %v1528
  %v1654 = vpop.f32.mrb[0].mxu0
  %v1655 = vadd.f32 0.0, %v1654
  %v1656 = vpop.f32.mrb[0].mxu0
  %v1657 = vpop.f32.mrb[0].mxu0
  %v1658 = vadd.f32 0.0, %v1657
  %v1659 = vpop.f32.mrb[0].mxu0
  %1660 = vmatprep.mubr.bf16.mxu0 0
  %1661 = vmatmul.mubr.bf16.gmra.mrb[0].mxu0 %v1529
  %v1662 = vpop.f32.mrb[0].mxu0
  %v1663 = vadd.f32 0.0, %v1662
  %v1664 = vpop.f32.mrb[0].mxu0
  %v1665 = vpop.f32.mrb[0].mxu0
  %v1666 = vadd.f32 0.0, %v1665
  %v1667 = vpop.f32.mrb[0].mxu0
  %1668 = vmatprep.mubr.bf16.mxu0 0
  %1669 = vmatmul.mubr.bf16.gmra.mrb[0].mxu0 %v1530
  %v1670 = vpop.f32.mrb[0].mxu0
  %v1671 = vadd.f32 0.0, %v1670
  %v1672 = vpop.f32.mrb[0].mxu0
  %v1673 = vpop.f32.mrb[0].mxu0
  %v1674 = vadd.f32 0.0, %v1673
  %v1675 = vpop.f32.mrb[0].mxu0
  %1676 = vmatprep.mubr.bf16.mxu0 0
  %1677 = vmatmul.mubr.bf16.gmra.mrb[0].mxu0 %v1531
  %v1678 = vpop.f32.mrb[0].mxu0
  %v1679 = vadd.f32 0.0, %v1678
  %v1680 = vpop.f32.mrb[0].mxu0
  %v1681 = vpop.f32.mrb[0].mxu0
  %v1682 = vadd.f32 0.0, %v1681
  %v1683 = vpop.f32.mrb[0].mxu0
  %1684 = vmatprep.mubr.bf16.mxu0 0
  %1685 = vmatmul.mubr.bf16.gmra.mrb[0].mxu0 %v1532
  %v1686 = vpop.f32.mrb[0].mxu0
  %v1687 = vadd.f32 0.0, %v1686
  %v1688 = vpop.f32.mrb[0].mxu0
  %v1689 = vpop.f32.mrb[0].mxu0
  %v1690 = vadd.f32 0.0, %v1689
  %v1691 = vpop.f32.mrb[0].mxu0
  %1692 = vmatprep.mubr.bf16.mxu0 0
  %1693 = vmatmul.mubr.bf16.gmra.mrb[0].mxu0 %v1533
  %v1694 = vpop.f32.mrb[0].mxu0
  %v1695 = vadd.f32 0.0, %v1694
  %v1696 = vpop.f32.mrb[0].mxu0
  %v1697 = vpop.f32.mrb[0].mxu0
  %v1698 = vadd.f32 0.0, %v1697
  %v1699 = vpop.f32.mrb[0].mxu0
  %1700 = vmatprep.mubr.bf16.mxu0 0
  %1701 = vmatmul.mubr.bf16.gmra.mrb[0].mxu0 %v1534
  %v1702 = vpop.f32.mrb[0].mxu0
  %v1703 = vadd.f32 0.0, %v1702
  %v1704 = vpop.f32.mrb[0].mxu0
  %v1705 = vpop.f32.mrb[0].mxu0
  %v1706 = vadd.f32 0.0, %v1705
  %v1707 = vpop.f32.mrb[0].mxu0
  %1708 = vmatprep.mubr.bf16.mxu0 0
  %1709 = vmatmul.mubr.bf16.gmra.mrb[0].mxu0 %v1535
  %v1710 = vpop.f32.mrb[0].mxu0
  %v1711 = vadd.f32 0.0, %v1710
  %v1712 = vpop.f32.mrb[0].mxu0
  %v1713 = vpop.f32.mrb[0].mxu0
  %v1714 = vadd.f32 0.0, %v1713
  %v1715 = vpop.f32.mrb[0].mxu0
  %1716 = vmatprep.mubr.bf16.mxu0 0
  %1717 = vmatmul.mubr.bf16.gmra.mrb[0].mxu0 %v1536
  %v1718 = vpop.f32.mrb[0].mxu0
  %v1719 = vadd.f32 0.0, %v1718
  %v1720 = vpop.f32.mrb[0].mxu0
  %v1721 = vpop.f32.mrb[0].mxu0
  %v1722 = vadd.f32 0.0, %v1721
  %v1723 = vpop.f32.mrb[0].mxu0
  %1724 = vmatprep.mubr.bf16.mxu0 0
  %1725 = vmatmul.mubr.bf16.gmra.mrb[0].mxu0 %v1537
  %v1726 = vpop.f32.mrb[0].mxu0
  %v1727 = vadd.f32 0.0, %v1726
  %v1728 = vpop.f32.mrb[0].mxu0
  %v1729 = vpop.f32.mrb[0].mxu0
  %v1730 = vadd.f32 0.0, %v1729
  %v1731 = vpop.f32.mrb[0].mxu0
  %1732 = vmatprep.mubr.bf16.mxu0 0
  %1733 = vmatmul.mubr.bf16.gmra.mrb[0].mxu0 %v1538
  %v1734 = vpop.f32.mrb[0].mxu0
  %v1735 = vadd.f32 0.0, %v1734
  %v1736 = vpop.f32.mrb[0].mxu0
  %v1737 = vpop.f32.mrb[0].mxu0
  %v1738 = vadd.f32 0.0, %v1737
  %v1739 = vpop.f32.mrb[0].mxu0
  %1740 = vmatprep.mubr.bf16.mxu0 0
  %1741 = vmatmul.mubr.bf16.gmra.mrb[0].mxu0 %v1539
  %v1742 = vpop.f32.mrb[0].mxu0
  %v1743 = vadd.f32 0.0, %v1742
  %v1744 = vpop.f32.mrb[0].mxu0
  %v1745 = vpop.f32.mrb[0].mxu0
  %v1746 = vadd.f32 0.0, %v1745
  %v1747 = vpop.f32.mrb[0].mxu0
  %1748 = vmatprep.mubr.bf16.mxu0 0
  %1749 = vmatmul.mubr.bf16.gmra.mrb[0].mxu0 %v1540
  %v1750 = vpop.f32.mrb[0].mxu0
  %v1751 = vadd.f32 0.0, %v1750
  %v1752 = vpop.f32.mrb[0].mxu0
  %v1753 = vpop.f32.mrb[0].mxu0
  %v1754 = vadd.f32 0.0, %v1753
  %v1755 = vpop.f32.mrb[0].mxu0
  %1756 = vmatprep.mubr.bf16.mxu0 0
  %1757 = vmatmul.mubr.bf16.gmra.mrb[0].mxu0 %v1541
  %v1758 = vpop.f32.mrb[0].mxu0
  %v1759 = vadd.f32 0.0, %v1758
  %v1760 = vpop.f32.mrb[0].mxu0
  %v1761 = vpop.f32.mrb[0].mxu0
  %v1762 = vadd.f32 0.0, %v1761
  %v1763 = vpop.f32.mrb[0].mxu0
  %1764 = vmatprep.mubr.bf16.mxu0 0
  %1765 = vmatmul.mubr.bf16.gmra.mrb[0].mxu0 %v1542
  %v1766 = vpop.f32.mrb[0].mxu0
  %v1767 = vadd.f32 0.0, %v1766
  %v1768 = vpop.f32.mrb[0].mxu0
  %v1769 = vpop.f32.mrb[0].mxu0
  %v1770 = vadd.f32 0.0, %v1769
  %v1771 = vpop.f32.mrb[0].mxu0
  %1772 = vmatprep.mubr.bf16.mxu0 0
  %1773 = vmatmul.mubr.bf16.gmra.mrb[0].mxu0 %v1543
  %v1774 = vpop.f32.mrb[0].mxu0
  %v1775 = vadd.f32 0.0, %v1774
  %v1776 = vpop.f32.mrb[0].mxu0
  %v1777 = vpop.f32.mrb[0].mxu0
  %v1778 = vadd.f32 0.0, %v1777
  %v1779 = vpop.f32.mrb[0].mxu0
  %1780 = vmatprep.mubr.bf16.mxu0 0
  %1781 = vmatmul.mubr.bf16.gmra.mrb[0].mxu0 %v1544
  %v1782 = vpop.f32.mrb[0].mxu0
  %v1783 = vadd.f32 0.0, %v1782
  %v1784 = vpop.f32.mrb[0].mxu0
  %v1785 = vpop.f32.mrb[0].mxu0
  %v1786 = vadd.f32 0.0, %v1785
  %v1787 = vpop.f32.mrb[0].mxu0
  %1788 = vmatprep.mubr.bf16.mxu0 0
  %1789 = vmatmul.mubr.bf16.gmra.mrb[0].mxu0 %v1545
  %v1790 = vpop.f32.mrb[0].mxu0
  %v1791 = vadd.f32 0.0, %v1790
  %v1792 = vpop.f32.mrb[0].mxu0
  %v1793 = vpop.f32.mrb[0].mxu0
  %v1794 = vadd.f32 0.0, %v1793
  %v1795 = vpop.f32.mrb[0].mxu0
  %1796 = vmatprep.mubr.bf16.mxu0 0
  %1797 = vmatmul.mubr.bf16.gmra.mrb[0].mxu0 %v1546
  %v1798 = vpop.f32.mrb[0].mxu0
  %v1799 = vadd.f32 0.0, %v1798
  %v1800 = vpop.f32.mrb[0].mxu0
  %v1801 = vpop.f32.mrb[0].mxu0
  %v1802 = vpop.f32.mrb[0].mxu0
  %1803 = vdwg.mxu0
  %v1804 = vmax.f32 %v320, %v749
  %v1805 = vmax.f32 %v323, %v752
  %v1806 = vmax.f32 %v328, %v757
  %v1807 = vmax.f32 %v331, %v760
  %v1808 = vmax.f32 %v336, %v765
  %v1809 = vmax.f32 %v339, %v768
  %v1810 = vmax.f32 %v344, %v773
  %v1811 = vmax.f32 %v347, %v776
  %v1812 = vmax.f32 %v352, %v781
  %v1813 = vmax.f32 %v355, %v784
  %v1814 = vmax.f32 %v360, %v789
  %v1815 = vmax.f32 %v363, %v792
  %v1816 = vmax.f32 %v368, %v797
  %v1817 = vmax.f32 %v371, %v800
  %v1818 = vmax.f32 %v376, %v805
  %v1819 = vmax.f32 %v379, %v808
  %v1820 = vmax.f32 %v384, %v813
  %v1821 = vmax.f32 %v387, %v816
  %v1822 = vmax.f32 %v392, %v821
  %v1823 = vmax.f32 %v395, %v824
  %v1824 = vmax.f32 %v400, %v829
  %v1825 = vmax.f32 %v403, %v832
  %v1826 = vmax.f32 %v408, %v837
  %v1827 = vmax.f32 %v411, %v840
  %v1828 = vmax.f32 %v416, %v845
  %v1829 = vmax.f32 %v419, %v848
  %v1830 = vmax.f32 %v424, %v853
  %v1831 = vmax.f32 %v427, %v856
  %v1832 = vmax.f32 %v432, %v861
  %v1833 = vmax.f32 %v435, %v864
  %v1834 = vmax.f32 %v440, %v869
  %v1835 = vmax.f32 %v443, %v872
  %v1836 = vmax.f32 %v448, %v877
  %v1837 = vmax.f32 %v451, %v880
  %v1838 = vmax.f32 %v456, %v885
  %v1839 = vmax.f32 %v459, %v888
  %v1840 = vmax.f32 %v464, %v893
  %v1841 = vmax.f32 %v467, %v896
  %v1842 = vmax.f32 %v472, %v901
  %v1843 = vmax.f32 %v475, %v904
  %v1844 = vmax.f32 %v480, %v909
  %v1845 = vmax.f32 %v483, %v912
  %v1846 = vmax.f32 %v488, %v917
  %v1847 = vmax.f32 %v491, %v920
  %v1848 = vmax.f32 %v496, %v925
  %v1849 = vmax.f32 %v499, %v928
  %v1850 = vmax.f32 %v504, %v933
  %v1851 = vmax.f32 %v507, %v936
  %v1852 = vmax.f32 %v512, %v941
  %v1853 = vmax.f32 %v1178, %v1607
  %v1854 = vmax.f32 %v1181, %v1610
  %v1855 = vmax.f32 %v1186, %v1615
  %v1856 = vmax.f32 %v1189, %v1618
  %v1857 = vmax.f32 %v1194, %v1623
  %v1858 = vmax.f32 %v1197, %v1626
  %v1859 = vmax.f32 %v1202, %v1631
  %v1860 = vmax.f32 %v1205, %v1634
  %v1861 = vmax.f32 %v1210, %v1639
  %v1862 = vmax.f32 %v1213, %v1642
  %v1863 = vmax.f32 %v1218, %v1647
  %v1864 = vmax.f32 %v1221, %v1650
  %v1865 = vmax.f32 %v1226, %v1655
  %v1866 = vmax.f32 %v1229, %v1658
  %v1867 = vmax.f32 %v1234, %v1663
  %v1868 = vmax.f32 %v1237, %v1666
  %v1869 = vmax.f32 %v1242, %v1671
  %v1870 = vmax.f32 %v1245, %v1674
  %v1871 = vmax.f32 %v1250, %v1679
  %v1872 = vmax.f32 %v1253, %v1682
  %v1873 = vmax.f32 %v1258, %v1687
  %v1874 = vmax.f32 %v1261, %v1690
  %v1875 = vmax.f32 %v1266, %v1695
  %v1876 = vmax.f32 %v1269, %v1698
  %v1877 = vmax.f32 %v1274, %v1703
  %v1878 = vmax.f32 %v1277, %v1706
  %v1879 = vmax.f32 %v1282, %v1711
  %v1880 = vmax.f32 %v1285, %v1714
  %v1881 = vmax.f32 %v1290, %v1719
  %v1882 = vmax.f32 %v1293, %v1722
  %v1883 = vmax.f32 %v1298, %v1727
  %v1884 = vmax.f32 %v1301, %v1730
  %v1885 = vmax.f32 %v1306, %v1735
  %v1886 = vmax.f32 %v1309, %v1738
  %v1887 = vmax.f32 %v1314, %v1743
  %v1888 = vmax.f32 %v1317, %v1746
  %v1889 = vmax.f32 %v1322, %v1751
  %v1890 = vmax.f32 %v1325, %v1754
  %v1891 = vmax.f32 %v1330, %v1759
  %v1892 = vmax.f32 %v1333, %v1762
  %v1893 = vmax.f32 %v1338, %v1767
  %v1894 = vmax.f32 %v1341, %v1770
  %v1895 = vmax.f32 %v1346, %v1775
  %v1896 = vmax.f32 %v1349, %v1778
  %v1897 = vmax.f32 %v1354, %v1783
  %v1898 = vmax.f32 %v1357, %v1786
  %v1899 = vmax.f32 %v1362, %v1791
  %v1900 = vmax.f32 %v1365, %v1794
  %v1901 = vmax.f32 %v1370, %v1799
  %v1902 = vmax.f32 %v1804, %v1853
  %v1903 = vmax.f32 %v1805, %v1854
  %v1904 = vmax.f32 %v1806, %v1855
  %v1905 = vmax.f32 %v1807, %v1856
  %v1906 = vmax.f32 %v1808, %v1857
  %v1907 = vmax.f32 %v1809, %v1858
  %v1908 = vmax.f32 %v1810, %v1859
  %v1909 = vmax.f32 %v1811, %v1860
  %v1910 = vmax.f32 %v1812, %v1861
  %v1911 = vmax.f32 %v1813, %v1862
  %v1912 = vmax.f32 %v1814, %v1863
  %v1913 = vmax.f32 %v1815, %v1864
  %v1914 = vmax.f32 %v1816, %v1865
  %v1915 = vmax.f32 %v1817, %v1866
  %v1916 = vmax.f32 %v1818, %v1867
  %v1917 = vmax.f32 %v1819, %v1868
  %v1918 = vmax.f32 %v1820, %v1869
  %v1919 = vmax.f32 %v1821, %v1870
  %v1920 = vmax.f32 %v1822, %v1871
  %v1921 = vmax.f32 %v1823, %v1872
  %v1922 = vmax.f32 %v1824, %v1873
  %v1923 = vmax.f32 %v1825, %v1874
  %v1924 = vmax.f32 %v1826, %v1875
  %v1925 = vmax.f32 %v1827, %v1876
  %v1926 = vmax.f32 %v1828, %v1877
  %v1927 = vmax.f32 %v1829, %v1878
  %v1928 = vmax.f32 %v1830, %v1879
  %v1929 = vmax.f32 %v1831, %v1880
  %v1930 = vmax.f32 %v1832, %v1881
  %v1931 = vmax.f32 %v1833, %v1882
  %v1932 = vmax.f32 %v1834, %v1883
  %v1933 = vmax.f32 %v1835, %v1884
  %v1934 = vmax.f32 %v1836, %v1885
  %v1935 = vmax.f32 %v1837, %v1886
  %v1936 = vmax.f32 %v1838, %v1887
  %v1937 = vmax.f32 %v1839, %v1888
  %v1938 = vmax.f32 %v1840, %v1889
  %v1939 = vmax.f32 %v1841, %v1890
  %v1940 = vmax.f32 %v1842, %v1891
  %v1941 = vmax.f32 %v1843, %v1892
  %v1942 = vmax.f32 %v1844, %v1893
  %v1943 = vmax.f32 %v1845, %v1894
  %v1944 = vmax.f32 %v1846, %v1895
  %v1945 = vmax.f32 %v1847, %v1896
  %v1946 = vmax.f32 %v1848, %v1897
  %v1947 = vmax.f32 %v1849, %v1898
  %v1948 = vmax.f32 %v1850, %v1899
  %v1949 = vmax.f32 %v1851, %v1900
  %v1950 = vmax.f32 %v1852, %v1901
  %v1951 = vld [vmem:[%s5] sm:$0x1]
  %v1953 = vlaneseq
  %v1954 = vshrl.u32 %v1953, 7
  %v1955 = vsub.s32 0, %v1954
  %v1956 = vrot.slane %v1951, %v1955
  %v1958 = vadd.f32 %v1902, %v1956
  %v1959 = vadd.f32 %v1903, %v1956
  %v1960 = vadd.f32 %v1904, %v1956
  %v1961 = vadd.f32 %v1905, %v1956
  %v1962 = vadd.f32 %v1906, %v1956
  %v1963 = vadd.f32 %v1907, %v1956
  %v1964 = vadd.f32 %v1908, %v1956
  %v1965 = vadd.f32 %v1909, %v1956
  %v1966 = vadd.f32 %v1910, %v1956
  %v1967 = vadd.f32 %v1911, %v1956
  %v1968 = vadd.f32 %v1912, %v1956
  %v1969 = vadd.f32 %v1913, %v1956
  %v1970 = vadd.f32 %v1914, %v1956
  %v1971 = vadd.f32 %v1915, %v1956
  %v1972 = vadd.f32 %v1916, %v1956
  %v1973 = vadd.f32 %v1917, %v1956
  %v1974 = vadd.f32 %v1918, %v1956
  %v1975 = vadd.f32 %v1919, %v1956
  %v1976 = vadd.f32 %v1920, %v1956
  %v1977 = vadd.f32 %v1921, %v1956
  %v1978 = vadd.f32 %v1922, %v1956
  %v1979 = vadd.f32 %v1923, %v1956
  %v1980 = vadd.f32 %v1924, %v1956
  %v1981 = vadd.f32 %v1925, %v1956
  %v1982 = vadd.f32 %v1926, %v1956
  %v1983 = vadd.f32 %v1927, %v1956
  %v1984 = vadd.f32 %v1928, %v1956
  %v1985 = vadd.f32 %v1929, %v1956
  %v1986 = vadd.f32 %v1930, %v1956
  %v1987 = vadd.f32 %v1931, %v1956
  %v1988 = vadd.f32 %v1932, %v1956
  %v1989 = vadd.f32 %v1933, %v1956
  %v1990 = vadd.f32 %v1934, %v1956
  %v1991 = vadd.f32 %v1935, %v1956
  %v1992 = vadd.f32 %v1936, %v1956
  %v1993 = vadd.f32 %v1937, %v1956
  %v1994 = vadd.f32 %v1938, %v1956
  %v1995 = vadd.f32 %v1939, %v1956
  %v1996 = vadd.f32 %v1940, %v1956
  %v1997 = vadd.f32 %v1941, %v1956
  %v1998 = vadd.f32 %v1942, %v1956
  %v1999 = vadd.f32 %v1943, %v1956
  %v2000 = vadd.f32 %v1944, %v1956
  %v2001 = vadd.f32 %v1945, %v1956
  %v2002 = vadd.f32 %v1946, %v1956
  %v2003 = vadd.f32 %v1947, %v1956
  %v2004 = vadd.f32 %v1948, %v1956
  %v2005 = vadd.f32 %v1949, %v1956
  %v2006 = vadd.f32 %v1950, %v1956
  %v2007 = vmax.f32 %v1958, 0.0
  %v2008 = vmax.f32 %v1959, 0.0
  %v2009 = vmax.f32 %v1960, 0.0
  %v2010 = vmax.f32 %v1961, 0.0
  %v2011 = vmax.f32 %v1962, 0.0
  %v2012 = vmax.f32 %v1963, 0.0
  %v2013 = vmax.f32 %v1964, 0.0
  %v2014 = vmax.f32 %v1965, 0.0
  %v2015 = vmax.f32 %v1966, 0.0
  %v2016 = vmax.f32 %v1967, 0.0
  %v2017 = vmax.f32 %v1968, 0.0
  %v2018 = vmax.f32 %v1969, 0.0
  %v2019 = vmax.f32 %v1970, 0.0
  %v2020 = vmax.f32 %v1971, 0.0
  %v2021 = vmax.f32 %v1972, 0.0
  %v2022 = vmax.f32 %v1973, 0.0
  %v2023 = vmax.f32 %v1974, 0.0
  %v2024 = vmax.f32 %v1975, 0.0
  %v2025 = vmax.f32 %v1976, 0.0
  %v2026 = vmax.f32 %v1977, 0.0
  %v2027 = vmax.f32 %v1978, 0.0
  %v2028 = vmax.f32 %v1979, 0.0
  %v2029 = vmax.f32 %v1980, 0.0
  %v2030 = vmax.f32 %v1981, 0.0
  %v2031 = vmax.f32 %v1982, 0.0
  %v2032 = vmax.f32 %v1983, 0.0
  %v2033 = vmax.f32 %v1984, 0.0
  %v2034 = vmax.f32 %v1985, 0.0
  %v2035 = vmax.f32 %v1986, 0.0
  %v2036 = vmax.f32 %v1987, 0.0
  %v2037 = vmax.f32 %v1988, 0.0
  %v2038 = vmax.f32 %v1989, 0.0
  %v2039 = vmax.f32 %v1990, 0.0
  %v2040 = vmax.f32 %v1991, 0.0
  %v2041 = vmax.f32 %v1992, 0.0
  %v2042 = vmax.f32 %v1993, 0.0
  %v2043 = vmax.f32 %v1994, 0.0
  %v2044 = vmax.f32 %v1995, 0.0
  %v2045 = vmax.f32 %v1996, 0.0
  %v2046 = vmax.f32 %v1997, 0.0
  %v2047 = vmax.f32 %v1998, 0.0
  %v2048 = vmax.f32 %v1999, 0.0
  %v2049 = vmax.f32 %v2000, 0.0
  %v2050 = vmax.f32 %v2001, 0.0
  %v2051 = vmax.f32 %v2002, 0.0
  %v2052 = vmax.f32 %v2003, 0.0
  %v2053 = vmax.f32 %v2004, 0.0
  %v2054 = vmax.f32 %v2005, 0.0
  %v2055 = vmax.f32 %v2006, 0.0
  %2056 = vst [vmem:[%s6] sm:$0xff] %v2007
  %2057 = vst [vmem:[%s6 + $0x8] sm:$0xff] %v2008
  %2058 = vst [vmem:[%s6 + $0x10] sm:$0xff] %v2009
  %2059 = vst [vmem:[%s6 + $0x18] sm:$0xff] %v2010
  %2060 = vst [vmem:[%s6 + $0x20] sm:$0xff] %v2011
  %2061 = vst [vmem:[%s6 + $0x28] sm:$0xff] %v2012
  %2062 = vst [vmem:[%s6 + $0x30] sm:$0xff] %v2013
  %2063 = vst [vmem:[%s6 + $0x38] sm:$0xff] %v2014
  %2064 = vst [vmem:[%s6 + $0x40] sm:$0xff] %v2015
  %2065 = vst [vmem:[%s6 + $0x48] sm:$0xff] %v2016
  %2066 = vst [vmem:[%s6 + $0x50] sm:$0xff] %v2017
  %2067 = vst [vmem:[%s6 + $0x58] sm:$0xff] %v2018
  %2068 = vst [vmem:[%s6 + $0x60] sm:$0xff] %v2019
  %2069 = vst [vmem:[%s6 + $0x68] sm:$0xff] %v2020
  %2070 = vst [vmem:[%s6 + $0x70] sm:$0xff] %v2021
  %2071 = vst [vmem:[%s6 + $0x78] sm:$0xff] %v2022
  %2072 = vst [vmem:[%s6 + $0x80] sm:$0xff] %v2023
  %2073 = vst [vmem:[%s6 + $0x88] sm:$0xff] %v2024
  %2074 = vst [vmem:[%s6 + $0x90] sm:$0xff] %v2025
  %2075 = vst [vmem:[%s6 + $0x98] sm:$0xff] %v2026
  %2076 = vst [vmem:[%s6 + $0xa0] sm:$0xff] %v2027
  %2077 = vst [vmem:[%s6 + $0xa8] sm:$0xff] %v2028
  %2078 = vst [vmem:[%s6 + $0xb0] sm:$0xff] %v2029
  %2079 = vst [vmem:[%s6 + $0xb8] sm:$0xff] %v2030
  %2080 = vst [vmem:[%s6 + $0xc0] sm:$0xff] %v2031
  %2081 = vst [vmem:[%s6 + $0xc8] sm:$0xff] %v2032
  %2082 = vst [vmem:[%s6 + $0xd0] sm:$0xff] %v2033
  %2083 = vst [vmem:[%s6 + $0xd8] sm:$0xff] %v2034
  %2084 = vst [vmem:[%s6 + $0xe0] sm:$0xff] %v2035
  %2085 = vst [vmem:[%s6 + $0xe8] sm:$0xff] %v2036
  %2086 = vst [vmem:[%s6 + $0xf0] sm:$0xff] %v2037
  %2087 = vst [vmem:[%s6 + $0xf8] sm:$0xff] %v2038
  %2088 = vst [vmem:[%s6 + $0x100] sm:$0xff] %v2039
  %2089 = vst [vmem:[%s6 + $0x108] sm:$0xff] %v2040
  %2090 = vst [vmem:[%s6 + $0x110] sm:$0xff] %v2041
  %2091 = vst [vmem:[%s6 + $0x118] sm:$0xff] %v2042
  %2092 = vst [vmem:[%s6 + $0x120] sm:$0xff] %v2043
  %2093 = vst [vmem:[%s6 + $0x128] sm:$0xff] %v2044
  %2094 = vst [vmem:[%s6 + $0x130] sm:$0xff] %v2045
  %2095 = vst [vmem:[%s6 + $0x138] sm:$0xff] %v2046
  %2096 = vst [vmem:[%s6 + $0x140] sm:$0xff] %v2047
  %2097 = vst [vmem:[%s6 + $0x148] sm:$0xff] %v2048
  %2098 = vst [vmem:[%s6 + $0x150] sm:$0xff] %v2049
  %2099 = vst [vmem:[%s6 + $0x158] sm:$0xff] %v2050
  %2100 = vst [vmem:[%s6 + $0x160] sm:$0xff] %v2051
  %2101 = vst [vmem:[%s6 + $0x168] sm:$0xff] %v2052
  %2102 = vst [vmem:[%s6 + $0x170] sm:$0xff] %v2053
  %2103 = vst [vmem:[%s6 + $0x178] sm:$0xff] %v2054
  %2104 = vst [vmem:[%s6 + $0x180] sm:$0xff] %v2055
  // Predicated region
  $region26: #{vanilla_net_forward.3} parent=0 // pred_check
    _
  $region27: #{vanilla_net_forward.3} parent=0 // pred_check_branch
    %2106 = sbr.rel (0) target = $region29
  $region28: #{vanilla_net_forward.3} parent=0 // pred_region
    _
  $region29: #{vanilla_net_forward.3} parent=0 // pred_fallthru
    _
  // Predicated region
  $region30: #{vanilla_net_forward.3} parent=0 // pred_check
    _
  $region31: #{vanilla_net_forward.3} parent=0 // pred_check_branch
    %2108 = sbr.rel (0) target = $region33
  $region32: #{vanilla_net_forward.3} parent=0 // pred_region
    _
  $region33: #{vanilla_net_forward.3} parent=0 // pred_fallthru
    _

// kernel: vanilla_net_forward.4
$region0: #{vanilla_net_forward.4}
  #allocation0 [shape = 'u32[]', space=smem, size = 0x4, offset = 0x4, fixed_abs, tag = 'smem constant byte address 0x4 - core index']
  #allocation1 [shape = 'u32[144,128]{1,0:T(1,128)}', space=vmem, size = 0x12000, scoped, tag = 'internal scratch']
  %s0 = inlined_call_operand.vmem [shape: bf16[56,256], index: 0, kind: input, shape index: {}]
  %s1 = inlined_call_operand.vmem [shape: bf16[56,256], index: 1, kind: input, shape index: {}]
  %s2 = inlined_call_operand.vmem [shape: bf16[56,256], index: 2, kind: input, shape index: {}]
  %s3 = inlined_call_operand.vmem [shape: bf16[56,256], index: 3, kind: input, shape index: {}]
  %s4 = inlined_call_operand.vmem [shape: bf16[256,128], index: 4, kind: input, shape index: {}]
  %s5 = inlined_call_operand.vmem [shape: f32[1,128], index: 5, kind: input, shape index: {}]
  %s6 = inlined_call_operand.vmem [shape: f32[56,128], index: 6, kind: output, shape index: {}]
  %s7 = sld [smem:[#allocation0]]
  $region34: #{vanilla_net_forward.4} parent=0
    _
  %s9 = ssub.s32 1, %s7
  %s10 = scalar_select 0, %s9, %s7
  // Predicated region
  $region2: #{vanilla_net_forward.4} parent=0 // pred_check
    _
  $region3: #{vanilla_net_forward.4} parent=0 // pred_check_branch
    %12 = sbr.rel (0) target = $region5
  $region4: #{vanilla_net_forward.4} parent=0 // pred_region
    _
  $region5: #{vanilla_net_forward.4} parent=0 // pred_fallthru
    _
  // Predicated region
  $region6: #{vanilla_net_forward.4} parent=0 // pred_check
    _
  $region7: #{vanilla_net_forward.4} parent=0 // pred_check_branch
    %14 = sbr.rel (0) target = $region9
  $region8: #{vanilla_net_forward.4} parent=0 // pred_region
    _
  $region9: #{vanilla_net_forward.4} parent=0 // pred_fallthru
    _
  // Predicated region
  $region10: #{vanilla_net_forward.4} parent=0 // pred_check
    _
  $region11: #{vanilla_net_forward.4} parent=0 // pred_check_branch
    %16 = sbr.rel (0) target = $region13
  $region12: #{vanilla_net_forward.4} parent=0 // pred_region
    _
  $region13: #{vanilla_net_forward.4} parent=0 // pred_fallthru
    _
  // Predicated region
  $region14: #{vanilla_net_forward.4} parent=0 // pred_check
    _
  $region15: #{vanilla_net_forward.4} parent=0 // pred_check_branch
    %18 = sbr.rel (0) target = $region17
  $region16: #{vanilla_net_forward.4} parent=0 // pred_region
    _
  $region17: #{vanilla_net_forward.4} parent=0 // pred_fallthru
    _
  // Predicated region
  $region18: #{vanilla_net_forward.4} parent=0 // pred_check
    _
  $region19: #{vanilla_net_forward.4} parent=0 // pred_check_branch
    %20 = sbr.rel (0) target = $region21
  $region20: #{vanilla_net_forward.4} parent=0 // pred_region
    _
  $region21: #{vanilla_net_forward.4} parent=0 // pred_fallthru
    _
  // Predicated region
  $region22: #{vanilla_net_forward.4} parent=0 // pred_check
    _
  $region23: #{vanilla_net_forward.4} parent=0 // pred_check_branch
    %22 = sbr.rel (0) target = $region25
  $region24: #{vanilla_net_forward.4} parent=0 // pred_region
    _
  $region25: #{vanilla_net_forward.4} parent=0 // pred_fallthru
    _
  %v24 = vld [vmem:[%s4] sm:$0xf]
  %v25 = vld [vmem:[%s4 + $0x4] sm:$0xf]
  %v26 = vld [vmem:[%s4 + $0x8] sm:$0xf]
  %v27 = vld [vmem:[%s4 + $0xc] sm:$0xf]
  %v28 = vld [vmem:[%s4 + $0x10] sm:$0xf]
  %v29 = vld [vmem:[%s4 + $0x14] sm:$0xf]
  %v30 = vld [vmem:[%s4 + $0x18] sm:$0xf]
  %v31 = vld [vmem:[%s4 + $0x1c] sm:$0xf]
  %v32 = vld [vmem:[%s4 + $0x20] sm:$0xf]
  %v33 = vld [vmem:[%s4 + $0x24] sm:$0xf]
  %v34 = vld [vmem:[%s4 + $0x28] sm:$0xf]
  %v35 = vld [vmem:[%s4 + $0x2c] sm:$0xf]
  %v36 = vld [vmem:[%s4 + $0x30] sm:$0xf]
  %v37 = vld [vmem:[%s4 + $0x34] sm:$0xf]
  %v38 = vld [vmem:[%s4 + $0x38] sm:$0xf]
  %v39 = vld [vmem:[%s4 + $0x3c] sm:$0xf]
  %v40 = vld [vmem:[%s4 + $0x40] sm:$0xf]
  %v41 = vld [vmem:[%s4 + $0x44] sm:$0xf]
  %v42 = vld [vmem:[%s4 + $0x48] sm:$0xf]
  %v43 = vld [vmem:[%s4 + $0x4c] sm:$0xf]
  %v44 = vld [vmem:[%s4 + $0x50] sm:$0xf]
  %v45 = vld [vmem:[%s4 + $0x54] sm:$0xf]
  %v46 = vld [vmem:[%s4 + $0x58] sm:$0xf]
  %v47 = vld [vmem:[%s4 + $0x5c] sm:$0xf]
  %v48 = vld [vmem:[%s4 + $0x60] sm:$0xf]
  %v49 = vld [vmem:[%s4 + $0x64] sm:$0xf]
  %v50 = vld [vmem:[%s4 + $0x68] sm:$0xf]
  %v51 = vld [vmem:[%s4 + $0x6c] sm:$0xf]
  %v52 = vld [vmem:[%s4 + $0x70] sm:$0xf]
  %v53 = vld [vmem:[%s4 + $0x74] sm:$0xf]
  %v54 = vld [vmem:[%s4 + $0x78] sm:$0xf]
  %v55 = vld [vmem:[%s4 + $0x7c] sm:$0xf]
  %v56 = vld [vmem:[%s0] sm:$0xff]
  %v57 = vld [vmem:[%s0 + $0x8] sm:$0xff]
  %v58 = vld [vmem:[%s0 + $0x10] sm:$0xff]
  %v59 = vld [vmem:[%s0 + $0x18] sm:$0xff]
  %v60 = vld [vmem:[%s0 + $0x20] sm:$0xff]
  %v61 = vld [vmem:[%s0 + $0x28] sm:$0xff]
  %v62 = vld [vmem:[%s0 + $0x30] sm:$0xff]
  %v70 = vunpack.c.l.b16 %v56
  %v71 = vunpack.c.h.b16 %v56
  %v72 = vunpack.c.l.b16 %v57
  %v73 = vunpack.c.h.b16 %v57
  %v74 = vunpack.c.l.b16 %v58
  %v75 = vunpack.c.h.b16 %v58
  %v76 = vunpack.c.l.b16 %v59
  %v77 = vunpack.c.h.b16 %v59
  %v78 = vunpack.c.l.b16 %v60
  %v79 = vunpack.c.h.b16 %v60
  %v80 = vunpack.c.l.b16 %v61
  %v81 = vunpack.c.h.b16 %v61
  %v82 = vunpack.c.l.b16 %v62
  %v83 = vunpack.c.h.b16 %v62
  %v84 = vpack.c.b16 %v72, %v70
  %v85 = vpack.c.b16 %v73, %v71
  %v86 = vpack.c.b16 %v76, %v74
  %v87 = vpack.c.b16 %v77, %v75
  %v88 = vpack.c.b16 %v80, %v78
  %v89 = vpack.c.b16 %v81, %v79
  %v90 = vpack.c.b16 %v82, %v82
  %v91 = vpack.c.b16 %v83, %v83
  %v132 = vunpack.c.l.b16 %v24
  %v133 = vunpack.c.l.b16 %v25
  %v134 = vunpack.c.l.b16 %v26
  %v135 = vunpack.c.l.b16 %v27
  %v136 = vunpack.c.l.b16 %v28
  %v137 = vunpack.c.l.b16 %v29
  %v138 = vunpack.c.l.b16 %v30
  %v139 = vunpack.c.l.b16 %v31
  %v140 = vunpack.c.l.b16 %v32
  %v141 = vunpack.c.l.b16 %v33
  %v142 = vunpack.c.l.b16 %v34
  %v143 = vunpack.c.l.b16 %v35
  %v144 = vunpack.c.l.b16 %v36
  %v145 = vunpack.c.l.b16 %v37
  %v146 = vunpack.c.l.b16 %v38
  %v147 = vunpack.c.l.b16 %v39
  %v148 = vunpack.c.l.b16 %v40
  %v149 = vunpack.c.l.b16 %v41
  %v150 = vunpack.c.l.b16 %v42
  %v151 = vunpack.c.l.b16 %v43
  %v152 = vunpack.c.l.b16 %v44
  %v153 = vunpack.c.l.b16 %v45
  %v154 = vunpack.c.l.b16 %v46
  %v155 = vunpack.c.l.b16 %v47
  %v156 = vunpack.c.l.b16 %v48
  %v157 = vunpack.c.l.b16 %v49
  %v158 = vunpack.c.l.b16 %v50
  %v159 = vunpack.c.l.b16 %v51
  %v160 = vunpack.c.l.b16 %v52
  %v161 = vunpack.c.l.b16 %v53
  %v162 = vunpack.c.l.b16 %v54
  %v163 = vunpack.c.l.b16 %v55
  %v164 = vpack.c.b16 %v133, %v132
  %v165 = vpack.c.b16 %v135, %v134
  %v166 = vpack.c.b16 %v137, %v136
  %v167 = vpack.c.b16 %v139, %v138
  %v168 = vpack.c.b16 %v141, %v140
  %v169 = vpack.c.b16 %v143, %v142
  %v170 = vpack.c.b16 %v145, %v144
  %v171 = vpack.c.b16 %v147, %v146
  %v172 = vpack.c.b16 %v149, %v148
  %v173 = vpack.c.b16 %v151, %v150
  %v174 = vpack.c.b16 %v153, %v152
  %v175 = vpack.c.b16 %v155, %v154
  %v176 = vpack.c.b16 %v157, %v156
  %v177 = vpack.c.b16 %v159, %v158
  %v178 = vpack.c.b16 %v161, %v160
  %v179 = vpack.c.b16 %v163, %v162
  %196 = vmatprep.subr.bf16.mxu0 0
  %197 = vmatpush1.bf16.msra.mxu0 %v164
  %198 = vmatprep.subr.bf16.mxu0 0
  %199 = vmatpush1.bf16.msra.mxu0 %v165
  %200 = vmatprep.subr.bf16.mxu0 0
  %201 = vmatpush1.bf16.msra.mxu0 %v166
  %202 = vmatprep.subr.bf16.mxu0 0
  %203 = vmatpush1.bf16.msra.mxu0 %v167
  %204 = vmatprep.subr.bf16.mxu0 0
  %205 = vmatpush1.bf16.msra.mxu0 %v168
  %206 = vmatprep.subr.bf16.mxu0 0
  %207 = vmatpush1.bf16.msra.mxu0 %v169
  %208 = vmatprep.subr.bf16.mxu0 0
  %209 = vmatpush1.bf16.msra.mxu0 %v170
  %210 = vmatprep.subr.bf16.mxu0 0
  %211 = vmatpush1.bf16.msra.mxu0 %v171
  %212 = vmatprep.subr.bf16.mxu0 0
  %213 = vmatpush1.bf16.msra.mxu0 %v172
  %214 = vmatprep.subr.bf16.mxu0 0
  %215 = vmatpush1.bf16.msra.mxu0 %v173
  %216 = vmatprep.subr.bf16.mxu0 0
  %217 = vmatpush1.bf16.msra.mxu0 %v174
  %218 = vmatprep.subr.bf16.mxu0 0
  %219 = vmatpush1.bf16.msra.mxu0 %v175
  %220 = vmatprep.subr.bf16.mxu0 0
  %221 = vmatpush1.bf16.msra.mxu0 %v176
  %222 = vmatprep.subr.bf16.mxu0 0
  %223 = vmatpush1.bf16.msra.mxu0 %v177
  %224 = vmatprep.subr.bf16.mxu0 0
  %225 = vmatpush1.bf16.msra.mxu0 %v178
  %226 = vmatprep.subr.bf16.mxu0 0
  %227 = vmatpush1.bf16.msra.mxu0 %v179
  %228 = vmatprep.mubr.bf16.mxu0 %v85
  %229 = vmatmul.mubr.bf16.gmra.mrb[0].mxu0 %v84
  %v230 = vpop.f32.mrb[0].mxu0
  %v231 = vadd.f32 0.0, %v230
  %v232 = vpop.f32.mrb[0].mxu0
  %v233 = vpop.f32.mrb[0].mxu0
  %v234 = vadd.f32 0.0, %v233
  %v235 = vpop.f32.mrb[0].mxu0
  %236 = vmatprep.mubr.bf16.mxu0 %v87
  %237 = vmatmul.mubr.bf16.gmra.mrb[0].mxu0 %v86
  %v238 = vpop.f32.mrb[0].mxu0
  %v239 = vadd.f32 0.0, %v238
  %v240 = vpop.f32.mrb[0].mxu0
  %v241 = vpop.f32.mrb[0].mxu0
  %v242 = vadd.f32 0.0, %v241
  %v243 = vpop.f32.mrb[0].mxu0
  %244 = vmatprep.mubr.bf16.mxu0 %v89
  %245 = vmatmul.mubr.bf16.gmra.mrb[0].mxu0 %v88
  %v246 = vpop.f32.mrb[0].mxu0
  %v247 = vadd.f32 0.0, %v246
  %v248 = vpop.f32.mrb[0].mxu0
  %v249 = vpop.f32.mrb[0].mxu0
  %v250 = vadd.f32 0.0, %v249
  %v251 = vpop.f32.mrb[0].mxu0
  %252 = vmatprep.mubr.bf16.mxu0 %v91
  %253 = vmatmul.mubr.bf16.gmra.mrb[0].mxu0 %v90
  %v254 = vpop.f32.mrb[0].mxu0
  %v255 = vadd.f32 0.0, %v254
  %v256 = vpop.f32.mrb[0].mxu0
  %v257 = vpop.f32.mrb[0].mxu0
  %v258 = vpop.f32.mrb[0].mxu0
  %259 = vdwg.mxu0
  %v260 = vld [vmem:[%s1] sm:$0xff]
  %v261 = vld [vmem:[%s1 + $0x8] sm:$0xff]
  %v262 = vld [vmem:[%s1 + $0x10] sm:$0xff]
  %v263 = vld [vmem:[%s1 + $0x18] sm:$0xff]
  %v264 = vld [vmem:[%s1 + $0x20] sm:$0xff]
  %v265 = vld [vmem:[%s1 + $0x28] sm:$0xff]
  %v266 = vld [vmem:[%s1 + $0x30] sm:$0xff]
  %v274 = vunpack.c.l.b16 %v260
  %v275 = vunpack.c.h.b16 %v260
  %v276 = vunpack.c.l.b16 %v261
  %v277 = vunpack.c.h.b16 %v261
  %v278 = vunpack.c.l.b16 %v262
  %v279 = vunpack.c.h.b16 %v262
  %v280 = vunpack.c.l.b16 %v263
  %v281 = vunpack.c.h.b16 %v263
  %v282 = vunpack.c.l.b16 %v264
  %v283 = vunpack.c.h.b16 %v264
  %v284 = vunpack.c.l.b16 %v265
  %v285 = vunpack.c.h.b16 %v265
  %v286 = vunpack.c.l.b16 %v266
  %v287 = vunpack.c.h.b16 %v266
  %v288 = vpack.c.b16 %v276, %v274
  %v289 = vpack.c.b16 %v277, %v275
  %v290 = vpack.c.b16 %v280, %v278
  %v291 = vpack.c.b16 %v281, %v279
  %v292 = vpack.c.b16 %v284, %v282
  %v293 = vpack.c.b16 %v285, %v283
  %v294 = vpack.c.b16 %v286, %v286
  %v295 = vpack.c.b16 %v287, %v287
  %304 = vmatprep.subr.bf16.mxu0 0
  %305 = vmatpush1.bf16.msra.mxu0 %v164
  %306 = vmatprep.subr.bf16.mxu0 0
  %307 = vmatpush1.bf16.msra.mxu0 %v165
  %308 = vmatprep.subr.bf16.mxu0 0
  %309 = vmatpush1.bf16.msra.mxu0 %v166
  %310 = vmatprep.subr.bf16.mxu0 0
  %311 = vmatpush1.bf16.msra.mxu0 %v167
  %312 = vmatprep.subr.bf16.mxu0 0
  %313 = vmatpush1.bf16.msra.mxu0 %v168
  %314 = vmatprep.subr.bf16.mxu0 0
  %315 = vmatpush1.bf16.msra.mxu0 %v169
  %316 = vmatprep.subr.bf16.mxu0 0
  %317 = vmatpush1.bf16.msra.mxu0 %v170
  %318 = vmatprep.subr.bf16.mxu0 0
  %319 = vmatpush1.bf16.msra.mxu0 %v171
  %320 = vmatprep.subr.bf16.mxu0 0
  %321 = vmatpush1.bf16.msra.mxu0 %v172
  %322 = vmatprep.subr.bf16.mxu0 0
  %323 = vmatpush1.bf16.msra.mxu0 %v173
  %324 = vmatprep.subr.bf16.mxu0 0
  %325 = vmatpush1.bf16.msra.mxu0 %v174
  %326 = vmatprep.subr.bf16.mxu0 0
  %327 = vmatpush1.bf16.msra.mxu0 %v175
  %328 = vmatprep.subr.bf16.mxu0 0
  %329 = vmatpush1.bf16.msra.mxu0 %v176
  %330 = vmatprep.subr.bf16.mxu0 0
  %331 = vmatpush1.bf16.msra.mxu0 %v177
  %332 = vmatprep.subr.bf16.mxu0 0
  %333 = vmatpush1.bf16.msra.mxu0 %v178
  %334 = vmatprep.subr.bf16.mxu0 0
  %335 = vmatpush1.bf16.msra.mxu0 %v179
  %336 = vmatprep.mubr.bf16.mxu0 %v289
  %337 = vmatmul.mubr.bf16.gmra.mrb[0].mxu0 %v288
  %v338 = vpop.f32.mrb[0].mxu0
  %v339 = vadd.f32 0.0, %v338
  %v340 = vpop.f32.mrb[0].mxu0
  %v341 = vpop.f32.mrb[0].mxu0
  %v342 = vadd.f32 0.0, %v341
  %v343 = vpop.f32.mrb[0].mxu0
  %344 = vmatprep.mubr.bf16.mxu0 %v291
  %345 = vmatmul.mubr.bf16.gmra.mrb[0].mxu0 %v290
  %v346 = vpop.f32.mrb[0].mxu0
  %v347 = vadd.f32 0.0, %v346
  %v348 = vpop.f32.mrb[0].mxu0
  %v349 = vpop.f32.mrb[0].mxu0
  %v350 = vadd.f32 0.0, %v349
  %v351 = vpop.f32.mrb[0].mxu0
  %352 = vmatprep.mubr.bf16.mxu0 %v293
  %353 = vmatmul.mubr.bf16.gmra.mrb[0].mxu0 %v292
  %v354 = vpop.f32.mrb[0].mxu0
  %v355 = vadd.f32 0.0, %v354
  %v356 = vpop.f32.mrb[0].mxu0
  %v357 = vpop.f32.mrb[0].mxu0
  %v358 = vadd.f32 0.0, %v357
  %v359 = vpop.f32.mrb[0].mxu0
  %360 = vmatprep.mubr.bf16.mxu0 %v295
  %361 = vmatmul.mubr.bf16.gmra.mrb[0].mxu0 %v294
  %v362 = vpop.f32.mrb[0].mxu0
  %v363 = vadd.f32 0.0, %v362
  %v364 = vpop.f32.mrb[0].mxu0
  %v365 = vpop.f32.mrb[0].mxu0
  %v366 = vpop.f32.mrb[0].mxu0
  %367 = vdwg.mxu0
  %v368 = vld [vmem:[%s2] sm:$0xff]
  %v369 = vld [vmem:[%s2 + $0x8] sm:$0xff]
  %v370 = vld [vmem:[%s2 + $0x10] sm:$0xff]
  %v371 = vld [vmem:[%s2 + $0x18] sm:$0xff]
  %v372 = vld [vmem:[%s2 + $0x20] sm:$0xff]
  %v373 = vld [vmem:[%s2 + $0x28] sm:$0xff]
  %v374 = vld [vmem:[%s2 + $0x30] sm:$0xff]
  %v382 = vunpack.c.l.b16 %v368
  %v383 = vunpack.c.h.b16 %v368
  %v384 = vunpack.c.l.b16 %v369
  %v385 = vunpack.c.h.b16 %v369
  %v386 = vunpack.c.l.b16 %v370
  %v387 = vunpack.c.h.b16 %v370
  %v388 = vunpack.c.l.b16 %v371
  %v389 = vunpack.c.h.b16 %v371
  %v390 = vunpack.c.l.b16 %v372
  %v391 = vunpack.c.h.b16 %v372
  %v392 = vunpack.c.l.b16 %v373
  %v393 = vunpack.c.h.b16 %v373
  %v394 = vunpack.c.l.b16 %v374
  %v395 = vunpack.c.h.b16 %v374
  %v396 = vpack.c.b16 %v384, %v382
  %v397 = vpack.c.b16 %v385, %v383
  %v398 = vpack.c.b16 %v388, %v386
  %v399 = vpack.c.b16 %v389, %v387
  %v400 = vpack.c.b16 %v392, %v390
  %v401 = vpack.c.b16 %v393, %v391
  %v402 = vpack.c.b16 %v394, %v394
  %v403 = vpack.c.b16 %v395, %v395
  %412 = vmatprep.subr.bf16.mxu0 0
  %413 = vmatpush1.bf16.msra.mxu0 %v164
  %414 = vmatprep.subr.bf16.mxu0 0
  %415 = vmatpush1.bf16.msra.mxu0 %v165
  %416 = vmatprep.subr.bf16.mxu0 0
  %417 = vmatpush1.bf16.msra.mxu0 %v166
  %418 = vmatprep.subr.bf16.mxu0 0
  %419 = vmatpush1.bf16.msra.mxu0 %v167
  %420 = vmatprep.subr.bf16.mxu0 0
  %421 = vmatpush1.bf16.msra.mxu0 %v168
  %422 = vmatprep.subr.bf16.mxu0 0
  %423 = vmatpush1.bf16.msra.mxu0 %v169
  %424 = vmatprep.subr.bf16.mxu0 0
  %425 = vmatpush1.bf16.msra.mxu0 %v170
  %426 = vmatprep.subr.bf16.mxu0 0
  %427 = vmatpush1.bf16.msra.mxu0 %v171
  %428 = vmatprep.subr.bf16.mxu0 0
  %429 = vmatpush1.bf16.msra.mxu0 %v172
  %430 = vmatprep.subr.bf16.mxu0 0
  %431 = vmatpush1.bf16.msra.mxu0 %v173
  %432 = vmatprep.subr.bf16.mxu0 0
  %433 = vmatpush1.bf16.msra.mxu0 %v174
  %434 = vmatprep.subr.bf16.mxu0 0
  %435 = vmatpush1.bf16.msra.mxu0 %v175
  %436 = vmatprep.subr.bf16.mxu0 0
  %437 = vmatpush1.bf16.msra.mxu0 %v176
  %438 = vmatprep.subr.bf16.mxu0 0
  %439 = vmatpush1.bf16.msra.mxu0 %v177
  %440 = vmatprep.subr.bf16.mxu0 0
  %441 = vmatpush1.bf16.msra.mxu0 %v178
  %442 = vmatprep.subr.bf16.mxu0 0
  %443 = vmatpush1.bf16.msra.mxu0 %v179
  %444 = vmatprep.mubr.bf16.mxu0 %v397
  %445 = vmatmul.mubr.bf16.gmra.mrb[0].mxu0 %v396
  %v446 = vpop.f32.mrb[0].mxu0
  %v447 = vadd.f32 0.0, %v446
  %v448 = vpop.f32.mrb[0].mxu0
  %v449 = vpop.f32.mrb[0].mxu0
  %v450 = vadd.f32 0.0, %v449
  %v451 = vpop.f32.mrb[0].mxu0
  %452 = vmatprep.mubr.bf16.mxu0 %v399
  %453 = vmatmul.mubr.bf16.gmra.mrb[0].mxu0 %v398
  %v454 = vpop.f32.mrb[0].mxu0
  %v455 = vadd.f32 0.0, %v454
  %v456 = vpop.f32.mrb[0].mxu0
  %v457 = vpop.f32.mrb[0].mxu0
  %v458 = vadd.f32 0.0, %v457
  %v459 = vpop.f32.mrb[0].mxu0
  %460 = vmatprep.mubr.bf16.mxu0 %v401
  %461 = vmatmul.mubr.bf16.gmra.mrb[0].mxu0 %v400
  %v462 = vpop.f32.mrb[0].mxu0
  %v463 = vadd.f32 0.0, %v462
  %v464 = vpop.f32.mrb[0].mxu0
  %v465 = vpop.f32.mrb[0].mxu0
  %v466 = vadd.f32 0.0, %v465
  %v467 = vpop.f32.mrb[0].mxu0
  %468 = vmatprep.mubr.bf16.mxu0 %v403
  %469 = vmatmul.mubr.bf16.gmra.mrb[0].mxu0 %v402
  %v470 = vpop.f32.mrb[0].mxu0
  %v471 = vadd.f32 0.0, %v470
  %v472 = vpop.f32.mrb[0].mxu0
  %v473 = vpop.f32.mrb[0].mxu0
  %v474 = vpop.f32.mrb[0].mxu0
  %475 = vdwg.mxu0
  %v476 = vld [vmem:[%s3] sm:$0xff]
  %v477 = vld [vmem:[%s3 + $0x8] sm:$0xff]
  %v478 = vld [vmem:[%s3 + $0x10] sm:$0xff]
  %v479 = vld [vmem:[%s3 + $0x18] sm:$0xff]
  %v480 = vld [vmem:[%s3 + $0x20] sm:$0xff]
  %v481 = vld [vmem:[%s3 + $0x28] sm:$0xff]
  %v482 = vld [vmem:[%s3 + $0x30] sm:$0xff]
  %v490 = vunpack.c.l.b16 %v476
  %v491 = vunpack.c.h.b16 %v476
  %v492 = vunpack.c.l.b16 %v477
  %v493 = vunpack.c.h.b16 %v477
  %v494 = vunpack.c.l.b16 %v478
  %v495 = vunpack.c.h.b16 %v478
  %v496 = vunpack.c.l.b16 %v479
  %v497 = vunpack.c.h.b16 %v479
  %v498 = vunpack.c.l.b16 %v480
  %v499 = vunpack.c.h.b16 %v480
  %v500 = vunpack.c.l.b16 %v481
  %v501 = vunpack.c.h.b16 %v481
  %v502 = vunpack.c.l.b16 %v482
  %v503 = vunpack.c.h.b16 %v482
  %v504 = vpack.c.b16 %v492, %v490
  %v505 = vpack.c.b16 %v493, %v491
  %v506 = vpack.c.b16 %v496, %v494
  %v507 = vpack.c.b16 %v497, %v495
  %v508 = vpack.c.b16 %v500, %v498
  %v509 = vpack.c.b16 %v501, %v499
  %v510 = vpack.c.b16 %v502, %v502
  %v511 = vpack.c.b16 %v503, %v503
  %520 = vmatprep.subr.bf16.mxu0 0
  %521 = vmatpush1.bf16.msra.mxu0 %v164
  %522 = vmatprep.subr.bf16.mxu0 0
  %523 = vmatpush1.bf16.msra.mxu0 %v165
  %524 = vmatprep.subr.bf16.mxu0 0
  %525 = vmatpush1.bf16.msra.mxu0 %v166
  %526 = vmatprep.subr.bf16.mxu0 0
  %527 = vmatpush1.bf16.msra.mxu0 %v167
  %528 = vmatprep.subr.bf16.mxu0 0
  %529 = vmatpush1.bf16.msra.mxu0 %v168
  %530 = vmatprep.subr.bf16.mxu0 0
  %531 = vmatpush1.bf16.msra.mxu0 %v169
  %532 = vmatprep.subr.bf16.mxu0 0
  %533 = vmatpush1.bf16.msra.mxu0 %v170
  %534 = vmatprep.subr.bf16.mxu0 0
  %535 = vmatpush1.bf16.msra.mxu0 %v171
  %536 = vmatprep.subr.bf16.mxu0 0
  %537 = vmatpush1.bf16.msra.mxu0 %v172
  %538 = vmatprep.subr.bf16.mxu0 0
  %539 = vmatpush1.bf16.msra.mxu0 %v173
  %540 = vmatprep.subr.bf16.mxu0 0
  %541 = vmatpush1.bf16.msra.mxu0 %v174
  %542 = vmatprep.subr.bf16.mxu0 0
  %543 = vmatpush1.bf16.msra.mxu0 %v175
  %544 = vmatprep.subr.bf16.mxu0 0
  %545 = vmatpush1.bf16.msra.mxu0 %v176
  %546 = vmatprep.subr.bf16.mxu0 0
  %547 = vmatpush1.bf16.msra.mxu0 %v177
  %548 = vmatprep.subr.bf16.mxu0 0
  %549 = vmatpush1.bf16.msra.mxu0 %v178
  %550 = vmatprep.subr.bf16.mxu0 0
  %551 = vmatpush1.bf16.msra.mxu0 %v179
  %552 = vmatprep.mubr.bf16.mxu0 %v505
  %553 = vmatmul.mubr.bf16.gmra.mrb[0].mxu0 %v504
  %v554 = vpop.f32.mrb[0].mxu0
  %v555 = vadd.f32 0.0, %v554
  %v556 = vpop.f32.mrb[0].mxu0
  %v557 = vpop.f32.mrb[0].mxu0
  %v558 = vadd.f32 0.0, %v557
  %v559 = vpop.f32.mrb[0].mxu0
  %560 = vmatprep.mubr.bf16.mxu0 %v507
  %561 = vmatmul.mubr.bf16.gmra.mrb[0].mxu0 %v506
  %v562 = vpop.f32.mrb[0].mxu0
  %v563 = vadd.f32 0.0, %v562
  %v564 = vpop.f32.mrb[0].mxu0
  %v565 = vpop.f32.mrb[0].mxu0
  %v566 = vadd.f32 0.0, %v565
  %v567 = vpop.f32.mrb[0].mxu0
  %568 = vmatprep.mubr.bf16.mxu0 %v509
  %569 = vmatmul.mubr.bf16.gmra.mrb[0].mxu0 %v508
  %v570 = vpop.f32.mrb[0].mxu0
  %v571 = vadd.f32 0.0, %v570
  %v572 = vpop.f32.mrb[0].mxu0
  %v573 = vpop.f32.mrb[0].mxu0
  %v574 = vadd.f32 0.0, %v573
  %v575 = vpop.f32.mrb[0].mxu0
  %576 = vmatprep.mubr.bf16.mxu0 %v511
  %577 = vmatmul.mubr.bf16.gmra.mrb[0].mxu0 %v510
  %v578 = vpop.f32.mrb[0].mxu0
  %v579 = vadd.f32 0.0, %v578
  %v580 = vpop.f32.mrb[0].mxu0
  %v581 = vpop.f32.mrb[0].mxu0
  %v582 = vpop.f32.mrb[0].mxu0
  %583 = vdwg.mxu0
  %v584 = vmax.f32 %v231, %v339
  %v585 = vmax.f32 %v234, %v342
  %v586 = vmax.f32 %v239, %v347
  %v587 = vmax.f32 %v242, %v350
  %v588 = vmax.f32 %v247, %v355
  %v589 = vmax.f32 %v250, %v358
  %v590 = vmax.f32 %v255, %v363
  %v591 = vmax.f32 %v447, %v555
  %v592 = vmax.f32 %v450, %v558
  %v593 = vmax.f32 %v455, %v563
  %v594 = vmax.f32 %v458, %v566
  %v595 = vmax.f32 %v463, %v571
  %v596 = vmax.f32 %v466, %v574
  %v597 = vmax.f32 %v471, %v579
  %v598 = vmax.f32 %v584, %v591
  %v599 = vmax.f32 %v585, %v592
  %v600 = vmax.f32 %v586, %v593
  %v601 = vmax.f32 %v587, %v594
  %v602 = vmax.f32 %v588, %v595
  %v603 = vmax.f32 %v589, %v596
  %v604 = vmax.f32 %v590, %v597
  %v605 = vld [vmem:[%s5] sm:$0x1]
  %v607 = vlaneseq
  %v608 = vshrl.u32 %v607, 7
  %v609 = vsub.s32 0, %v608
  %v610 = vrot.slane %v605, %v609
  %v612 = vadd.f32 %v598, %v610
  %v613 = vadd.f32 %v599, %v610
  %v614 = vadd.f32 %v600, %v610
  %v615 = vadd.f32 %v601, %v610
  %v616 = vadd.f32 %v602, %v610
  %v617 = vadd.f32 %v603, %v610
  %v618 = vadd.f32 %v604, %v610
  %v619 = vmax.f32 %v612, 0.0
  %v620 = vmax.f32 %v613, 0.0
  %v621 = vmax.f32 %v614, 0.0
  %v622 = vmax.f32 %v615, 0.0
  %v623 = vmax.f32 %v616, 0.0
  %v624 = vmax.f32 %v617, 0.0
  %v625 = vmax.f32 %v618, 0.0
  %626 = vst [vmem:[%s6] sm:$0xff] %v619
  %627 = vst [vmem:[%s6 + $0x8] sm:$0xff] %v620
  %628 = vst [vmem:[%s6 + $0x10] sm:$0xff] %v621
  %629 = vst [vmem:[%s6 + $0x18] sm:$0xff] %v622
  %630 = vst [vmem:[%s6 + $0x20] sm:$0xff] %v623
  %631 = vst [vmem:[%s6 + $0x28] sm:$0xff] %v624
  %632 = vst [vmem:[%s6 + $0x30] sm:$0xff] %v625
  // Predicated region
  $region26: #{vanilla_net_forward.4} parent=0 // pred_check
    _
  $region27: #{vanilla_net_forward.4} parent=0 // pred_check_branch
    %634 = sbr.rel (0) target = $region29
  $region28: #{vanilla_net_forward.4} parent=0 // pred_region
    _
  $region29: #{vanilla_net_forward.4} parent=0 // pred_fallthru
    _
  // Predicated region
  $region30: #{vanilla_net_forward.4} parent=0 // pred_check
    _
  $region31: #{vanilla_net_forward.4} parent=0 // pred_check_branch
    %636 = sbr.rel (0) target = $region33
  $region32: #{vanilla_net_forward.4} parent=0 // pred_region
    _
  $region33: #{vanilla_net_forward.4} parent=0 // pred_fallthru
    _

// kernel: vanilla_net_forward.5
$region0: #{vanilla_net_forward.5}
  #allocation0 [shape = 'u32[]', space=smem, size = 0x4, offset = 0x4, fixed_abs, tag = 'smem constant byte address 0x4 - core index']
  #allocation1 [shape = 'u32[144,128]{1,0:T(1,128)}', space=vmem, size = 0x12000, scoped, tag = 'internal scratch']
  %s0 = inlined_call_operand.vmem [shape: bf16[8,512], index: 0, kind: input, shape index: {}]
  %s1 = inlined_call_operand.vmem [shape: bf16[512,128], index: 1, kind: input, shape index: {}]
  %s2 = inlined_call_operand.vmem [shape: f32[1,128], index: 2, kind: input, shape index: {}]
  %s3 = inlined_call_operand.vmem [shape: bf16[128,128], index: 3, kind: input, shape index: {}]
  %s4 = inlined_call_operand.vmem [shape: f32[1,128], index: 4, kind: input, shape index: {}]
  %s5 = inlined_call_operand.vmem [shape: bf16[128,128], index: 5, kind: input, shape index: {}]
  %s6 = inlined_call_operand.vmem [shape: f32[1,128], index: 6, kind: input, shape index: {}]
  %s7 = inlined_call_operand.vmem [shape: f32[8,128], index: 7, kind: output, shape index: {}]
  %s8 = sld [smem:[#allocation0]]
  $region38: #{vanilla_net_forward.5} parent=0
    _
  %s10 = ssub.s32 1, %s8
  %s11 = scalar_select 0, %s10, %s8
  // Predicated region
  $region2: #{vanilla_net_forward.5} parent=0 // pred_check
    _
  $region3: #{vanilla_net_forward.5} parent=0 // pred_check_branch
    %13 = sbr.rel (0) target = $region5
  $region4: #{vanilla_net_forward.5} parent=0 // pred_region
    _
  $region5: #{vanilla_net_forward.5} parent=0 // pred_fallthru
    _
  // Predicated region
  $region6: #{vanilla_net_forward.5} parent=0 // pred_check
    _
  $region7: #{vanilla_net_forward.5} parent=0 // pred_check_branch
    %15 = sbr.rel (0) target = $region9
  $region8: #{vanilla_net_forward.5} parent=0 // pred_region
    _
  $region9: #{vanilla_net_forward.5} parent=0 // pred_fallthru
    _
  // Predicated region
  $region10: #{vanilla_net_forward.5} parent=0 // pred_check
    _
  $region11: #{vanilla_net_forward.5} parent=0 // pred_check_branch
    %17 = sbr.rel (0) target = $region13
  $region12: #{vanilla_net_forward.5} parent=0 // pred_region
    _
  $region13: #{vanilla_net_forward.5} parent=0 // pred_fallthru
    _
  // Predicated region
  $region14: #{vanilla_net_forward.5} parent=0 // pred_check
    _
  $region15: #{vanilla_net_forward.5} parent=0 // pred_check_branch
    %19 = sbr.rel (0) target = $region17
  $region16: #{vanilla_net_forward.5} parent=0 // pred_region
    _
  $region17: #{vanilla_net_forward.5} parent=0 // pred_fallthru
    _
  // Predicated region
  $region18: #{vanilla_net_forward.5} parent=0 // pred_check
    _
  $region19: #{vanilla_net_forward.5} parent=0 // pred_check_branch
    %21 = sbr.rel (0) target = $region21
  $region20: #{vanilla_net_forward.5} parent=0 // pred_region
    _
  $region21: #{vanilla_net_forward.5} parent=0 // pred_fallthru
    _
  // Predicated region
  $region22: #{vanilla_net_forward.5} parent=0 // pred_check
    _
  $region23: #{vanilla_net_forward.5} parent=0 // pred_check_branch
    %23 = sbr.rel (0) target = $region25
  $region24: #{vanilla_net_forward.5} parent=0 // pred_region
    _
  $region25: #{vanilla_net_forward.5} parent=0 // pred_fallthru
    _
  // Predicated region
  $region26: #{vanilla_net_forward.5} parent=0 // pred_check
    _
  $region27: #{vanilla_net_forward.5} parent=0 // pred_check_branch
    %25 = sbr.rel (0) target = $region29
  $region28: #{vanilla_net_forward.5} parent=0 // pred_region
    _
  $region29: #{vanilla_net_forward.5} parent=0 // pred_fallthru
    _
  %v27 = vld [vmem:[%s0] sm:$0xff]
  %v28 = vld [vmem:[%s0 + $0x8] sm:$0xff]
  %v29 = vld [vmem:[%s1] sm:$0xf]
  %v30 = vld [vmem:[%s1 + $0x4] sm:$0xf]
  %v31 = vld [vmem:[%s1 + $0x8] sm:$0xf]
  %v32 = vld [vmem:[%s1 + $0xc] sm:$0xf]
  %v33 = vld [vmem:[%s1 + $0x10] sm:$0xf]
  %v34 = vld [vmem:[%s1 + $0x14] sm:$0xf]
  %v35 = vld [vmem:[%s1 + $0x18] sm:$0xf]
  %v36 = vld [vmem:[%s1 + $0x1c] sm:$0xf]
  %v37 = vld [vmem:[%s1 + $0x20] sm:$0xf]
  %v38 = vld [vmem:[%s1 + $0x24] sm:$0xf]
  %v39 = vld [vmem:[%s1 + $0x28] sm:$0xf]
  %v40 = vld [vmem:[%s1 + $0x2c] sm:$0xf]
  %v41 = vld [vmem:[%s1 + $0x30] sm:$0xf]
  %v42 = vld [vmem:[%s1 + $0x34] sm:$0xf]
  %v43 = vld [vmem:[%s1 + $0x38] sm:$0xf]
  %v44 = vld [vmem:[%s1 + $0x3c] sm:$0xf]
  %v45 = vld [vmem:[%s1 + $0x40] sm:$0xf]
  %v46 = vld [vmem:[%s1 + $0x44] sm:$0xf]
  %v47 = vld [vmem:[%s1 + $0x48] sm:$0xf]
  %v48 = vld [vmem:[%s1 + $0x4c] sm:$0xf]
  %v49 = vld [vmem:[%s1 + $0x50] sm:$0xf]
  %v50 = vld [vmem:[%s1 + $0x54] sm:$0xf]
  %v51 = vld [vmem:[%s1 + $0x58] sm:$0xf]
  %v52 = vld [vmem:[%s1 + $0x5c] sm:$0xf]
  %v53 = vld [vmem:[%s1 + $0x60] sm:$0xf]
  %v54 = vld [vmem:[%s1 + $0x64] sm:$0xf]
  %v55 = vld [vmem:[%s1 + $0x68] sm:$0xf]
  %v56 = vld [vmem:[%s1 + $0x6c] sm:$0xf]
  %v57 = vld [vmem:[%s1 + $0x70] sm:$0xf]
  %v58 = vld [vmem:[%s1 + $0x74] sm:$0xf]
  %v59 = vld [vmem:[%s1 + $0x78] sm:$0xf]
  %v60 = vld [vmem:[%s1 + $0x7c] sm:$0xf]
  %v61 = vld [vmem:[%s1 + $0x80] sm:$0xf]
  %v62 = vld [vmem:[%s1 + $0x84] sm:$0xf]
  %v63 = vld [vmem:[%s1 + $0x88] sm:$0xf]
  %v64 = vld [vmem:[%s1 + $0x8c] sm:$0xf]
  %v65 = vld [vmem:[%s1 + $0x90] sm:$0xf]
  %v66 = vld [vmem:[%s1 + $0x94] sm:$0xf]
  %v67 = vld [vmem:[%s1 + $0x98] sm:$0xf]
  %v68 = vld [vmem:[%s1 + $0x9c] sm:$0xf]
  %v69 = vld [vmem:[%s1 + $0xa0] sm:$0xf]
  %v70 = vld [vmem:[%s1 + $0xa4] sm:$0xf]
  %v71 = vld [vmem:[%s1 + $0xa8] sm:$0xf]
  %v72 = vld [vmem:[%s1 + $0xac] sm:$0xf]
  %v73 = vld [vmem:[%s1 + $0xb0] sm:$0xf]
  %v74 = vld [vmem:[%s1 + $0xb4] sm:$0xf]
  %v75 = vld [vmem:[%s1 + $0xb8] sm:$0xf]
  %v76 = vld [vmem:[%s1 + $0xbc] sm:$0xf]
  %v77 = vld [vmem:[%s1 + $0xc0] sm:$0xf]
  %v78 = vld [vmem:[%s1 + $0xc4] sm:$0xf]
  %v79 = vld [vmem:[%s1 + $0xc8] sm:$0xf]
  %v80 = vld [vmem:[%s1 + $0xcc] sm:$0xf]
  %v81 = vld [vmem:[%s1 + $0xd0] sm:$0xf]
  %v82 = vld [vmem:[%s1 + $0xd4] sm:$0xf]
  %v83 = vld [vmem:[%s1 + $0xd8] sm:$0xf]
  %v84 = vld [vmem:[%s1 + $0xdc] sm:$0xf]
  %v85 = vld [vmem:[%s1 + $0xe0] sm:$0xf]
  %v86 = vld [vmem:[%s1 + $0xe4] sm:$0xf]
  %v87 = vld [vmem:[%s1 + $0xe8] sm:$0xf]
  %v88 = vld [vmem:[%s1 + $0xec] sm:$0xf]
  %v89 = vld [vmem:[%s1 + $0xf0] sm:$0xf]
  %v90 = vld [vmem:[%s1 + $0xf4] sm:$0xf]
  %v91 = vld [vmem:[%s1 + $0xf8] sm:$0xf]
  %v92 = vld [vmem:[%s1 + $0xfc] sm:$0xf]
  %v93 = vld [vmem:[%s2] sm:$0x1]
  %v95 = vlaneseq
  %v96 = vshrl.u32 %v95, 7
  %v97 = vsub.s32 0, %v96
  %v98 = vrot.slane %v93, %v97
  %v102 = vunpack.c.l.b16 %v27
  %v103 = vunpack.c.h.b16 %v27
  %v104 = vunpack.c.l.b16 %v28
  %v105 = vunpack.c.h.b16 %v28
  %v106 = vpack.c.b16 %v102, %v102
  %v107 = vpack.c.b16 %v103, %v103
  %v108 = vpack.c.b16 %v104, %v104
  %v109 = vpack.c.b16 %v105, %v105
  %v178 = vunpack.c.l.b16 %v29
  %v179 = vunpack.c.l.b16 %v30
  %v180 = vunpack.c.l.b16 %v31
  %v181 = vunpack.c.l.b16 %v32
  %v182 = vunpack.c.l.b16 %v33
  %v183 = vunpack.c.l.b16 %v34
  %v184 = vunpack.c.l.b16 %v35
  %v185 = vunpack.c.l.b16 %v36
  %v186 = vunpack.c.l.b16 %v37
  %v187 = vunpack.c.l.b16 %v38
  %v188 = vunpack.c.l.b16 %v39
  %v189 = vunpack.c.l.b16 %v40
  %v190 = vunpack.c.l.b16 %v41
  %v191 = vunpack.c.l.b16 %v42
  %v192 = vunpack.c.l.b16 %v43
  %v193 = vunpack.c.l.b16 %v44
  %v194 = vunpack.c.l.b16 %v45
  %v195 = vunpack.c.l.b16 %v46
  %v196 = vunpack.c.l.b16 %v47
  %v197 = vunpack.c.l.b16 %v48
  %v198 = vunpack.c.l.b16 %v49
  %v199 = vunpack.c.l.b16 %v50
  %v200 = vunpack.c.l.b16 %v51
  %v201 = vunpack.c.l.b16 %v52
  %v202 = vunpack.c.l.b16 %v53
  %v203 = vunpack.c.l.b16 %v54
  %v204 = vunpack.c.l.b16 %v55
  %v205 = vunpack.c.l.b16 %v56
  %v206 = vunpack.c.l.b16 %v57
  %v207 = vunpack.c.l.b16 %v58
  %v208 = vunpack.c.l.b16 %v59
  %v209 = vunpack.c.l.b16 %v60
  %v210 = vunpack.c.l.b16 %v61
  %v211 = vunpack.c.l.b16 %v62
  %v212 = vunpack.c.l.b16 %v63
  %v213 = vunpack.c.l.b16 %v64
  %v214 = vunpack.c.l.b16 %v65
  %v215 = vunpack.c.l.b16 %v66
  %v216 = vunpack.c.l.b16 %v67
  %v217 = vunpack.c.l.b16 %v68
  %v218 = vunpack.c.l.b16 %v69
  %v219 = vunpack.c.l.b16 %v70
  %v220 = vunpack.c.l.b16 %v71
  %v221 = vunpack.c.l.b16 %v72
  %v222 = vunpack.c.l.b16 %v73
  %v223 = vunpack.c.l.b16 %v74
  %v224 = vunpack.c.l.b16 %v75
  %v225 = vunpack.c.l.b16 %v76
  %v226 = vunpack.c.l.b16 %v77
  %v227 = vunpack.c.l.b16 %v78
  %v228 = vunpack.c.l.b16 %v79
  %v229 = vunpack.c.l.b16 %v80
  %v230 = vunpack.c.l.b16 %v81
  %v231 = vunpack.c.l.b16 %v82
  %v232 = vunpack.c.l.b16 %v83
  %v233 = vunpack.c.l.b16 %v84
  %v234 = vunpack.c.l.b16 %v85
  %v235 = vunpack.c.l.b16 %v86
  %v236 = vunpack.c.l.b16 %v87
  %v237 = vunpack.c.l.b16 %v88
  %v238 = vunpack.c.l.b16 %v89
  %v239 = vunpack.c.l.b16 %v90
  %v240 = vunpack.c.l.b16 %v91
  %v241 = vunpack.c.l.b16 %v92
  %v242 = vpack.c.b16 %v179, %v178
  %v243 = vpack.c.b16 %v181, %v180
  %v244 = vpack.c.b16 %v183, %v182
  %v245 = vpack.c.b16 %v185, %v184
  %v246 = vpack.c.b16 %v187, %v186
  %v247 = vpack.c.b16 %v189, %v188
  %v248 = vpack.c.b16 %v191, %v190
  %v249 = vpack.c.b16 %v193, %v192
  %v250 = vpack.c.b16 %v195, %v194
  %v251 = vpack.c.b16 %v197, %v196
  %v252 = vpack.c.b16 %v199, %v198
  %v253 = vpack.c.b16 %v201, %v200
  %v254 = vpack.c.b16 %v203, %v202
  %v255 = vpack.c.b16 %v205, %v204
  %v256 = vpack.c.b16 %v207, %v206
  %v257 = vpack.c.b16 %v209, %v208
  %v258 = vpack.c.b16 %v211, %v210
  %v259 = vpack.c.b16 %v213, %v212
  %v260 = vpack.c.b16 %v215, %v214
  %v261 = vpack.c.b16 %v217, %v216
  %v262 = vpack.c.b16 %v219, %v218
  %v263 = vpack.c.b16 %v221, %v220
  %v264 = vpack.c.b16 %v223, %v222
  %v265 = vpack.c.b16 %v225, %v224
  %v266 = vpack.c.b16 %v227, %v226
  %v267 = vpack.c.b16 %v229, %v228
  %v268 = vpack.c.b16 %v231, %v230
  %v269 = vpack.c.b16 %v233, %v232
  %v270 = vpack.c.b16 %v235, %v234
  %v271 = vpack.c.b16 %v237, %v236
  %v272 = vpack.c.b16 %v239, %v238
  %v273 = vpack.c.b16 %v241, %v240
  %306 = vmatprep.subr.bf16.mxu0 0
  %307 = vmatpush1.bf16.msra.mxu0 %v242
  %308 = vmatprep.subr.bf16.mxu0 0
  %309 = vmatpush1.bf16.msra.mxu0 %v243
  %310 = vmatprep.subr.bf16.mxu0 0
  %311 = vmatpush1.bf16.msra.mxu0 %v244
  %312 = vmatprep.subr.bf16.mxu0 0
  %313 = vmatpush1.bf16.msra.mxu0 %v245
  %314 = vmatprep.subr.bf16.mxu0 0
  %315 = vmatpush1.bf16.msra.mxu0 %v246
  %316 = vmatprep.subr.bf16.mxu0 0
  %317 = vmatpush1.bf16.msra.mxu0 %v247
  %318 = vmatprep.subr.bf16.mxu0 0
  %319 = vmatpush1.bf16.msra.mxu0 %v248
  %320 = vmatprep.subr.bf16.mxu0 0
  %321 = vmatpush1.bf16.msra.mxu0 %v249
  %322 = vmatprep.subr.bf16.mxu0 0
  %323 = vmatpush1.bf16.msra.mxu0 %v250
  %324 = vmatprep.subr.bf16.mxu0 0
  %325 = vmatpush1.bf16.msra.mxu0 %v251
  %326 = vmatprep.subr.bf16.mxu0 0
  %327 = vmatpush1.bf16.msra.mxu0 %v252
  %328 = vmatprep.subr.bf16.mxu0 0
  %329 = vmatpush1.bf16.msra.mxu0 %v253
  %330 = vmatprep.subr.bf16.mxu0 0
  %331 = vmatpush1.bf16.msra.mxu0 %v254
  %332 = vmatprep.subr.bf16.mxu0 0
  %333 = vmatpush1.bf16.msra.mxu0 %v255
  %334 = vmatprep.subr.bf16.mxu0 0
  %335 = vmatpush1.bf16.msra.mxu0 %v256
  %336 = vmatprep.subr.bf16.mxu0 0
  %337 = vmatpush1.bf16.msra.mxu0 %v257
  %338 = vmatprep.mubr.bf16.mxu0 %v107
  %339 = vmatmul.mubr.bf16.gmra.mrb[0].mxu0 %v106
  %v340 = vpop.f32.mrb[0].mxu0
  %v341 = vadd.f32 %v98, %v340
  %v342 = vpop.f32.mrb[0].mxu0
  %v343 = vpop.f32.mrb[0].mxu0
  %v344 = vpop.f32.mrb[0].mxu0
  %345 = vdwg.mxu0
  %346 = vmatprep.subr.bf16.mxu0 0
  %347 = vmatpush1.bf16.msra.mxu0 %v258
  %348 = vmatprep.subr.bf16.mxu0 0
  %349 = vmatpush1.bf16.msra.mxu0 %v259
  %350 = vmatprep.subr.bf16.mxu0 0
  %351 = vmatpush1.bf16.msra.mxu0 %v260
  %352 = vmatprep.subr.bf16.mxu0 0
  %353 = vmatpush1.bf16.msra.mxu0 %v261
  %354 = vmatprep.subr.bf16.mxu0 0
  %355 = vmatpush1.bf16.msra.mxu0 %v262
  %356 = vmatprep.subr.bf16.mxu0 0
  %357 = vmatpush1.bf16.msra.mxu0 %v263
  %358 = vmatprep.subr.bf16.mxu0 0
  %359 = vmatpush1.bf16.msra.mxu0 %v264
  %360 = vmatprep.subr.bf16.mxu0 0
  %361 = vmatpush1.bf16.msra.mxu0 %v265
  %362 = vmatprep.subr.bf16.mxu0 0
  %363 = vmatpush1.bf16.msra.mxu0 %v266
  %364 = vmatprep.subr.bf16.mxu0 0
  %365 = vmatpush1.bf16.msra.mxu0 %v267
  %366 = vmatprep.subr.bf16.mxu0 0
  %367 = vmatpush1.bf16.msra.mxu0 %v268
  %368 = vmatprep.subr.bf16.mxu0 0
  %369 = vmatpush1.bf16.msra.mxu0 %v269
  %370 = vmatprep.subr.bf16.mxu0 0
  %371 = vmatpush1.bf16.msra.mxu0 %v270
  %372 = vmatprep.subr.bf16.mxu0 0
  %373 = vmatpush1.bf16.msra.mxu0 %v271
  %374 = vmatprep.subr.bf16.mxu0 0
  %375 = vmatpush1.bf16.msra.mxu0 %v272
  %376 = vmatprep.subr.bf16.mxu0 0
  %377 = vmatpush1.bf16.msra.mxu0 %v273
  %378 = vmatprep.mubr.bf16.mxu0 %v109
  %379 = vmatmul.mubr.bf16.gmra.mrb[0].mxu0 %v108
  %v380 = vpop.f32.mrb[0].mxu0
  %v381 = vadd.f32 %v341, %v380
  %v382 = vpop.f32.mrb[0].mxu0
  %v383 = vpop.f32.mrb[0].mxu0
  %v384 = vpop.f32.mrb[0].mxu0
  %385 = vdwg.mxu0
  %v386 = vmax.f32 %v381, 0.0
  %v387 = vpack.c.bf16 %v386, %v386
  %v388 = vld [vmem:[%s3] sm:$0xf]
  %v389 = vld [vmem:[%s3 + $0x4] sm:$0xf]
  %v390 = vld [vmem:[%s3 + $0x8] sm:$0xf]
  %v391 = vld [vmem:[%s3 + $0xc] sm:$0xf]
  %v392 = vld [vmem:[%s3 + $0x10] sm:$0xf]
  %v393 = vld [vmem:[%s3 + $0x14] sm:$0xf]
  %v394 = vld [vmem:[%s3 + $0x18] sm:$0xf]
  %v395 = vld [vmem:[%s3 + $0x1c] sm:$0xf]
  %v396 = vld [vmem:[%s3 + $0x20] sm:$0xf]
  %v397 = vld [vmem:[%s3 + $0x24] sm:$0xf]
  %v398 = vld [vmem:[%s3 + $0x28] sm:$0xf]
  %v399 = vld [vmem:[%s3 + $0x2c] sm:$0xf]
  %v400 = vld [vmem:[%s3 + $0x30] sm:$0xf]
  %v401 = vld [vmem:[%s3 + $0x34] sm:$0xf]
  %v402 = vld [vmem:[%s3 + $0x38] sm:$0xf]
  %v403 = vld [vmem:[%s3 + $0x3c] sm:$0xf]
  %v404 = vld [vmem:[%s4] sm:$0x1]
  %v406 = vlaneseq
  %v407 = vshrl.u32 %v406, 7
  %v408 = vsub.s32 0, %v407
  %v409 = vrot.slane %v404, %v408
  %v427 = vunpack.c.l.b16 %v388
  %v428 = vunpack.c.l.b16 %v389
  %v429 = vunpack.c.l.b16 %v390
  %v430 = vunpack.c.l.b16 %v391
  %v431 = vunpack.c.l.b16 %v392
  %v432 = vunpack.c.l.b16 %v393
  %v433 = vunpack.c.l.b16 %v394
  %v434 = vunpack.c.l.b16 %v395
  %v435 = vunpack.c.l.b16 %v396
  %v436 = vunpack.c.l.b16 %v397
  %v437 = vunpack.c.l.b16 %v398
  %v438 = vunpack.c.l.b16 %v399
  %v439 = vunpack.c.l.b16 %v400
  %v440 = vunpack.c.l.b16 %v401
  %v441 = vunpack.c.l.b16 %v402
  %v442 = vunpack.c.l.b16 %v403
  %v443 = vpack.c.b16 %v428, %v427
  %v444 = vpack.c.b16 %v430, %v429
  %v445 = vpack.c.b16 %v432, %v431
  %v446 = vpack.c.b16 %v434, %v433
  %v447 = vpack.c.b16 %v436, %v435
  %v448 = vpack.c.b16 %v438, %v437
  %v449 = vpack.c.b16 %v440, %v439
  %v450 = vpack.c.b16 %v442, %v441
  %459 = vmatprep.subr.bf16.mxu0 0
  %460 = vmatpush1.bf16.msra.mxu0 %v443
  %461 = vmatprep.subr.bf16.mxu0 0
  %462 = vmatpush1.bf16.msra.mxu0 %v444
  %463 = vmatprep.subr.bf16.mxu0 0
  %464 = vmatpush1.bf16.msra.mxu0 %v445
  %465 = vmatprep.subr.bf16.mxu0 0
  %466 = vmatpush1.bf16.msra.mxu0 %v446
  %467 = vmatprep.subr.bf16.mxu0 0
  %468 = vmatpush1.bf16.msra.mxu0 %v447
  %469 = vmatprep.subr.bf16.mxu0 0
  %470 = vmatpush1.bf16.msra.mxu0 %v448
  %471 = vmatprep.subr.bf16.mxu0 0
  %472 = vmatpush1.bf16.msra.mxu0 %v449
  %473 = vmatprep.subr.bf16.mxu0 0
  %474 = vmatpush1.bf16.msra.mxu0 %v450
  %475 = vmatprep.subr.bf16.mxu0 0
  %476 = vmatpush1.bf16.msra.mxu0 0
  %477 = vmatprep.subr.bf16.mxu0 0
  %478 = vmatpush1.bf16.msra.mxu0 0
  %479 = vmatprep.subr.bf16.mxu0 0
  %480 = vmatpush1.bf16.msra.mxu0 0
  %481 = vmatprep.subr.bf16.mxu0 0
  %482 = vmatpush1.bf16.msra.mxu0 0
  %483 = vmatprep.subr.bf16.mxu0 0
  %484 = vmatpush1.bf16.msra.mxu0 0
  %485 = vmatprep.subr.bf16.mxu0 0
  %486 = vmatpush1.bf16.msra.mxu0 0
  %487 = vmatprep.subr.bf16.mxu0 0
  %488 = vmatpush1.bf16.msra.mxu0 0
  %489 = vmatprep.subr.bf16.mxu0 0
  %490 = vmatpush1.bf16.msra.mxu0 0
  %491 = vmatprep.mubr.bf16.mxu0 0
  %492 = vmatmul.mubr.bf16.gmra.mrb[0].mxu0 %v387
  %v493 = vpop.f32.mrb[0].mxu0
  %v494 = vadd.f32 %v409, %v493
  %v495 = vpop.f32.mrb[0].mxu0
  %v496 = vpop.f32.mrb[0].mxu0
  %v497 = vpop.f32.mrb[0].mxu0
  %498 = vdwg.mxu0
  %v499 = vmax.f32 %v494, 0.0
  %v500 = vpack.c.bf16 %v499, %v499
  %v501 = vld [vmem:[%s5] sm:$0xf]
  %v502 = vld [vmem:[%s5 + $0x4] sm:$0xf]
  %v503 = vld [vmem:[%s5 + $0x8] sm:$0xf]
  %v504 = vld [vmem:[%s5 + $0xc] sm:$0xf]
  %v505 = vld [vmem:[%s5 + $0x10] sm:$0xf]
  %v506 = vld [vmem:[%s5 + $0x14] sm:$0xf]
  %v507 = vld [vmem:[%s5 + $0x18] sm:$0xf]
  %v508 = vld [vmem:[%s5 + $0x1c] sm:$0xf]
  %v509 = vld [vmem:[%s5 + $0x20] sm:$0xf]
  %v510 = vld [vmem:[%s5 + $0x24] sm:$0xf]
  %v511 = vld [vmem:[%s5 + $0x28] sm:$0xf]
  %v512 = vld [vmem:[%s5 + $0x2c] sm:$0xf]
  %v513 = vld [vmem:[%s5 + $0x30] sm:$0xf]
  %v514 = vld [vmem:[%s5 + $0x34] sm:$0xf]
  %v515 = vld [vmem:[%s5 + $0x38] sm:$0xf]
  %v516 = vld [vmem:[%s5 + $0x3c] sm:$0xf]
  %v517 = vld [vmem:[%s6] sm:$0x1]
  %v519 = vlaneseq
  %v520 = vshrl.u32 %v519, 7
  %v521 = vsub.s32 0, %v520
  %v522 = vrot.slane %v517, %v521
  %v540 = vunpack.c.l.b16 %v501
  %v541 = vunpack.c.l.b16 %v502
  %v542 = vunpack.c.l.b16 %v503
  %v543 = vunpack.c.l.b16 %v504
  %v544 = vunpack.c.l.b16 %v505
  %v545 = vunpack.c.l.b16 %v506
  %v546 = vunpack.c.l.b16 %v507
  %v547 = vunpack.c.l.b16 %v508
  %v548 = vunpack.c.l.b16 %v509
  %v549 = vunpack.c.l.b16 %v510
  %v550 = vunpack.c.l.b16 %v511
  %v551 = vunpack.c.l.b16 %v512
  %v552 = vunpack.c.l.b16 %v513
  %v553 = vunpack.c.l.b16 %v514
  %v554 = vunpack.c.l.b16 %v515
  %v555 = vunpack.c.l.b16 %v516
  %v556 = vpack.c.b16 %v541, %v540
  %v557 = vpack.c.b16 %v543, %v542
  %v558 = vpack.c.b16 %v545, %v544
  %v559 = vpack.c.b16 %v547, %v546
  %v560 = vpack.c.b16 %v549, %v548
  %v561 = vpack.c.b16 %v551, %v550
  %v562 = vpack.c.b16 %v553, %v552
  %v563 = vpack.c.b16 %v555, %v554
  %572 = vmatprep.subr.bf16.mxu0 0
  %573 = vmatpush1.bf16.msra.mxu0 %v556
  %574 = vmatprep.subr.bf16.mxu0 0
  %575 = vmatpush1.bf16.msra.mxu0 %v557
  %576 = vmatprep.subr.bf16.mxu0 0
  %577 = vmatpush1.bf16.msra.mxu0 %v558
  %578 = vmatprep.subr.bf16.mxu0 0
  %579 = vmatpush1.bf16.msra.mxu0 %v559
  %580 = vmatprep.subr.bf16.mxu0 0
  %581 = vmatpush1.bf16.msra.mxu0 %v560
  %582 = vmatprep.subr.bf16.mxu0 0
  %583 = vmatpush1.bf16.msra.mxu0 %v561
  %584 = vmatprep.subr.bf16.mxu0 0
  %585 = vmatpush1.bf16.msra.mxu0 %v562
  %586 = vmatprep.subr.bf16.mxu0 0
  %587 = vmatpush1.bf16.msra.mxu0 %v563
  %588 = vmatprep.subr.bf16.mxu0 0
  %589 = vmatpush1.bf16.msra.mxu0 0
  %590 = vmatprep.subr.bf16.mxu0 0
  %591 = vmatpush1.bf16.msra.mxu0 0
  %592 = vmatprep.subr.bf16.mxu0 0
  %593 = vmatpush1.bf16.msra.mxu0 0
  %594 = vmatprep.subr.bf16.mxu0 0
  %595 = vmatpush1.bf16.msra.mxu0 0
  %596 = vmatprep.subr.bf16.mxu0 0
  %597 = vmatpush1.bf16.msra.mxu0 0
  %598 = vmatprep.subr.bf16.mxu0 0
  %599 = vmatpush1.bf16.msra.mxu0 0
  %600 = vmatprep.subr.bf16.mxu0 0
  %601 = vmatpush1.bf16.msra.mxu0 0
  %602 = vmatprep.subr.bf16.mxu0 0
  %603 = vmatpush1.bf16.msra.mxu0 0
  %604 = vmatprep.mubr.bf16.mxu0 0
  %605 = vmatmul.mubr.bf16.gmra.mrb[0].mxu0 %v500
  %v606 = vpop.f32.mrb[0].mxu0
  %v607 = vadd.f32 %v522, %v606
  %v608 = vpop.f32.mrb[0].mxu0
  %v609 = vpop.f32.mrb[0].mxu0
  %v610 = vpop.f32.mrb[0].mxu0
  %611 = vdwg.mxu0
  %612 = vst [vmem:[%s7] sm:$0xff] %v607
  // Predicated region
  $region30: #{vanilla_net_forward.5} parent=0 // pred_check
    _
  $region31: #{vanilla_net_forward.5} parent=0 // pred_check_branch
    %614 = sbr.rel (0) target = $region33
  $region32: #{vanilla_net_forward.5} parent=0 // pred_region
    _
  $region33: #{vanilla_net_forward.5} parent=0 // pred_fallthru
    _
  // Predicated region
  $region34: #{vanilla_net_forward.5} parent=0 // pred_check
    _
  $region35: #{vanilla_net_forward.5} parent=0 // pred_check_branch
    %616 = sbr.rel (0) target = $region37
  $region36: #{vanilla_net_forward.5} parent=0 // pred_region
    _
  $region37: #{vanilla_net_forward.5} parent=0 // pred_fallthru
    _

</llo_original>
